<compile_context>
chip_gen: v6e
topology: v6e:2x2x1
jax: 0.10.0
libtpu: 0.0.40
codegen_flags: <defaults>
</compile_context>

<pallas_src>
import math
from functools import partial

import jax
import jax.numpy as jnp
from jax.experimental import pallas as pl
from jax.experimental.pallas import tpu as pltpu


# ---------------------------------------------------------------------------
# Kernel
# ---------------------------------------------------------------------------
def _layernorm(x, gamma, beta, eps=1e-5):
    mu = jnp.mean(x, axis=-1, keepdims=True)
    var = jnp.mean((x - mu) ** 2, axis=-1, keepdims=True)
    return (x - mu) * jax.lax.rsqrt(var + eps) * gamma + beta


def transformer_kernel(x_ref, pe_ref,
                       wqkv_ref, bqkv_ref, wo_ref, bo_ref,
                       w1_ref, b1_ref, w2_ref, b2_ref,
                       g1_ref, be1_ref, g2_ref, be2_ref,
                       o_ref, *, num_layers, num_heads):
    H = num_heads
    x = x_ref[0] + pe_ref[...]                            # (S, D); PE add fused here
    S, D = x.shape

    for l in range(num_layers):                           # static unroll (fused layers)
        # ---- QKV projection: one batched matmul over 3*H heads on a leading axis ----
        w = wqkv_ref[l]                                   # (3H, D, hd); Q part pre-scaled
        b = bqkv_ref[l]                                   # (3H, 1, hd)
        xh = jnp.broadcast_to(x, (3 * H, S, D))           # (3H, S, D)
        qkv = jnp.einsum('nsd,ndf->nsf', xh, w,
                         preferred_element_type=jnp.float32) + b   # (3H, S, hd)
        q = qkv[0:H]                                      # leading-axis slices: no lane relayout
        k = qkv[H:2 * H]
        v = qkv[2 * H:3 * H]

        # ---- attention, batched over heads ----
        s = jnp.einsum('hqd,hkd->hqk', q, k,
                       preferred_element_type=jnp.float32)          # (H, S, S)
        s = s - jnp.max(s, axis=-1, keepdims=True)
        p = jnp.exp(s)
        denom = jnp.sum(p, axis=-1, keepdims=True)
        p = p * pl.reciprocal(denom, approx=True)                    # EUP slot (~free)
        ctx = jnp.einsum('hqk,hkd->hqd', p, v,
                         preferred_element_type=jnp.float32)         # (H, S, hd)

        # ---- output projection: per-head partials + leading-axis reduce (no concat) ----
        attn = jnp.sum(
            jnp.einsum('hsf,hfd->hsd', ctx, wo_ref[l],
                       preferred_element_type=jnp.float32), axis=0) + bo_ref[l]   # (S, D)
        x1 = _layernorm(x + attn, g1_ref[l], be1_ref[l])

        # ---- feed forward ----
        h1 = jnp.maximum(
            jnp.dot(x1, w1_ref[l], preferred_element_type=jnp.float32) + b1_ref[l], 0.0)
        ff = jnp.dot(h1, w2_ref[l], preferred_element_type=jnp.float32) + b2_ref[l]
        x = _layernorm(x1 + ff, g2_ref[l], be2_ref[l])

    o_ref[0] = x.astype(o_ref.dtype)


# ---------------------------------------------------------------------------
# Host-side parameter repacking (plain JAX glue, done once)
# ---------------------------------------------------------------------------
def prepare_stacked_params(layers, num_heads):
    """Repack PyTorch-style packed weights into per-head, layer-stacked arrays."""
    D = layers[0]["wqkv"].shape[0]
    H = num_heads
    hd = D // H
    scale = 1.0 / math.sqrt(hd)
    keys = ["wqkv", "bqkv", "wo", "bo", "w1", "b1", "w2", "b2", "g1", "be1", "g2", "be2"]
    acc = {k: [] for k in keys}
    for p in layers:
        w3 = p["wqkv"].reshape(D, 3, H, hd).transpose(1, 2, 0, 3)    # (3, H, D, hd)
        b3 = p["bqkv"].reshape(3, H, 1, hd)
        w3 = w3.at[0].multiply(scale)   # fold 1/sqrt(hd) into Q weights
        b3 = b3.at[0].multiply(scale)
        acc["wqkv"].append(w3.reshape(3 * H, D, hd))
        acc["bqkv"].append(b3.reshape(3 * H, 1, hd))
        acc["wo"].append(p["wo"].reshape(H, hd, D))
        acc["bo"].append(p["bo"].reshape(1, D))
        acc["w1"].append(p["w1"])
        acc["b1"].append(p["b1"].reshape(1, -1))
        acc["w2"].append(p["w2"])
        acc["b2"].append(p["b2"].reshape(1, -1))
        acc["g1"].append(p["g1"].reshape(1, -1))
        acc["be1"].append(p["be1"].reshape(1, -1))
        acc["g2"].append(p["g2"].reshape(1, -1))
        acc["be2"].append(p["be2"].reshape(1, -1))
    return {k: jnp.stack(v, axis=0) for k, v in acc.items()}


# ---------------------------------------------------------------------------
# Wrapper: single fused pallas_call (PE + all layers)
# ---------------------------------------------------------------------------
def transformer_forward(x, pe, packed_layers, num_heads):
    B, S, D = x.shape
    num_layers = len(packed_layers)
    stk = prepare_stacked_params(packed_layers, num_heads)

    args = [x, pe,
            stk["wqkv"], stk["bqkv"], stk["wo"], stk["bo"],
            stk["w1"], stk["b1"], stk["w2"], stk["b2"],
            stk["g1"], stk["be1"], stk["g2"], stk["be2"]]

    in_specs = [pl.BlockSpec((1, S, D), lambda b: (b, 0, 0)),
                pl.BlockSpec((S, D), lambda b: (0, 0))]
    for a in args[2:]:
        in_specs.append(pl.BlockSpec(a.shape, lambda b, nd=a.ndim: (0,) * nd))

    return pl.pallas_call(
        partial(transformer_kernel, num_layers=num_layers, num_heads=num_heads),
        out_shape=jax.ShapeDtypeStruct((B, S, D), x.dtype),
        grid=(B,),
        in_specs=in_specs,
        out_specs=pl.BlockSpec((1, S, D), lambda b: (b, 0, 0)),
        compiler_params=pltpu.CompilerParams(dimension_semantics=("parallel",)),
    )(*args)


# ---------------------------------------------------------------------------
# Parameter / PE construction (deterministic)
# ---------------------------------------------------------------------------
def sinusoidal_pe(S, D):
    pos = jnp.arange(S, dtype=jnp.float32)[:, None]
    div = jnp.exp(jnp.arange(0, D, 2, dtype=jnp.float32) * (-math.log(10000.0) / D))
    pe = jnp.zeros((S, D), jnp.float32)
    pe = pe.at[:, 0::2].set(jnp.sin(pos * div))
    pe = pe.at[:, 1::2].set(jnp.cos(pos * div))
    return pe


def init_layer_params(key, d_model, d_ff):
    ks = jax.random.split(key, 8)
    s = 0.02
    return {
        # Linear weights stored transposed: y = x @ W + b
        "wqkv": s * jax.random.normal(ks[0], (d_model, 3 * d_model), jnp.float32),
        "bqkv": s * jax.random.normal(ks[1], (3 * d_model,), jnp.float32),
        "wo":   s * jax.random.normal(ks[2], (d_model, d_model), jnp.float32),
        "bo":   s * jax.random.normal(ks[3], (d_model,), jnp.float32),
        "w1":   s * jax.random.normal(ks[4], (d_model, d_ff), jnp.float32),
        "b1":   s * jax.random.normal(ks[5], (d_ff,), jnp.float32),
        "w2":   s * jax.random.normal(ks[6], (d_ff, d_model), jnp.float32),
        "b2":   s * jax.random.normal(ks[7], (d_model,), jnp.float32),
        "g1":   jnp.ones((d_model,), jnp.float32),
        "be1":  jnp.zeros((d_model,), jnp.float32),
        "g2":   jnp.ones((d_model,), jnp.float32),
        "be2":  jnp.zeros((d_model,), jnp.float32),
    }


# ---------------------------------------------------------------------------
# Pure-JAX reference (mirrors the PyTorch forward exactly, eval mode)
# ---------------------------------------------------------------------------
def ref_forward(x, pe, layers, num_heads):
    x = x + pe[None]
    for p in layers:
        B, S, D = x.shape
        hd = D // num_heads
        qkv = x @ p["wqkv"] + p["bqkv"]
        qkv = qkv.reshape(B, S, 3, num_heads, hd).transpose(2, 0, 3, 1, 4)
        q, k, v = qkv[0], qkv[1], qkv[2]
        s = (q @ jnp.swapaxes(k, -1, -2)) / math.sqrt(hd)
        a = jax.nn.softmax(s, axis=-1)
        ctx = jnp.swapaxes(a @ v, 1, 2).reshape(B, S, D)
        attn = ctx @ p["wo"] + p["bo"]
        x1 = _layernorm(x + attn, p["g1"], p["be1"])
        ff = jnp.maximum(x1 @ p["w1"] + p["b1"], 0.0) @ p["w2"] + p["b2"]
        x = _layernorm(x1 + ff, p["g2"], p["be2"])
    return x


# ---------------------------------------------------------------------------
if __name__ == "__main__":
    # small shapes consistent with the module: d_model=32, heads=4, d_ff=64, 2 layers
    B, S, D, H, DFF, NLAYERS = 2, 8, 32, 4, 64, 2

    key = jax.random.PRNGKey(0)
    kx, *kl = jax.random.split(key, NLAYERS + 1)
    x = jax.random.normal(kx, (B, S, D), jnp.float32)
    pe = sinusoidal_pe(S, D)
    layer_params = [init_layer_params(k, D, DFF) for k in kl]

    out = transformer_forward(x, pe, layer_params, H)
    out = jax.block_until_ready(out)

    ref = ref_forward(x, pe, layer_params, H)
    assert out.shape == (B, S, D)
    assert jnp.allclose(out, ref, atol=1e-2, rtol=1e-2), "mismatch vs pure-JAX reference"

    print("KERNEL_OK")
</pallas_src>

<mosaic_0001>
module attributes {stable_mosaic.version = 11 : i64} {
  func.func @transformer_kernel(%arg0: i32, %arg1: memref<1x8x32xf32, #tpu.memory_space<vmem>>, %arg2: memref<8x32xf32, #tpu.memory_space<vmem>>, %arg3: memref<2x12x32x8xf32, #tpu.memory_space<vmem>>, %arg4: memref<2x12x1x8xf32, #tpu.memory_space<vmem>>, %arg5: memref<2x4x8x32xf32, #tpu.memory_space<vmem>>, %arg6: memref<2x1x32xf32, #tpu.memory_space<vmem>>, %arg7: memref<2x32x64xf32, #tpu.memory_space<vmem>>, %arg8: memref<2x1x64xf32, #tpu.memory_space<vmem>>, %arg9: memref<2x64x32xf32, #tpu.memory_space<vmem>>, %arg10: memref<2x1x32xf32, #tpu.memory_space<vmem>>, %arg11: memref<2x1x32xf32, #tpu.memory_space<vmem>>, %arg12: memref<2x1x32xf32, #tpu.memory_space<vmem>>, %arg13: memref<2x1x32xf32, #tpu.memory_space<vmem>>, %arg14: memref<2x1x32xf32, #tpu.memory_space<vmem>>, %arg15: memref<1x8x32xf32, #tpu.memory_space<vmem>>) attributes {dimension_semantics = [#tpu.dimension_semantics<parallel>], iteration_bounds = array<i64: 2>, scalar_prefetch = 0 : i64, scratch_operands = 0 : i64, tpu.core_type = #tpu.core_type<tc>, window_params = [{transform_indices = @transform_0, window_bounds = array<i64: 1, 8, 32>}, {pipeline_mode = #tpu.pipeline_mode<synchronous>, transform_indices = @transform_1, window_bounds = array<i64: 8, 32>}, {pipeline_mode = #tpu.pipeline_mode<synchronous>, transform_indices = @transform_2, window_bounds = array<i64: 2, 12, 32, 8>}, {pipeline_mode = #tpu.pipeline_mode<synchronous>, transform_indices = @transform_3, window_bounds = array<i64: 2, 12, 1, 8>}, {pipeline_mode = #tpu.pipeline_mode<synchronous>, transform_indices = @transform_4, window_bounds = array<i64: 2, 4, 8, 32>}, {pipeline_mode = #tpu.pipeline_mode<synchronous>, transform_indices = @transform_5, window_bounds = array<i64: 2, 1, 32>}, {pipeline_mode = #tpu.pipeline_mode<synchronous>, transform_indices = @transform_6, window_bounds = array<i64: 2, 32, 64>}, {pipeline_mode = #tpu.pipeline_mode<synchronous>, transform_indices = @transform_7, window_bounds = array<i64: 2, 1, 64>}, {pipeline_mode = #tpu.pipeline_mode<synchronous>, transform_indices = @transform_8, window_bounds = array<i64: 2, 64, 32>}, {pipeline_mode = #tpu.pipeline_mode<synchronous>, transform_indices = @transform_9, window_bounds = array<i64: 2, 1, 32>}, {pipeline_mode = #tpu.pipeline_mode<synchronous>, transform_indices = @transform_10, window_bounds = array<i64: 2, 1, 32>}, {pipeline_mode = #tpu.pipeline_mode<synchronous>, transform_indices = @transform_11, window_bounds = array<i64: 2, 1, 32>}, {pipeline_mode = #tpu.pipeline_mode<synchronous>, transform_indices = @transform_12, window_bounds = array<i64: 2, 1, 32>}, {pipeline_mode = #tpu.pipeline_mode<synchronous>, transform_indices = @transform_13, window_bounds = array<i64: 2, 1, 32>}, {transform_indices = @transform_14, window_bounds = array<i64: 1, 8, 32>}]} {
    %c0 = arith.constant 0 : index
    %c0_0 = arith.constant 0 : index
    %c0_1 = arith.constant 0 : index
    %0 = vector.load %arg1[%c0, %c0_0, %c0_1] : memref<1x8x32xf32, #tpu.memory_space<vmem>>, vector<1x8x32xf32>
    %1 = vector.shape_cast %0 : vector<1x8x32xf32> to vector<8x32xf32>
    %c0_2 = arith.constant 0 : index
    %c0_3 = arith.constant 0 : index
    %2 = vector.load %arg2[%c0_2, %c0_3] : memref<8x32xf32, #tpu.memory_space<vmem>>, vector<8x32xf32>
    %3 = arith.addf %1, %2 : vector<8x32xf32>
    %c0_4 = arith.constant 0 : index
    %c0_5 = arith.constant 0 : index
    %c0_6 = arith.constant 0 : index
    %c0_7 = arith.constant 0 : index
    %4 = vector.load %arg3[%c0_4, %c0_5, %c0_6, %c0_7] : memref<2x12x32x8xf32, #tpu.memory_space<vmem>>, vector<1x12x32x8xf32>
    %5 = vector.shape_cast %4 : vector<1x12x32x8xf32> to vector<12x32x8xf32>
    %c0_8 = arith.constant 0 : index
    %c0_9 = arith.constant 0 : index
    %c0_10 = arith.constant 0 : index
    %c0_11 = arith.constant 0 : index
    %6 = vector.load %arg4[%c0_8, %c0_9, %c0_10, %c0_11] : memref<2x12x1x8xf32, #tpu.memory_space<vmem>>, vector<1x12x1x8xf32>
    %7 = vector.shape_cast %6 : vector<1x12x1x8xf32> to vector<12x1x8xf32>
    %8 = vector.shape_cast %3 : vector<8x32xf32> to vector<1x8x32xf32>
    %9 = vector.broadcast %8 : vector<1x8x32xf32> to vector<12x8x32xf32>
    "tpu.trace_start"() <{level = 10 : i32, message = "nsd,ndf->nsf"}> : () -> ()
    %cst = arith.constant dense<0.000000e+00> : vector<12x8x8xf32>
    %10 = tpu.matmul %9, %5, %cst {dimension_numbers = #tpu.dot_dimension_numbers<[2], [1], [1], [2], [0, 0, 0, 1, 1, 2], [0], [0]>} : vector<12x8x32xf32>, vector<12x32x8xf32>, vector<12x8x8xf32> -> vector<12x8x8xf32>
    "tpu.trace_stop"() : () -> ()
    %11 = vector.broadcast %7 : vector<12x1x8xf32> to vector<12x8x8xf32>
    %12 = arith.addf %10, %11 : vector<12x8x8xf32>
    %13 = vector.extract_strided_slice %12 {offsets = [0, 0, 0], sizes = [4, 8, 8], strides = [1, 1, 1]} : vector<12x8x8xf32> to vector<4x8x8xf32>
    %14 = vector.extract_strided_slice %12 {offsets = [4, 0, 0], sizes = [4, 8, 8], strides = [1, 1, 1]} : vector<12x8x8xf32> to vector<4x8x8xf32>
    %15 = vector.extract_strided_slice %12 {offsets = [8, 0, 0], sizes = [4, 8, 8], strides = [1, 1, 1]} : vector<12x8x8xf32> to vector<4x8x8xf32>
    "tpu.trace_start"() <{level = 10 : i32, message = "hqd,hkd->hqk"}> : () -> ()
    %cst_12 = arith.constant dense<0.000000e+00> : vector<4x8x8xf32>
    %16 = tpu.matmul %13, %14, %cst_12 {dimension_numbers = #tpu.dot_dimension_numbers<[2], [2], [1], [1], [0, 0, 0, 1, 1, 1], [0], [0]>} : vector<4x8x8xf32>, vector<4x8x8xf32>, vector<4x8x8xf32> -> vector<4x8x8xf32>
    "tpu.trace_stop"() : () -> ()
    %cst_13 = arith.constant dense<0xFF800000> : vector<4x8xf32>
    %17 = vector.multi_reduction <maximumf>, %16, %cst_13 [2] : vector<4x8x8xf32> to vector<4x8xf32>
    %18 = vector.shape_cast %17 : vector<4x8xf32> to vector<4x8x1xf32>
    %19 = vector.broadcast %18 : vector<4x8x1xf32> to vector<4x8x8xf32>
    %20 = arith.subf %16, %19 : vector<4x8x8xf32>
    %21 = math.exp %20 : vector<4x8x8xf32>
    %cst_14 = arith.constant dense<0.000000e+00> : vector<4x8xf32>
    %22 = vector.multi_reduction <add>, %21, %cst_14 [2] : vector<4x8x8xf32> to vector<4x8xf32>
    %23 = vector.shape_cast %22 : vector<4x8xf32> to vector<4x8x1xf32>
    %24 = tpu.reciprocal %23 {approx = true} : vector<4x8x1xf32> -> vector<4x8x1xf32>
    %25 = vector.broadcast %24 : vector<4x8x1xf32> to vector<4x8x8xf32>
    %26 = arith.mulf %21, %25 : vector<4x8x8xf32>
    "tpu.trace_start"() <{level = 10 : i32, message = "hqk,hkd->hqd"}> : () -> ()
    %cst_15 = arith.constant dense<0.000000e+00> : vector<4x8x8xf32>
    %27 = tpu.matmul %26, %15, %cst_15 {dimension_numbers = #tpu.dot_dimension_numbers<[2], [1], [1], [2], [0, 0, 0, 1, 1, 2], [0], [0]>} : vector<4x8x8xf32>, vector<4x8x8xf32>, vector<4x8x8xf32> -> vector<4x8x8xf32>
    "tpu.trace_stop"() : () -> ()
    %c0_16 = arith.constant 0 : index
    %c0_17 = arith.constant 0 : index
    %c0_18 = arith.constant 0 : index
    %c0_19 = arith.constant 0 : index
    %28 = vector.load %arg5[%c0_16, %c0_17, %c0_18, %c0_19] : memref<2x4x8x32xf32, #tpu.memory_space<vmem>>, vector<1x4x8x32xf32>
    %29 = vector.shape_cast %28 : vector<1x4x8x32xf32> to vector<4x8x32xf32>
    "tpu.trace_start"() <{level = 10 : i32, message = "hsf,hfd->hsd"}> : () -> ()
    %cst_20 = arith.constant dense<0.000000e+00> : vector<4x8x32xf32>
    %30 = tpu.matmul %27, %29, %cst_20 {dimension_numbers = #tpu.dot_dimension_numbers<[2], [1], [1], [2], [0, 0, 0, 1, 1, 2], [0], [0]>} : vector<4x8x8xf32>, vector<4x8x32xf32>, vector<4x8x32xf32> -> vector<4x8x32xf32>
    "tpu.trace_stop"() : () -> ()
    %cst_21 = arith.constant dense<0.000000e+00> : vector<8x32xf32>
    %31 = vector.multi_reduction <add>, %30, %cst_21 [0] : vector<4x8x32xf32> to vector<8x32xf32>
    %c0_22 = arith.constant 0 : index
    %c0_23 = arith.constant 0 : index
    %c0_24 = arith.constant 0 : index
    %32 = vector.load %arg6[%c0_22, %c0_23, %c0_24] : memref<2x1x32xf32, #tpu.memory_space<vmem>>, vector<1x1x32xf32>
    %33 = vector.shape_cast %32 : vector<1x1x32xf32> to vector<1x32xf32>
    %34 = vector.broadcast %33 : vector<1x32xf32> to vector<8x32xf32>
    %35 = arith.addf %31, %34 : vector<8x32xf32>
    %36 = arith.addf %3, %35 : vector<8x32xf32>
    %c0_25 = arith.constant 0 : index
    %c0_26 = arith.constant 0 : index
    %c0_27 = arith.constant 0 : index
    %37 = vector.load %arg11[%c0_25, %c0_26, %c0_27] : memref<2x1x32xf32, #tpu.memory_space<vmem>>, vector<1x1x32xf32>
    %38 = vector.shape_cast %37 : vector<1x1x32xf32> to vector<1x32xf32>
    %c0_28 = arith.constant 0 : index
    %c0_29 = arith.constant 0 : index
    %c0_30 = arith.constant 0 : index
    %39 = vector.load %arg12[%c0_28, %c0_29, %c0_30] : memref<2x1x32xf32, #tpu.memory_space<vmem>>, vector<1x1x32xf32>
    %40 = vector.shape_cast %39 : vector<1x1x32xf32> to vector<1x32xf32>
    %cst_31 = arith.constant dense<0.000000e+00> : vector<8xf32>
    %41 = vector.multi_reduction <add>, %36, %cst_31 [1] : vector<8x32xf32> to vector<8xf32>
    %42 = vector.shape_cast %41 : vector<8xf32> to vector<8x1xf32>
    %cst_32 = arith.constant 3.200000e+01 : f32
    %43 = vector.broadcast %cst_32 : f32 to vector<8x1xf32>
    %44 = arith.divf %42, %43 : vector<8x1xf32>
    %45 = vector.broadcast %44 : vector<8x1xf32> to vector<8x32xf32>
    %46 = arith.subf %36, %45 : vector<8x32xf32>
    %47 = arith.mulf %46, %46 : vector<8x32xf32>
    %cst_33 = arith.constant dense<0.000000e+00> : vector<8xf32>
    %48 = vector.multi_reduction <add>, %47, %cst_33 [1] : vector<8x32xf32> to vector<8xf32>
    %49 = vector.shape_cast %48 : vector<8xf32> to vector<8x1xf32>
    %cst_34 = arith.constant 3.200000e+01 : f32
    %50 = vector.broadcast %cst_34 : f32 to vector<8x1xf32>
    %51 = arith.divf %49, %50 : vector<8x1xf32>
    %52 = vector.broadcast %44 : vector<8x1xf32> to vector<8x32xf32>
    %53 = arith.subf %36, %52 : vector<8x32xf32>
    %cst_35 = arith.constant 9.99999974E-6 : f32
    %54 = vector.broadcast %cst_35 : f32 to vector<8x1xf32>
    %55 = arith.addf %51, %54 : vector<8x1xf32>
    %56 = math.rsqrt %55 : vector<8x1xf32>
    %57 = vector.broadcast %56 : vector<8x1xf32> to vector<8x32xf32>
    %58 = arith.mulf %53, %57 : vector<8x32xf32>
    %59 = vector.broadcast %38 : vector<1x32xf32> to vector<8x32xf32>
    %60 = arith.mulf %58, %59 : vector<8x32xf32>
    %61 = vector.broadcast %40 : vector<1x32xf32> to vector<8x32xf32>
    %62 = arith.addf %60, %61 : vector<8x32xf32>
    %c0_36 = arith.constant 0 : index
    %c0_37 = arith.constant 0 : index
    %c0_38 = arith.constant 0 : index
    %63 = vector.load %arg7[%c0_36, %c0_37, %c0_38] : memref<2x32x64xf32, #tpu.memory_space<vmem>>, vector<1x32x64xf32>
    %64 = vector.shape_cast %63 : vector<1x32x64xf32> to vector<32x64xf32>
    %cst_39 = arith.constant dense<0.000000e+00> : vector<8x64xf32>
    %65 = tpu.matmul %62, %64, %cst_39 {dimension_numbers = #tpu.dot_dimension_numbers<[1], [0], [0], [1], [0, 0, 1, 1], [], []>} : vector<8x32xf32>, vector<32x64xf32>, vector<8x64xf32> -> vector<8x64xf32>
    %c0_40 = arith.constant 0 : index
    %c0_41 = arith.constant 0 : index
    %c0_42 = arith.constant 0 : index
    %66 = vector.load %arg8[%c0_40, %c0_41, %c0_42] : memref<2x1x64xf32, #tpu.memory_space<vmem>>, vector<1x1x64xf32>
    %67 = vector.shape_cast %66 : vector<1x1x64xf32> to vector<1x64xf32>
    %68 = vector.broadcast %67 : vector<1x64xf32> to vector<8x64xf32>
    %69 = arith.addf %65, %68 : vector<8x64xf32>
    %cst_43 = arith.constant 0.000000e+00 : f32
    %70 = vector.broadcast %cst_43 : f32 to vector<8x64xf32>
    %71 = arith.maximumf %69, %70 : vector<8x64xf32>
    %c0_44 = arith.constant 0 : index
    %c0_45 = arith.constant 0 : index
    %c0_46 = arith.constant 0 : index
    %72 = vector.load %arg9[%c0_44, %c0_45, %c0_46] : memref<2x64x32xf32, #tpu.memory_space<vmem>>, vector<1x64x32xf32>
    %73 = vector.shape_cast %72 : vector<1x64x32xf32> to vector<64x32xf32>
    %cst_47 = arith.constant dense<0.000000e+00> : vector<8x32xf32>
    %74 = tpu.matmul %71, %73, %cst_47 {dimension_numbers = #tpu.dot_dimension_numbers<[1], [0], [0], [1], [0, 0, 1, 1], [], []>} : vector<8x64xf32>, vector<64x32xf32>, vector<8x32xf32> -> vector<8x32xf32>
    %c0_48 = arith.constant 0 : index
    %c0_49 = arith.constant 0 : index
    %c0_50 = arith.constant 0 : index
    %75 = vector.load %arg10[%c0_48, %c0_49, %c0_50] : memref<2x1x32xf32, #tpu.memory_space<vmem>>, vector<1x1x32xf32>
    %76 = vector.shape_cast %75 : vector<1x1x32xf32> to vector<1x32xf32>
    %77 = vector.broadcast %76 : vector<1x32xf32> to vector<8x32xf32>
    %78 = arith.addf %74, %77 : vector<8x32xf32>
    %79 = arith.addf %62, %78 : vector<8x32xf32>
    %c0_51 = arith.constant 0 : index
    %c0_52 = arith.constant 0 : index
    %c0_53 = arith.constant 0 : index
    %80 = vector.load %arg13[%c0_51, %c0_52, %c0_53] : memref<2x1x32xf32, #tpu.memory_space<vmem>>, vector<1x1x32xf32>
    %81 = vector.shape_cast %80 : vector<1x1x32xf32> to vector<1x32xf32>
    %c0_54 = arith.constant 0 : index
    %c0_55 = arith.constant 0 : index
    %c0_56 = arith.constant 0 : index
    %82 = vector.load %arg14[%c0_54, %c0_55, %c0_56] : memref<2x1x32xf32, #tpu.memory_space<vmem>>, vector<1x1x32xf32>
    %83 = vector.shape_cast %82 : vector<1x1x32xf32> to vector<1x32xf32>
    %cst_57 = arith.constant dense<0.000000e+00> : vector<8xf32>
    %84 = vector.multi_reduction <add>, %79, %cst_57 [1] : vector<8x32xf32> to vector<8xf32>
    %85 = vector.shape_cast %84 : vector<8xf32> to vector<8x1xf32>
    %cst_58 = arith.constant 3.200000e+01 : f32
    %86 = vector.broadcast %cst_58 : f32 to vector<8x1xf32>
    %87 = arith.divf %85, %86 : vector<8x1xf32>
    %88 = vector.broadcast %87 : vector<8x1xf32> to vector<8x32xf32>
    %89 = arith.subf %79, %88 : vector<8x32xf32>
    %90 = arith.mulf %89, %89 : vector<8x32xf32>
    %cst_59 = arith.constant dense<0.000000e+00> : vector<8xf32>
    %91 = vector.multi_reduction <add>, %90, %cst_59 [1] : vector<8x32xf32> to vector<8xf32>
    %92 = vector.shape_cast %91 : vector<8xf32> to vector<8x1xf32>
    %cst_60 = arith.constant 3.200000e+01 : f32
    %93 = vector.broadcast %cst_60 : f32 to vector<8x1xf32>
    %94 = arith.divf %92, %93 : vector<8x1xf32>
    %95 = vector.broadcast %87 : vector<8x1xf32> to vector<8x32xf32>
    %96 = arith.subf %79, %95 : vector<8x32xf32>
    %cst_61 = arith.constant 9.99999974E-6 : f32
    %97 = vector.broadcast %cst_61 : f32 to vector<8x1xf32>
    %98 = arith.addf %94, %97 : vector<8x1xf32>
    %99 = math.rsqrt %98 : vector<8x1xf32>
    %100 = vector.broadcast %99 : vector<8x1xf32> to vector<8x32xf32>
    %101 = arith.mulf %96, %100 : vector<8x32xf32>
    %102 = vector.broadcast %81 : vector<1x32xf32> to vector<8x32xf32>
    %103 = arith.mulf %101, %102 : vector<8x32xf32>
    %104 = vector.broadcast %83 : vector<1x32xf32> to vector<8x32xf32>
    %105 = arith.addf %103, %104 : vector<8x32xf32>
    %c1 = arith.constant 1 : index
    %c0_62 = arith.constant 0 : index
    %c0_63 = arith.constant 0 : index
    %c0_64 = arith.constant 0 : index
    %106 = vector.load %arg3[%c1, %c0_62, %c0_63, %c0_64] : memref<2x12x32x8xf32, #tpu.memory_space<vmem>>, vector<1x12x32x8xf32>
    %107 = vector.shape_cast %106 : vector<1x12x32x8xf32> to vector<12x32x8xf32>
    %c1_65 = arith.constant 1 : index
    %c0_66 = arith.constant 0 : index
    %c0_67 = arith.constant 0 : index
    %c0_68 = arith.constant 0 : index
    %108 = vector.load %arg4[%c1_65, %c0_66, %c0_67, %c0_68] : memref<2x12x1x8xf32, #tpu.memory_space<vmem>>, vector<1x12x1x8xf32>
    %109 = vector.shape_cast %108 : vector<1x12x1x8xf32> to vector<12x1x8xf32>
    %110 = vector.shape_cast %105 : vector<8x32xf32> to vector<1x8x32xf32>
    %111 = vector.broadcast %110 : vector<1x8x32xf32> to vector<12x8x32xf32>
    "tpu.trace_start"() <{level = 10 : i32, message = "nsd,ndf->nsf"}> : () -> ()
    %cst_69 = arith.constant dense<0.000000e+00> : vector<12x8x8xf32>
    %112 = tpu.matmul %111, %107, %cst_69 {dimension_numbers = #tpu.dot_dimension_numbers<[2], [1], [1], [2], [0, 0, 0, 1, 1, 2], [0], [0]>} : vector<12x8x32xf32>, vector<12x32x8xf32>, vector<12x8x8xf32> -> vector<12x8x8xf32>
    "tpu.trace_stop"() : () -> ()
    %113 = vector.broadcast %109 : vector<12x1x8xf32> to vector<12x8x8xf32>
    %114 = arith.addf %112, %113 : vector<12x8x8xf32>
    %115 = vector.extract_strided_slice %114 {offsets = [0, 0, 0], sizes = [4, 8, 8], strides = [1, 1, 1]} : vector<12x8x8xf32> to vector<4x8x8xf32>
    %116 = vector.extract_strided_slice %114 {offsets = [4, 0, 0], sizes = [4, 8, 8], strides = [1, 1, 1]} : vector<12x8x8xf32> to vector<4x8x8xf32>
    %117 = vector.extract_strided_slice %114 {offsets = [8, 0, 0], sizes = [4, 8, 8], strides = [1, 1, 1]} : vector<12x8x8xf32> to vector<4x8x8xf32>
    "tpu.trace_start"() <{level = 10 : i32, message = "hqd,hkd->hqk"}> : () -> ()
    %cst_70 = arith.constant dense<0.000000e+00> : vector<4x8x8xf32>
    %118 = tpu.matmul %115, %116, %cst_70 {dimension_numbers = #tpu.dot_dimension_numbers<[2], [2], [1], [1], [0, 0, 0, 1, 1, 1], [0], [0]>} : vector<4x8x8xf32>, vector<4x8x8xf32>, vector<4x8x8xf32> -> vector<4x8x8xf32>
    "tpu.trace_stop"() : () -> ()
    %cst_71 = arith.constant dense<0xFF800000> : vector<4x8xf32>
    %119 = vector.multi_reduction <maximumf>, %118, %cst_71 [2] : vector<4x8x8xf32> to vector<4x8xf32>
    %120 = vector.shape_cast %119 : vector<4x8xf32> to vector<4x8x1xf32>
    %121 = vector.broadcast %120 : vector<4x8x1xf32> to vector<4x8x8xf32>
    %122 = arith.subf %118, %121 : vector<4x8x8xf32>
    %123 = math.exp %122 : vector<4x8x8xf32>
    %cst_72 = arith.constant dense<0.000000e+00> : vector<4x8xf32>
    %124 = vector.multi_reduction <add>, %123, %cst_72 [2] : vector<4x8x8xf32> to vector<4x8xf32>
    %125 = vector.shape_cast %124 : vector<4x8xf32> to vector<4x8x1xf32>
    %126 = tpu.reciprocal %125 {approx = true} : vector<4x8x1xf32> -> vector<4x8x1xf32>
    %127 = vector.broadcast %126 : vector<4x8x1xf32> to vector<4x8x8xf32>
    %128 = arith.mulf %123, %127 : vector<4x8x8xf32>
    "tpu.trace_start"() <{level = 10 : i32, message = "hqk,hkd->hqd"}> : () -> ()
    %cst_73 = arith.constant dense<0.000000e+00> : vector<4x8x8xf32>
    %129 = tpu.matmul %128, %117, %cst_73 {dimension_numbers = #tpu.dot_dimension_numbers<[2], [1], [1], [2], [0, 0, 0, 1, 1, 2], [0], [0]>} : vector<4x8x8xf32>, vector<4x8x8xf32>, vector<4x8x8xf32> -> vector<4x8x8xf32>
    "tpu.trace_stop"() : () -> ()
    %c1_74 = arith.constant 1 : index
    %c0_75 = arith.constant 0 : index
    %c0_76 = arith.constant 0 : index
    %c0_77 = arith.constant 0 : index
    %130 = vector.load %arg5[%c1_74, %c0_75, %c0_76, %c0_77] : memref<2x4x8x32xf32, #tpu.memory_space<vmem>>, vector<1x4x8x32xf32>
    %131 = vector.shape_cast %130 : vector<1x4x8x32xf32> to vector<4x8x32xf32>
    "tpu.trace_start"() <{level = 10 : i32, message = "hsf,hfd->hsd"}> : () -> ()
    %cst_78 = arith.constant dense<0.000000e+00> : vector<4x8x32xf32>
    %132 = tpu.matmul %129, %131, %cst_78 {dimension_numbers = #tpu.dot_dimension_numbers<[2], [1], [1], [2], [0, 0, 0, 1, 1, 2], [0], [0]>} : vector<4x8x8xf32>, vector<4x8x32xf32>, vector<4x8x32xf32> -> vector<4x8x32xf32>
    "tpu.trace_stop"() : () -> ()
    %cst_79 = arith.constant dense<0.000000e+00> : vector<8x32xf32>
    %133 = vector.multi_reduction <add>, %132, %cst_79 [0] : vector<4x8x32xf32> to vector<8x32xf32>
    %c1_80 = arith.constant 1 : index
    %c0_81 = arith.constant 0 : index
    %c0_82 = arith.constant 0 : index
    %134 = vector.load %arg6[%c1_80, %c0_81, %c0_82] : memref<2x1x32xf32, #tpu.memory_space<vmem>>, vector<1x1x32xf32>
    %135 = vector.shape_cast %134 : vector<1x1x32xf32> to vector<1x32xf32>
    %136 = vector.broadcast %135 : vector<1x32xf32> to vector<8x32xf32>
    %137 = arith.addf %133, %136 : vector<8x32xf32>
    %138 = arith.addf %105, %137 : vector<8x32xf32>
    %c1_83 = arith.constant 1 : index
    %c0_84 = arith.constant 0 : index
    %c0_85 = arith.constant 0 : index
    %139 = vector.load %arg11[%c1_83, %c0_84, %c0_85] : memref<2x1x32xf32, #tpu.memory_space<vmem>>, vector<1x1x32xf32>
    %140 = vector.shape_cast %139 : vector<1x1x32xf32> to vector<1x32xf32>
    %c1_86 = arith.constant 1 : index
    %c0_87 = arith.constant 0 : index
    %c0_88 = arith.constant 0 : index
    %141 = vector.load %arg12[%c1_86, %c0_87, %c0_88] : memref<2x1x32xf32, #tpu.memory_space<vmem>>, vector<1x1x32xf32>
    %142 = vector.shape_cast %141 : vector<1x1x32xf32> to vector<1x32xf32>
    %cst_89 = arith.constant dense<0.000000e+00> : vector<8xf32>
    %143 = vector.multi_reduction <add>, %138, %cst_89 [1] : vector<8x32xf32> to vector<8xf32>
    %144 = vector.shape_cast %143 : vector<8xf32> to vector<8x1xf32>
    %cst_90 = arith.constant 3.200000e+01 : f32
    %145 = vector.broadcast %cst_90 : f32 to vector<8x1xf32>
    %146 = arith.divf %144, %145 : vector<8x1xf32>
    %147 = vector.broadcast %146 : vector<8x1xf32> to vector<8x32xf32>
    %148 = arith.subf %138, %147 : vector<8x32xf32>
    %149 = arith.mulf %148, %148 : vector<8x32xf32>
    %cst_91 = arith.constant dense<0.000000e+00> : vector<8xf32>
    %150 = vector.multi_reduction <add>, %149, %cst_91 [1] : vector<8x32xf32> to vector<8xf32>
    %151 = vector.shape_cast %150 : vector<8xf32> to vector<8x1xf32>
    %cst_92 = arith.constant 3.200000e+01 : f32
    %152 = vector.broadcast %cst_92 : f32 to vector<8x1xf32>
    %153 = arith.divf %151, %152 : vector<8x1xf32>
    %154 = vector.broadcast %146 : vector<8x1xf32> to vector<8x32xf32>
    %155 = arith.subf %138, %154 : vector<8x32xf32>
    %cst_93 = arith.constant 9.99999974E-6 : f32
    %156 = vector.broadcast %cst_93 : f32 to vector<8x1xf32>
    %157 = arith.addf %153, %156 : vector<8x1xf32>
    %158 = math.rsqrt %157 : vector<8x1xf32>
    %159 = vector.broadcast %158 : vector<8x1xf32> to vector<8x32xf32>
    %160 = arith.mulf %155, %159 : vector<8x32xf32>
    %161 = vector.broadcast %140 : vector<1x32xf32> to vector<8x32xf32>
    %162 = arith.mulf %160, %161 : vector<8x32xf32>
    %163 = vector.broadcast %142 : vector<1x32xf32> to vector<8x32xf32>
    %164 = arith.addf %162, %163 : vector<8x32xf32>
    %c1_94 = arith.constant 1 : index
    %c0_95 = arith.constant 0 : index
    %c0_96 = arith.constant 0 : index
    %165 = vector.load %arg7[%c1_94, %c0_95, %c0_96] : memref<2x32x64xf32, #tpu.memory_space<vmem>>, vector<1x32x64xf32>
    %166 = vector.shape_cast %165 : vector<1x32x64xf32> to vector<32x64xf32>
    %cst_97 = arith.constant dense<0.000000e+00> : vector<8x64xf32>
    %167 = tpu.matmul %164, %166, %cst_97 {dimension_numbers = #tpu.dot_dimension_numbers<[1], [0], [0], [1], [0, 0, 1, 1], [], []>} : vector<8x32xf32>, vector<32x64xf32>, vector<8x64xf32> -> vector<8x64xf32>
    %c1_98 = arith.constant 1 : index
    %c0_99 = arith.constant 0 : index
    %c0_100 = arith.constant 0 : index
    %168 = vector.load %arg8[%c1_98, %c0_99, %c0_100] : memref<2x1x64xf32, #tpu.memory_space<vmem>>, vector<1x1x64xf32>
    %169 = vector.shape_cast %168 : vector<1x1x64xf32> to vector<1x64xf32>
    %170 = vector.broadcast %169 : vector<1x64xf32> to vector<8x64xf32>
    %171 = arith.addf %167, %170 : vector<8x64xf32>
    %cst_101 = arith.constant 0.000000e+00 : f32
    %172 = vector.broadcast %cst_101 : f32 to vector<8x64xf32>
    %173 = arith.maximumf %171, %172 : vector<8x64xf32>
    %c1_102 = arith.constant 1 : index
    %c0_103 = arith.constant 0 : index
    %c0_104 = arith.constant 0 : index
    %174 = vector.load %arg9[%c1_102, %c0_103, %c0_104] : memref<2x64x32xf32, #tpu.memory_space<vmem>>, vector<1x64x32xf32>
    %175 = vector.shape_cast %174 : vector<1x64x32xf32> to vector<64x32xf32>
    %cst_105 = arith.constant dense<0.000000e+00> : vector<8x32xf32>
    %176 = tpu.matmul %173, %175, %cst_105 {dimension_numbers = #tpu.dot_dimension_numbers<[1], [0], [0], [1], [0, 0, 1, 1], [], []>} : vector<8x64xf32>, vector<64x32xf32>, vector<8x32xf32> -> vector<8x32xf32>
    %c1_106 = arith.constant 1 : index
    %c0_107 = arith.constant 0 : index
    %c0_108 = arith.constant 0 : index
    %177 = vector.load %arg10[%c1_106, %c0_107, %c0_108] : memref<2x1x32xf32, #tpu.memory_space<vmem>>, vector<1x1x32xf32>
    %178 = vector.shape_cast %177 : vector<1x1x32xf32> to vector<1x32xf32>
    %179 = vector.broadcast %178 : vector<1x32xf32> to vector<8x32xf32>
    %180 = arith.addf %176, %179 : vector<8x32xf32>
    %181 = arith.addf %164, %180 : vector<8x32xf32>
    %c1_109 = arith.constant 1 : index
    %c0_110 = arith.constant 0 : index
    %c0_111 = arith.constant 0 : index
    %182 = vector.load %arg13[%c1_109, %c0_110, %c0_111] : memref<2x1x32xf32, #tpu.memory_space<vmem>>, vector<1x1x32xf32>
    %183 = vector.shape_cast %182 : vector<1x1x32xf32> to vector<1x32xf32>
    %c1_112 = arith.constant 1 : index
    %c0_113 = arith.constant 0 : index
    %c0_114 = arith.constant 0 : index
    %184 = vector.load %arg14[%c1_112, %c0_113, %c0_114] : memref<2x1x32xf32, #tpu.memory_space<vmem>>, vector<1x1x32xf32>
    %185 = vector.shape_cast %184 : vector<1x1x32xf32> to vector<1x32xf32>
    %cst_115 = arith.constant dense<0.000000e+00> : vector<8xf32>
    %186 = vector.multi_reduction <add>, %181, %cst_115 [1] : vector<8x32xf32> to vector<8xf32>
    %187 = vector.shape_cast %186 : vector<8xf32> to vector<8x1xf32>
    %cst_116 = arith.constant 3.200000e+01 : f32
    %188 = vector.broadcast %cst_116 : f32 to vector<8x1xf32>
    %189 = arith.divf %187, %188 : vector<8x1xf32>
    %190 = vector.broadcast %189 : vector<8x1xf32> to vector<8x32xf32>
    %191 = arith.subf %181, %190 : vector<8x32xf32>
    %192 = arith.mulf %191, %191 : vector<8x32xf32>
    %cst_117 = arith.constant dense<0.000000e+00> : vector<8xf32>
    %193 = vector.multi_reduction <add>, %192, %cst_117 [1] : vector<8x32xf32> to vector<8xf32>
    %194 = vector.shape_cast %193 : vector<8xf32> to vector<8x1xf32>
    %cst_118 = arith.constant 3.200000e+01 : f32
    %195 = vector.broadcast %cst_118 : f32 to vector<8x1xf32>
    %196 = arith.divf %194, %195 : vector<8x1xf32>
    %197 = vector.broadcast %189 : vector<8x1xf32> to vector<8x32xf32>
    %198 = arith.subf %181, %197 : vector<8x32xf32>
    %cst_119 = arith.constant 9.99999974E-6 : f32
    %199 = vector.broadcast %cst_119 : f32 to vector<8x1xf32>
    %200 = arith.addf %196, %199 : vector<8x1xf32>
    %201 = math.rsqrt %200 : vector<8x1xf32>
    %202 = vector.broadcast %201 : vector<8x1xf32> to vector<8x32xf32>
    %203 = arith.mulf %198, %202 : vector<8x32xf32>
    %204 = vector.broadcast %183 : vector<1x32xf32> to vector<8x32xf32>
    %205 = arith.mulf %203, %204 : vector<8x32xf32>
    %206 = vector.broadcast %185 : vector<1x32xf32> to vector<8x32xf32>
    %207 = arith.addf %205, %206 : vector<8x32xf32>
    %c0_120 = arith.constant 0 : index
    %c0_121 = arith.constant 0 : index
    %c0_122 = arith.constant 0 : index
    %208 = vector.load %arg15[%c0_120, %c0_121, %c0_122] : memref<1x8x32xf32, #tpu.memory_space<vmem>>, vector<1x8x32xf32>
    %209 = vector.shape_cast %208 : vector<1x8x32xf32> to vector<8x32xf32>
    %210 = vector.shape_cast %207 : vector<8x32xf32> to vector<1x8x32xf32>
    tpu.vector_store %arg15[%c0_120, %c0_121, %c0_122], %210 {strides = array<i32>} : memref<1x8x32xf32, #tpu.memory_space<vmem>>, vector<1x8x32xf32>,
    return
  }
  func.func @transform_0(%arg0: i32) -> (i32, i32, i32) {
    %c0_i32 = arith.constant 0 : i32
    %c0_i32_0 = arith.constant 0 : i32
    %c0_i32_1 = arith.constant 0 : i32
    return %arg0, %c0_i32, %c0_i32_0 : i32, i32, i32
  }
  func.func @transform_1(%arg0: i32) -> (i32, i32) {
    %c0_i32 = arith.constant 0 : i32
    %c0_i32_0 = arith.constant 0 : i32
    %c0_i32_1 = arith.constant 0 : i32
    return %c0_i32, %c0_i32_0 : i32, i32
  }
  func.func @transform_2(%arg0: i32) -> (i32, i32, i32, i32) {
    %c0_i32 = arith.constant 0 : i32
    %c0_i32_0 = arith.constant 0 : i32
    %c0_i32_1 = arith.constant 0 : i32
    %c0_i32_2 = arith.constant 0 : i32
    %c0_i32_3 = arith.constant 0 : i32
    return %c0_i32, %c0_i32_0, %c0_i32_1, %c0_i32_2 : i32, i32, i32, i32
  }
  func.func @transform_3(%arg0: i32) -> (i32, i32, i32, i32) {
    %c0_i32 = arith.constant 0 : i32
    %c0_i32_0 = arith.constant 0 : i32
    %c0_i32_1 = arith.constant 0 : i32
    %c0_i32_2 = arith.constant 0 : i32
    %c0_i32_3 = arith.constant 0 : i32
    return %c0_i32, %c0_i32_0, %c0_i32_1, %c0_i32_2 : i32, i32, i32, i32
  }
  func.func @transform_4(%arg0: i32) -> (i32, i32, i32, i32) {
    %c0_i32 = arith.constant 0 : i32
    %c0_i32_0 = arith.constant 0 : i32
    %c0_i32_1 = arith.constant 0 : i32
    %c0_i32_2 = arith.constant 0 : i32
    %c0_i32_3 = arith.constant 0 : i32
    return %c0_i32, %c0_i32_0, %c0_i32_1, %c0_i32_2 : i32, i32, i32, i32
  }
  func.func @transform_5(%arg0: i32) -> (i32, i32, i32) {
    %c0_i32 = arith.constant 0 : i32
    %c0_i32_0 = arith.constant 0 : i32
    %c0_i32_1 = arith.constant 0 : i32
    %c0_i32_2 = arith.constant 0 : i32
    return %c0_i32, %c0_i32_0, %c0_i32_1 : i32, i32, i32
  }
  func.func @transform_6(%arg0: i32) -> (i32, i32, i32) {
    %c0_i32 = arith.constant 0 : i32
    %c0_i32_0 = arith.constant 0 : i32
    %c0_i32_1 = arith.constant 0 : i32
    %c0_i32_2 = arith.constant 0 : i32
    return %c0_i32, %c0_i32_0, %c0_i32_1 : i32, i32, i32
  }
  func.func @transform_7(%arg0: i32) -> (i32, i32, i32) {
    %c0_i32 = arith.constant 0 : i32
    %c0_i32_0 = arith.constant 0 : i32
    %c0_i32_1 = arith.constant 0 : i32
    %c0_i32_2 = arith.constant 0 : i32
    return %c0_i32, %c0_i32_0, %c0_i32_1 : i32, i32, i32
  }
  func.func @transform_8(%arg0: i32) -> (i32, i32, i32) {
    %c0_i32 = arith.constant 0 : i32
    %c0_i32_0 = arith.constant 0 : i32
    %c0_i32_1 = arith.constant 0 : i32
    %c0_i32_2 = arith.constant 0 : i32
    return %c0_i32, %c0_i32_0, %c0_i32_1 : i32, i32, i32
  }
  func.func @transform_9(%arg0: i32) -> (i32, i32, i32) {
    %c0_i32 = arith.constant 0 : i32
    %c0_i32_0 = arith.constant 0 : i32
    %c0_i32_1 = arith.constant 0 : i32
    %c0_i32_2 = arith.constant 0 : i32
    return %c0_i32, %c0_i32_0, %c0_i32_1 : i32, i32, i32
  }
  func.func @transform_10(%arg0: i32) -> (i32, i32, i32) {
    %c0_i32 = arith.constant 0 : i32
    %c0_i32_0 = arith.constant 0 : i32
    %c0_i32_1 = arith.constant 0 : i32
    %c0_i32_2 = arith.constant 0 : i32
    return %c0_i32, %c0_i32_0, %c0_i32_1 : i32, i32, i32
  }
  func.func @transform_11(%arg0: i32) -> (i32, i32, i32) {
    %c0_i32 = arith.constant 0 : i32
    %c0_i32_0 = arith.constant 0 : i32
    %c0_i32_1 = arith.constant 0 : i32
    %c0_i32_2 = arith.constant 0 : i32
    return %c0_i32, %c0_i32_0, %c0_i32_1 : i32, i32, i32
  }
  func.func @transform_12(%arg0: i32) -> (i32, i32, i32) {
    %c0_i32 = arith.constant 0 : i32
    %c0_i32_0 = arith.constant 0 : i32
    %c0_i32_1 = arith.constant 0 : i32
    %c0_i32_2 = arith.constant 0 : i32
    return %c0_i32, %c0_i32_0, %c0_i32_1 : i32, i32, i32
  }
  func.func @transform_13(%arg0: i32) -> (i32, i32, i32) {
    %c0_i32 = arith.constant 0 : i32
    %c0_i32_0 = arith.constant 0 : i32
    %c0_i32_1 = arith.constant 0 : i32
    %c0_i32_2 = arith.constant 0 : i32
    return %c0_i32, %c0_i32_0, %c0_i32_1 : i32, i32, i32
  }
  func.func @transform_14(%arg0: i32) -> (i32, i32, i32) {
    %c0_i32 = arith.constant 0 : i32
    %c0_i32_0 = arith.constant 0 : i32
    %c0_i32_1 = arith.constant 0 : i32
    return %arg0, %c0_i32, %c0_i32_0 : i32, i32, i32
  }
}

</mosaic_0001>

<llo_original>
// kernel: tpu_custom_call.1
$region0: #{tpu_custom_call.1}
  #allocation0 [shape = 'u32[]', space=smem, size = 0x4, offset = 0x4, fixed_abs, tag = 'smem constant byte address 0x4 - core index']
  #allocation1 [shape = 'u32[144,128]{1,0:T(1,128)}', space=vmem, size = 0x12000, scoped, tag = 'internal scratch']
  %s0 = inlined_call_operand.vmem [shape: f32[2,8,32], index: 0, kind: input, shape index: {}]
  %s1 = inlined_call_operand.vmem [shape: f32[8,32], index: 1, kind: input, shape index: {}]
  %s2 = inlined_call_operand.vmem [shape: f32[2,12,32,8], index: 2, kind: input, shape index: {}]
  %s3 = inlined_call_operand.vmem [shape: f32[2,12,1,8], index: 3, kind: input, shape index: {}]
  %s4 = inlined_call_operand.vmem [shape: f32[2,4,8,32], index: 4, kind: input, shape index: {}]
  %s5 = inlined_call_operand.vmem [shape: f32[2,1,32], index: 5, kind: input, shape index: {}]
  %s6 = inlined_call_operand.vmem [shape: f32[2,32,64], index: 6, kind: input, shape index: {}]
  %s7 = inlined_call_operand.vmem [shape: f32[2,1,64], index: 7, kind: input, shape index: {}]
  %s8 = inlined_call_operand.vmem [shape: f32[2,64,32], index: 8, kind: input, shape index: {}]
  %s9 = inlined_call_operand.vmem [shape: f32[2,1,32], index: 9, kind: input, shape index: {}]
  %s10 = inlined_call_operand.vmem [shape: f32[2,1,32], index: 10, kind: input, shape index: {}]
  %s11 = inlined_call_operand.vmem [shape: f32[2,1,32], index: 11, kind: input, shape index: {}]
  %s12 = inlined_call_operand.vmem [shape: f32[2,1,32], index: 12, kind: input, shape index: {}]
  %s13 = inlined_call_operand.vmem [shape: f32[2,1,32], index: 13, kind: input, shape index: {}]
  %s14 = inlined_call_operand.hbm [shape: f32[2,8,32], index: 14, kind: output, shape index: {}]
  %s15 = sld [smem:[#allocation0]]
  $region89: #{tpu_custom_call.1} parent=0
    _
  %s17 = ssub.s32 1, %s15
  %s18 = scalar_select 0, %s17, %s15
  $region1: #{tpu_custom_call.1} parent=0
    #allocation2 [shape = 'u8[8192]{0}', space=vmem, size = 0x2000, scoped, tag = 'output window, operand 0']
    #allocation3 [shape = 's32[2]{0}', space=sflag, size = 0x8, scoped, tag = 'scoped memory for tpu_custom_call.1']
    %19 = vsyncpa [#allocation3], 0
    %s20 = scalar_lea.sflag [#allocation3], 1
    %21 = vsyncpa %s20, 0
    loop: start=0, step=1, limit=4
    $region2: #{tpu_custom_call.1} parent=1 // loop_pre_header
      _
    $region3: #{tpu_custom_call.1} parent=1 // loop_header
      %s23 = sphi 0, %s27
      %p24 = scmp.ge.s32.totalorder %s23, 4
      %s33 = sphi 0, %s35
      %s36 = sphi 0, %s33
      %s37 = sphi 0, %s36
      %s53 = sphi 0, %s37
      %s57 = sphi 0, %s57
      %s59 = sphi 0, %s57
      %s60 = sphi 0, %s59
      %s74 = sphi 0, %s60
      %s78 = sphi 0, %s78
      %s80 = sphi 0, %s78
      %s81 = sphi 0, %s80
      %s95 = sphi 0, %s81
      %s99 = sphi 0, %s99
      %s101 = sphi 0, %s99
      %s102 = sphi 0, %s101
      %s116 = sphi 0, %s102
      %s120 = sphi 0, %s120
      %s122 = sphi 0, %s120
      %s123 = sphi 0, %s122
      %s137 = sphi 0, %s123
      %s141 = sphi 0, %s141
      %s143 = sphi 0, %s141
      %s144 = sphi 0, %s143
      %s158 = sphi 0, %s144
      %s162 = sphi 0, %s162
      %s164 = sphi 0, %s162
      %s165 = sphi 0, %s164
      %s179 = sphi 0, %s165
      %s183 = sphi 0, %s183
      %s185 = sphi 0, %s183
      %s186 = sphi 0, %s185
      %s200 = sphi 0, %s186
      %s204 = sphi 0, %s204
      %s206 = sphi 0, %s204
      %s207 = sphi 0, %s206
      %s221 = sphi 0, %s207
      %s225 = sphi 0, %s225
      %s227 = sphi 0, %s225
      %s228 = sphi 0, %s227
      %s242 = sphi 0, %s228
      %s246 = sphi 0, %s246
      %s248 = sphi 0, %s246
      %s249 = sphi 0, %s248
      %s263 = sphi 0, %s249
      %s267 = sphi 0, %s267
      %s269 = sphi 0, %s267
      %s270 = sphi 0, %s269
      %s284 = sphi 0, %s270
      %s288 = sphi 0, %s288
      %s290 = sphi 0, %s288
      %s291 = sphi 0, %s290
      %s305 = sphi 0, %s291
      %s309 = sphi 0, %s309
      %s311 = sphi 0, %s309
      %s312 = sphi 0, %s311
      %s326 = sphi 0, %s312
      %s332 = sphi 0, %s334
      %s335 = sphi 0, %s332
      %s336 = sphi 0, %s335
      %s352 = sphi 0, %s336
    $region4: #{tpu_custom_call.1} parent=1 // loop_header_branch
      %26 = sbr.rel (%p24) target = $region8
    $region5: #{tpu_custom_call.1} parent=1 // loop_body
      %s28 = ssub.s32 %s23, 1
      %s29 = ssub.s32 %s23, 2
      %s30 = sadd.s32 %s23, 1
      %s31 = ssub.s32 %s23, %s30
      %p32 = scmp.eq.s32.totalorder %s31, 0
      %s34 = sadd.s32 %s33, 1
      %s35 = scalar_select %p32, %s33, %s34
      %p38 = pneg %p32
      %p39 = scmp.eq.s32.totalorder %s23, 1
      %p40 = por %p38, %p39
      %p41 = scmp.ne.s32.totalorder %s33, %s36
      %p42 = scmp.eq.s32.totalorder %s23, 0
      %p43 = por %p41, %p42
      %p44 = scmp.ne.s32.totalorder %s33, %s36
      %p45 = scmp.eq.s32.totalorder %s28, 1
      %p46 = por %p44, %p45
      %p47 = scmp.ne.s32.totalorder %s36, %s37
      %p48 = scmp.eq.s32.totalorder %s28, 0
      %p49 = por %p47, %p48
      %p50 = scmp.ne.s32.totalorder %s36, %s37
      %p51 = scmp.eq.s32.totalorder %s29, 1
      %p52 = por %p50, %p51
      %p54 = scmp.ne.s32.totalorder %s37, %s53
      %p55 = scmp.eq.s32.totalorder %s29, 0
      %p56 = por %p54, %p55
      %s58 = sadd.s32 %s57, 1
      %p61 = scmp.eq.s32.totalorder %s23, 1
      %p62 = scmp.ne.s32.totalorder %s57, %s59
      %p63 = scmp.eq.s32.totalorder %s23, 0
      %p64 = por %p62, %p63
      %p65 = scmp.ne.s32.totalorder %s57, %s59
      %p66 = scmp.eq.s32.totalorder %s28, 1
      %p67 = por %p65, %p66
      %p68 = scmp.ne.s32.totalorder %s59, %s60
      %p69 = scmp.eq.s32.totalorder %s28, 0
      %p70 = por %p68, %p69
      %p71 = scmp.ne.s32.totalorder %s59, %s60
      %p72 = scmp.eq.s32.totalorder %s29, 1
      %p73 = por %p71, %p72
      %p75 = scmp.ne.s32.totalorder %s60, %s74
      %p76 = scmp.eq.s32.totalorder %s29, 0
      %p77 = por %p75, %p76
      %s79 = sadd.s32 %s78, 1
      %p82 = scmp.eq.s32.totalorder %s23, 1
      %p83 = scmp.ne.s32.totalorder %s78, %s80
      %p84 = scmp.eq.s32.totalorder %s23, 0
      %p85 = por %p83, %p84
      %p86 = scmp.ne.s32.totalorder %s78, %s80
      %p87 = scmp.eq.s32.totalorder %s28, 1
      %p88 = por %p86, %p87
      %p89 = scmp.ne.s32.totalorder %s80, %s81
      %p90 = scmp.eq.s32.totalorder %s28, 0
      %p91 = por %p89, %p90
      %p92 = scmp.ne.s32.totalorder %s80, %s81
      %p93 = scmp.eq.s32.totalorder %s29, 1
      %p94 = por %p92, %p93
      %p96 = scmp.ne.s32.totalorder %s81, %s95
      %p97 = scmp.eq.s32.totalorder %s29, 0
      %p98 = por %p96, %p97
      %s100 = sadd.s32 %s99, 1
      %p103 = scmp.eq.s32.totalorder %s23, 1
      %p104 = scmp.ne.s32.totalorder %s99, %s101
      %p105 = scmp.eq.s32.totalorder %s23, 0
      %p106 = por %p104, %p105
      %p107 = scmp.ne.s32.totalorder %s99, %s101
      %p108 = scmp.eq.s32.totalorder %s28, 1
      %p109 = por %p107, %p108
      %p110 = scmp.ne.s32.totalorder %s101, %s102
      %p111 = scmp.eq.s32.totalorder %s28, 0
      %p112 = por %p110, %p111
      %p113 = scmp.ne.s32.totalorder %s101, %s102
      %p114 = scmp.eq.s32.totalorder %s29, 1
      %p115 = por %p113, %p114
      %p117 = scmp.ne.s32.totalorder %s102, %s116
      %p118 = scmp.eq.s32.totalorder %s29, 0
      %p119 = por %p117, %p118
      %s121 = sadd.s32 %s120, 1
      %p124 = scmp.eq.s32.totalorder %s23, 1
      %p125 = scmp.ne.s32.totalorder %s120, %s122
      %p126 = scmp.eq.s32.totalorder %s23, 0
      %p127 = por %p125, %p126
      %p128 = scmp.ne.s32.totalorder %s120, %s122
      %p129 = scmp.eq.s32.totalorder %s28, 1
      %p130 = por %p128, %p129
      %p131 = scmp.ne.s32.totalorder %s122, %s123
      %p132 = scmp.eq.s32.totalorder %s28, 0
      %p133 = por %p131, %p132
      %p134 = scmp.ne.s32.totalorder %s122, %s123
      %p135 = scmp.eq.s32.totalorder %s29, 1
      %p136 = por %p134, %p135
      %p138 = scmp.ne.s32.totalorder %s123, %s137
      %p139 = scmp.eq.s32.totalorder %s29, 0
      %p140 = por %p138, %p139
      %s142 = sadd.s32 %s141, 1
      %p145 = scmp.eq.s32.totalorder %s23, 1
      %p146 = scmp.ne.s32.totalorder %s141, %s143
      %p147 = scmp.eq.s32.totalorder %s23, 0
      %p148 = por %p146, %p147
      %p149 = scmp.ne.s32.totalorder %s141, %s143
      %p150 = scmp.eq.s32.totalorder %s28, 1
      %p151 = por %p149, %p150
      %p152 = scmp.ne.s32.totalorder %s143, %s144
      %p153 = scmp.eq.s32.totalorder %s28, 0
      %p154 = por %p152, %p153
      %p155 = scmp.ne.s32.totalorder %s143, %s144
      %p156 = scmp.eq.s32.totalorder %s29, 1
      %p157 = por %p155, %p156
      %p159 = scmp.ne.s32.totalorder %s144, %s158
      %p160 = scmp.eq.s32.totalorder %s29, 0
      %p161 = por %p159, %p160
      %s163 = sadd.s32 %s162, 1
      %p166 = scmp.eq.s32.totalorder %s23, 1
      %p167 = scmp.ne.s32.totalorder %s162, %s164
      %p168 = scmp.eq.s32.totalorder %s23, 0
      %p169 = por %p167, %p168
      %p170 = scmp.ne.s32.totalorder %s162, %s164
      %p171 = scmp.eq.s32.totalorder %s28, 1
      %p172 = por %p170, %p171
      %p173 = scmp.ne.s32.totalorder %s164, %s165
      %p174 = scmp.eq.s32.totalorder %s28, 0
      %p175 = por %p173, %p174
      %p176 = scmp.ne.s32.totalorder %s164, %s165
      %p177 = scmp.eq.s32.totalorder %s29, 1
      %p178 = por %p176, %p177
      %p180 = scmp.ne.s32.totalorder %s165, %s179
      %p181 = scmp.eq.s32.totalorder %s29, 0
      %p182 = por %p180, %p181
      %s184 = sadd.s32 %s183, 1
      %p187 = scmp.eq.s32.totalorder %s23, 1
      %p188 = scmp.ne.s32.totalorder %s183, %s185
      %p189 = scmp.eq.s32.totalorder %s23, 0
      %p190 = por %p188, %p189
      %p191 = scmp.ne.s32.totalorder %s183, %s185
      %p192 = scmp.eq.s32.totalorder %s28, 1
      %p193 = por %p191, %p192
      %p194 = scmp.ne.s32.totalorder %s185, %s186
      %p195 = scmp.eq.s32.totalorder %s28, 0
      %p196 = por %p194, %p195
      %p197 = scmp.ne.s32.totalorder %s185, %s186
      %p198 = scmp.eq.s32.totalorder %s29, 1
      %p199 = por %p197, %p198
      %p201 = scmp.ne.s32.totalorder %s186, %s200
      %p202 = scmp.eq.s32.totalorder %s29, 0
      %p203 = por %p201, %p202
      %s205 = sadd.s32 %s204, 1
      %p208 = scmp.eq.s32.totalorder %s23, 1
      %p209 = scmp.ne.s32.totalorder %s204, %s206
      %p210 = scmp.eq.s32.totalorder %s23, 0
      %p211 = por %p209, %p210
      %p212 = scmp.ne.s32.totalorder %s204, %s206
      %p213 = scmp.eq.s32.totalorder %s28, 1
      %p214 = por %p212, %p213
      %p215 = scmp.ne.s32.totalorder %s206, %s207
      %p216 = scmp.eq.s32.totalorder %s28, 0
      %p217 = por %p215, %p216
      %p218 = scmp.ne.s32.totalorder %s206, %s207
      %p219 = scmp.eq.s32.totalorder %s29, 1
      %p220 = por %p218, %p219
      %p222 = scmp.ne.s32.totalorder %s207, %s221
      %p223 = scmp.eq.s32.totalorder %s29, 0
      %p224 = por %p222, %p223
      %s226 = sadd.s32 %s225, 1
      %p229 = scmp.eq.s32.totalorder %s23, 1
      %p230 = scmp.ne.s32.totalorder %s225, %s227
      %p231 = scmp.eq.s32.totalorder %s23, 0
      %p232 = por %p230, %p231
      %p233 = scmp.ne.s32.totalorder %s225, %s227
      %p234 = scmp.eq.s32.totalorder %s28, 1
      %p235 = por %p233, %p234
      %p236 = scmp.ne.s32.totalorder %s227, %s228
      %p237 = scmp.eq.s32.totalorder %s28, 0
      %p238 = por %p236, %p237
      %p239 = scmp.ne.s32.totalorder %s227, %s228
      %p240 = scmp.eq.s32.totalorder %s29, 1
      %p241 = por %p239, %p240
      %p243 = scmp.ne.s32.totalorder %s228, %s242
      %p244 = scmp.eq.s32.totalorder %s29, 0
      %p245 = por %p243, %p244
      %s247 = sadd.s32 %s246, 1
      %p250 = scmp.eq.s32.totalorder %s23, 1
      %p251 = scmp.ne.s32.totalorder %s246, %s248
      %p252 = scmp.eq.s32.totalorder %s23, 0
      %p253 = por %p251, %p252
      %p254 = scmp.ne.s32.totalorder %s246, %s248
      %p255 = scmp.eq.s32.totalorder %s28, 1
      %p256 = por %p254, %p255
      %p257 = scmp.ne.s32.totalorder %s248, %s249
      %p258 = scmp.eq.s32.totalorder %s28, 0
      %p259 = por %p257, %p258
      %p260 = scmp.ne.s32.totalorder %s248, %s249
      %p261 = scmp.eq.s32.totalorder %s29, 1
      %p262 = por %p260, %p261
      %p264 = scmp.ne.s32.totalorder %s249, %s263
      %p265 = scmp.eq.s32.totalorder %s29, 0
      %p266 = por %p264, %p265
      %s268 = sadd.s32 %s267, 1
      %p271 = scmp.eq.s32.totalorder %s23, 1
      %p272 = scmp.ne.s32.totalorder %s267, %s269
      %p273 = scmp.eq.s32.totalorder %s23, 0
      %p274 = por %p272, %p273
      %p275 = scmp.ne.s32.totalorder %s267, %s269
      %p276 = scmp.eq.s32.totalorder %s28, 1
      %p277 = por %p275, %p276
      %p278 = scmp.ne.s32.totalorder %s269, %s270
      %p279 = scmp.eq.s32.totalorder %s28, 0
      %p280 = por %p278, %p279
      %p281 = scmp.ne.s32.totalorder %s269, %s270
      %p282 = scmp.eq.s32.totalorder %s29, 1
      %p283 = por %p281, %p282
      %p285 = scmp.ne.s32.totalorder %s270, %s284
      %p286 = scmp.eq.s32.totalorder %s29, 0
      %p287 = por %p285, %p286
      %s289 = sadd.s32 %s288, 1
      %p292 = scmp.eq.s32.totalorder %s23, 1
      %p293 = scmp.ne.s32.totalorder %s288, %s290
      %p294 = scmp.eq.s32.totalorder %s23, 0
      %p295 = por %p293, %p294
      %p296 = scmp.ne.s32.totalorder %s288, %s290
      %p297 = scmp.eq.s32.totalorder %s28, 1
      %p298 = por %p296, %p297
      %p299 = scmp.ne.s32.totalorder %s290, %s291
      %p300 = scmp.eq.s32.totalorder %s28, 0
      %p301 = por %p299, %p300
      %p302 = scmp.ne.s32.totalorder %s290, %s291
      %p303 = scmp.eq.s32.totalorder %s29, 1
      %p304 = por %p302, %p303
      %p306 = scmp.ne.s32.totalorder %s291, %s305
      %p307 = scmp.eq.s32.totalorder %s29, 0
      %p308 = por %p306, %p307
      %s310 = sadd.s32 %s309, 1
      %p313 = scmp.eq.s32.totalorder %s23, 1
      %p314 = scmp.ne.s32.totalorder %s309, %s311
      %p315 = scmp.eq.s32.totalorder %s23, 0
      %p316 = por %p314, %p315
      %p317 = scmp.ne.s32.totalorder %s309, %s311
      %p318 = scmp.eq.s32.totalorder %s28, 1
      %p319 = por %p317, %p318
      %p320 = scmp.ne.s32.totalorder %s311, %s312
      %p321 = scmp.eq.s32.totalorder %s28, 0
      %p322 = por %p320, %p321
      %p323 = scmp.ne.s32.totalorder %s311, %s312
      %p324 = scmp.eq.s32.totalorder %s29, 1
      %p325 = por %p323, %p324
      %p327 = scmp.ne.s32.totalorder %s312, %s326
      %p328 = scmp.eq.s32.totalorder %s29, 0
      %p329 = por %p327, %p328
      %s330 = ssub.s32 %s23, %s30
      %p331 = scmp.eq.s32.totalorder %s330, 0
      %s333 = sadd.s32 %s332, 1
      %s334 = scalar_select %p331, %s332, %s333
      %p337 = pneg %p331
      %p338 = scmp.eq.s32.totalorder %s23, 1
      %p339 = por %p337, %p338
      %p340 = scmp.ne.s32.totalorder %s332, %s335
      %p341 = scmp.eq.s32.totalorder %s23, 0
      %p342 = por %p340, %p341
      %p343 = scmp.ne.s32.totalorder %s332, %s335
      %p344 = scmp.eq.s32.totalorder %s28, 1
      %p345 = por %p343, %p344
      %p346 = scmp.ne.s32.totalorder %s335, %s336
      %p347 = scmp.eq.s32.totalorder %s28, 0
      %p348 = por %p346, %p347
      %p349 = scmp.ne.s32.totalorder %s335, %s336
      %p350 = scmp.eq.s32.totalorder %s29, 1
      %p351 = por %p349, %p350
      %p353 = scmp.ne.s32.totalorder %s336, %s352
      %p354 = scmp.eq.s32.totalorder %s29, 0
      %p355 = por %p353, %p354
      %p356 = scmp.le.s32.totalorder 1, %s23
      %p357 = scmp.lt.s32.totalorder %s23, 3
      %p358 = pnand %p356, %p357
      %p359 = pneg %p358
      // Predicated region
      $region9: #{tpu_custom_call.1} parent=5 // pred_check
        _
      $region10: #{tpu_custom_call.1} parent=5 // pred_check_branch
        %361 = sbr.rel (%p358) target = $region12
      $region11: #{tpu_custom_call.1} parent=5 // pred_region
        %s362 = ssub.s32 %s23, 1
        // Predicated region
        $region13: #{tpu_custom_call.1} parent=11 // pred_check
          %p363 = pneg %p70
        $region14: #{tpu_custom_call.1} parent=11 // pred_check_branch
          %365 = sbr.rel (%p363) target = $region16
        $region15: #{tpu_custom_call.1} parent=11 // pred_region
          _
        $region16: #{tpu_custom_call.1} parent=11 // pred_fallthru
          _
        // Predicated region
        $region17: #{tpu_custom_call.1} parent=11 // pred_check
          %p366 = pneg %p91
        $region18: #{tpu_custom_call.1} parent=11 // pred_check_branch
          %368 = sbr.rel (%p366) target = $region20
        $region19: #{tpu_custom_call.1} parent=11 // pred_region
          _
        $region20: #{tpu_custom_call.1} parent=11 // pred_fallthru
          _
        // Predicated region
        $region21: #{tpu_custom_call.1} parent=11 // pred_check
          %p369 = pneg %p112
        $region22: #{tpu_custom_call.1} parent=11 // pred_check_branch
          %371 = sbr.rel (%p369) target = $region24
        $region23: #{tpu_custom_call.1} parent=11 // pred_region
          _
        $region24: #{tpu_custom_call.1} parent=11 // pred_fallthru
          _
        // Predicated region
        $region25: #{tpu_custom_call.1} parent=11 // pred_check
          %p372 = pneg %p133
        $region26: #{tpu_custom_call.1} parent=11 // pred_check_branch
          %374 = sbr.rel (%p372) target = $region28
        $region27: #{tpu_custom_call.1} parent=11 // pred_region
          _
        $region28: #{tpu_custom_call.1} parent=11 // pred_fallthru
          _
        // Predicated region
        $region29: #{tpu_custom_call.1} parent=11 // pred_check
          %p375 = pneg %p154
        $region30: #{tpu_custom_call.1} parent=11 // pred_check_branch
          %377 = sbr.rel (%p375) target = $region32
        $region31: #{tpu_custom_call.1} parent=11 // pred_region
          _
        $region32: #{tpu_custom_call.1} parent=11 // pred_fallthru
          _
        // Predicated region
        $region33: #{tpu_custom_call.1} parent=11 // pred_check
          %p378 = pneg %p175
        $region34: #{tpu_custom_call.1} parent=11 // pred_check_branch
          %380 = sbr.rel (%p378) target = $region36
        $region35: #{tpu_custom_call.1} parent=11 // pred_region
          _
        $region36: #{tpu_custom_call.1} parent=11 // pred_fallthru
          _
        // Predicated region
        $region37: #{tpu_custom_call.1} parent=11 // pred_check
          %p381 = pneg %p196
        $region38: #{tpu_custom_call.1} parent=11 // pred_check_branch
          %383 = sbr.rel (%p381) target = $region40
        $region39: #{tpu_custom_call.1} parent=11 // pred_region
          _
        $region40: #{tpu_custom_call.1} parent=11 // pred_fallthru
          _
        // Predicated region
        $region41: #{tpu_custom_call.1} parent=11 // pred_check
          %p384 = pneg %p217
        $region42: #{tpu_custom_call.1} parent=11 // pred_check_branch
          %386 = sbr.rel (%p384) target = $region44
        $region43: #{tpu_custom_call.1} parent=11 // pred_region
          _
        $region44: #{tpu_custom_call.1} parent=11 // pred_fallthru
          _
        // Predicated region
        $region45: #{tpu_custom_call.1} parent=11 // pred_check
          %p387 = pneg %p238
        $region46: #{tpu_custom_call.1} parent=11 // pred_check_branch
          %389 = sbr.rel (%p387) target = $region48
        $region47: #{tpu_custom_call.1} parent=11 // pred_region
          _
        $region48: #{tpu_custom_call.1} parent=11 // pred_fallthru
          _
        // Predicated region
        $region49: #{tpu_custom_call.1} parent=11 // pred_check
          %p390 = pneg %p259
        $region50: #{tpu_custom_call.1} parent=11 // pred_check_branch
          %392 = sbr.rel (%p390) target = $region52
        $region51: #{tpu_custom_call.1} parent=11 // pred_region
          _
        $region52: #{tpu_custom_call.1} parent=11 // pred_fallthru
          _
        // Predicated region
        $region53: #{tpu_custom_call.1} parent=11 // pred_check
          %p393 = pneg %p280
        $region54: #{tpu_custom_call.1} parent=11 // pred_check_branch
          %395 = sbr.rel (%p393) target = $region56
        $region55: #{tpu_custom_call.1} parent=11 // pred_region
          _
        $region56: #{tpu_custom_call.1} parent=11 // pred_fallthru
          _
        // Predicated region
        $region57: #{tpu_custom_call.1} parent=11 // pred_check
          %p396 = pneg %p301
        $region58: #{tpu_custom_call.1} parent=11 // pred_check_branch
          %398 = sbr.rel (%p396) target = $region60
        $region59: #{tpu_custom_call.1} parent=11 // pred_region
          _
        $region60: #{tpu_custom_call.1} parent=11 // pred_fallthru
          _
        // Predicated region
        $region61: #{tpu_custom_call.1} parent=11 // pred_check
          %p399 = pneg %p322
        $region62: #{tpu_custom_call.1} parent=11 // pred_check_branch
          %401 = sbr.rel (%p399) target = $region64
        $region63: #{tpu_custom_call.1} parent=11 // pred_region
          _
        $region64: #{tpu_custom_call.1} parent=11 // pred_fallthru
          _
      $region12: #{tpu_custom_call.1} parent=5 // pred_fallthru
        _
      %p402 = scmp.lt.s32.totalorder %s23, 2
      // Predicated region
      $region65: #{tpu_custom_call.1} parent=5 // pred_check
        %p403 = pneg %p402
      $region66: #{tpu_custom_call.1} parent=5 // pred_check_branch
        %405 = sbr.rel (%p403) target = $region68
      $region67: #{tpu_custom_call.1} parent=5 // pred_region
        // Predicated region
        $region69: #{tpu_custom_call.1} parent=67 // pred_check
          %p406 = pneg %p43
        $region70: #{tpu_custom_call.1} parent=67 // pred_check_branch
          %408 = sbr.rel (%p406) target = $region72
        $region71: #{tpu_custom_call.1} parent=67 // pred_region
          %p409 = scmp.lt.s32.totalorder %s23, 1
          %s410 = scalar_select %p409, %s23, 1
          %s411 = smul.addr %s410, 8
          %s412 = scalar_lea.vmem %s0, %s411
        $region72: #{tpu_custom_call.1} parent=67 // pred_fallthru
          _
      $region68: #{tpu_custom_call.1} parent=5 // pred_fallthru
        _
      %p413 = scmp.le.s32.totalorder 1, %s23
      %p414 = scmp.lt.s32.totalorder %s23, 3
      %p415 = pnand %p413, %p414
      %p416 = pneg %p415
      // Predicated region
      $region73: #{tpu_custom_call.1} parent=5 // pred_check
        _
      $region74: #{tpu_custom_call.1} parent=5 // pred_check_branch
        %418 = sbr.rel (%p415) target = $region76
      $region75: #{tpu_custom_call.1} parent=5 // pred_region
        %s419 = ssub.s32 %s23, 1
        %p420 = scmp.lt.s32.totalorder %s28, 1
        %s421 = scalar_select %p420, %s28, 1
        %s422 = smul.addr %s421, 8
        %s423 = scalar_lea.vmem %s0, %s422
        %p424 = pneg %p49
        %p425 = pneg %p46
        %p426 = pneg %p70
        %p427 = pneg %p67
        %p428 = pneg %p91
        %p429 = pneg %p88
        %p430 = pneg %p112
        %p431 = pneg %p109
        %p432 = pneg %p133
        %p433 = pneg %p130
        %p434 = pneg %p154
        %p435 = pneg %p151
        %p436 = pneg %p175
        %p437 = pneg %p172
        %p438 = pneg %p196
        %p439 = pneg %p193
        %p440 = pneg %p217
        %p441 = pneg %p214
        %p442 = pneg %p238
        %p443 = pneg %p235
        %p444 = pneg %p259
        %p445 = pneg %p256
        %p446 = pneg %p280
        %p447 = pneg %p277
        %p448 = pneg %p301
        %p449 = pneg %p298
        %p450 = pneg %p322
        %p451 = pneg %p319
        %p452 = pneg %p348
        %p453 = pneg %p345
        %s454 = sand.u32 %s335, 1
        %s455 = scalar_lea.sflag [#allocation3], %s454
        %s456 = sand.u32 %s335, 1
        %s457 = smul.addr %s456, 8
        %s458 = scalar_lea.vmem [#allocation2], %s457
        %p459 = scmp.lt.s32.totalorder %s28, 1
        %s460 = scalar_select %p459, %s28, 1
        %s461 = smul.addr %s460, 8
        %s462 = scalar_lea.vmem %s0, %s461
        %v463 = vld [vmem:[%s462] sm:$0xff]
        %v464 = vld [vmem:[%s1] sm:$0xff]
        %v465 = vadd.f32 %v463, %v464
        %v466 = vld [vmem:[%s2] sm:$0xff]
        %v467 = vld [vmem:[%s2 + $0x8] sm:$0xff]
        %v468 = vld [vmem:[%s2 + $0x10] sm:$0xff]
        %v469 = vld [vmem:[%s2 + $0x18] sm:$0xff]
        %v470 = vld [vmem:[%s2 + $0x20] sm:$0xff]
        %v471 = vld [vmem:[%s2 + $0x28] sm:$0xff]
        %v472 = vld [vmem:[%s2 + $0x30] sm:$0xff]
        %v473 = vld [vmem:[%s2 + $0x38] sm:$0xff]
        %v474 = vld [vmem:[%s2 + $0x40] sm:$0xff]
        %v475 = vld [vmem:[%s2 + $0x48] sm:$0xff]
        %v476 = vld [vmem:[%s2 + $0x50] sm:$0xff]
        %v477 = vld [vmem:[%s2 + $0x58] sm:$0xff]
        %v478 = vld [vmem:[%s2 + $0x60] sm:$0xff]
        %v479 = vld [vmem:[%s2 + $0x68] sm:$0xff]
        %v480 = vld [vmem:[%s2 + $0x70] sm:$0xff]
        %v481 = vld [vmem:[%s2 + $0x78] sm:$0xff]
        %v482 = vld [vmem:[%s2 + $0x80] sm:$0xff]
        %v483 = vld [vmem:[%s2 + $0x88] sm:$0xff]
        %v484 = vld [vmem:[%s2 + $0x90] sm:$0xff]
        %v485 = vld [vmem:[%s2 + $0x98] sm:$0xff]
        %v486 = vld [vmem:[%s2 + $0xa0] sm:$0xff]
        %v487 = vld [vmem:[%s2 + $0xa8] sm:$0xff]
        %v488 = vld [vmem:[%s2 + $0xb0] sm:$0xff]
        %v489 = vld [vmem:[%s2 + $0xb8] sm:$0xff]
        %v490 = vld [vmem:[%s2 + $0xc0] sm:$0xff]
        %v491 = vld [vmem:[%s2 + $0xc8] sm:$0xff]
        %v492 = vld [vmem:[%s2 + $0xd0] sm:$0xff]
        %v493 = vld [vmem:[%s2 + $0xd8] sm:$0xff]
        %v494 = vld [vmem:[%s2 + $0xe0] sm:$0xff]
        %v495 = vld [vmem:[%s2 + $0xe8] sm:$0xff]
        %v496 = vld [vmem:[%s2 + $0xf0] sm:$0xff]
        %v497 = vld [vmem:[%s2 + $0xf8] sm:$0xff]
        %v498 = vld [vmem:[%s2 + $0x100] sm:$0xff]
        %v499 = vld [vmem:[%s2 + $0x108] sm:$0xff]
        %v500 = vld [vmem:[%s2 + $0x110] sm:$0xff]
        %v501 = vld [vmem:[%s2 + $0x118] sm:$0xff]
        %v502 = vld [vmem:[%s2 + $0x120] sm:$0xff]
        %v503 = vld [vmem:[%s2 + $0x128] sm:$0xff]
        %v504 = vld [vmem:[%s2 + $0x130] sm:$0xff]
        %v505 = vld [vmem:[%s2 + $0x138] sm:$0xff]
        %v506 = vld [vmem:[%s2 + $0x140] sm:$0xff]
        %v507 = vld [vmem:[%s2 + $0x148] sm:$0xff]
        %v508 = vld [vmem:[%s2 + $0x150] sm:$0xff]
        %v509 = vld [vmem:[%s2 + $0x158] sm:$0xff]
        %v510 = vld [vmem:[%s2 + $0x160] sm:$0xff]
        %v511 = vld [vmem:[%s2 + $0x168] sm:$0xff]
        %v512 = vld [vmem:[%s2 + $0x170] sm:$0xff]
        %v513 = vld [vmem:[%s2 + $0x178] sm:$0xff]
        %v514 = vld [vmem:[%s3] sm:$0x1]
        %v515 = vld [vmem:[%s3 + $0x1] sm:$0x1]
        %v516 = vld [vmem:[%s3 + $0x2] sm:$0x1]
        %v517 = vld [vmem:[%s3 + $0x3] sm:$0x1]
        %v518 = vld [vmem:[%s3 + $0x4] sm:$0x1]
        %v519 = vld [vmem:[%s3 + $0x5] sm:$0x1]
        %v520 = vld [vmem:[%s3 + $0x6] sm:$0x1]
        %v521 = vld [vmem:[%s3 + $0x7] sm:$0x1]
        %v522 = vld [vmem:[%s3 + $0x8] sm:$0x1]
        %v523 = vld [vmem:[%s3 + $0x9] sm:$0x1]
        %v524 = vld [vmem:[%s3 + $0xa] sm:$0x1]
        %v525 = vld [vmem:[%s3 + $0xb] sm:$0x1]
        %v538 = vlaneseq
        %v539 = vshrl.u32 %v538, 7
        %v540 = vsub.s32 0, %v539
        %v541 = vrot.slane %v514, %v540
        %v542 = vlaneseq
        %v543 = vshrl.u32 %v542, 7
        %v544 = vsub.s32 0, %v543
        %v545 = vrot.slane %v515, %v544
        %v546 = vlaneseq
        %v547 = vshrl.u32 %v546, 7
        %v548 = vsub.s32 0, %v547
        %v549 = vrot.slane %v516, %v548
        %v550 = vlaneseq
        %v551 = vshrl.u32 %v550, 7
        %v552 = vsub.s32 0, %v551
        %v553 = vrot.slane %v517, %v552
        %v554 = vlaneseq
        %v555 = vshrl.u32 %v554, 7
        %v556 = vsub.s32 0, %v555
        %v557 = vrot.slane %v518, %v556
        %v558 = vlaneseq
        %v559 = vshrl.u32 %v558, 7
        %v560 = vsub.s32 0, %v559
        %v561 = vrot.slane %v519, %v560
        %v562 = vlaneseq
        %v563 = vshrl.u32 %v562, 7
        %v564 = vsub.s32 0, %v563
        %v565 = vrot.slane %v520, %v564
        %v566 = vlaneseq
        %v567 = vshrl.u32 %v566, 7
        %v568 = vsub.s32 0, %v567
        %v569 = vrot.slane %v521, %v568
        %v570 = vlaneseq
        %v571 = vshrl.u32 %v570, 7
        %v572 = vsub.s32 0, %v571
        %v573 = vrot.slane %v522, %v572
        %v574 = vlaneseq
        %v575 = vshrl.u32 %v574, 7
        %v576 = vsub.s32 0, %v575
        %v577 = vrot.slane %v523, %v576
        %v578 = vlaneseq
        %v579 = vshrl.u32 %v578, 7
        %v580 = vsub.s32 0, %v579
        %v581 = vrot.slane %v524, %v580
        %v582 = vlaneseq
        %v583 = vshrl.u32 %v582, 7
        %v584 = vsub.s32 0, %v583
        %v585 = vrot.slane %v525, %v584
        %vm598 = vcmask 261120
        %v600 = vsel %vm598, %v465, 0
        %602 = vmatprep.subr.mxu0 0.0
        %603 = vmatpush1.msra.mxu0 0.0
        %604 = vmatprep.subr.mxu0 0.0
        %605 = vmatpush1.msra.mxu0 0.0
        %606 = vmatprep.subr.mxu0 0.0
        %607 = vmatpush1.msra.mxu0 0.0
        %608 = vmatprep.subr.mxu0 0.0
        %609 = vmatpush1.msra.mxu0 0.0
        %610 = vmatprep.subr.mxu0 0.0
        %611 = vmatpush1.msra.mxu0 0.0
        %612 = vmatprep.subr.mxu0 0.0
        %613 = vmatpush1.msra.mxu0 0.0
        %614 = vmatprep.subr.mxu0 0.0
        %615 = vmatpush1.msra.mxu0 0.0
        %616 = vmatprep.subr.mxu0 0.0
        %617 = vmatpush1.msra.mxu0 0.0
        %618 = vmatprep.subr.mxu0 0.0
        %619 = vmatpush1.msra.mxu0 0.0
        %620 = vmatprep.subr.mxu0 0.0
        %621 = vmatpush1.msra.mxu0 0.0
        %622 = vmatprep.subr.mxu0 0.0
        %623 = vmatpush1.msra.mxu0 0.0
        %624 = vmatprep.subr.mxu0 0.0
        %625 = vmatpush1.msra.mxu0 0.0
        %626 = vmatprep.subr.mxu0 0.0
        %627 = vmatpush1.msra.mxu0 %v469
        %628 = vmatprep.subr.mxu0 0.0
        %629 = vmatpush1.msra.mxu0 %v468
        %630 = vmatprep.subr.mxu0 0.0
        %631 = vmatpush1.msra.mxu0 %v467
        %632 = vmatprep.subr.mxu0 0.0
        %633 = vmatpush1.msra.mxu0 %v466
        %634 = vmatprep.subr.mxu0 0.0
        %635 = vmatpush2.msra.mxu0 0.0
        %636 = vmatprep.subr.mxu0 0.0
        %637 = vmatpush2.msra.mxu0 0.0
        %638 = vmatprep.subr.mxu0 0.0
        %639 = vmatpush2.msra.mxu0 0.0
        %640 = vmatprep.subr.mxu0 0.0
        %641 = vmatpush2.msra.mxu0 0.0
        %642 = vmatprep.subr.mxu0 0.0
        %643 = vmatpush2.msra.mxu0 0.0
        %644 = vmatprep.subr.mxu0 0.0
        %645 = vmatpush2.msra.mxu0 0.0
        %646 = vmatprep.subr.mxu0 0.0
        %647 = vmatpush2.msra.mxu0 0.0
        %648 = vmatprep.subr.mxu0 0.0
        %649 = vmatpush2.msra.mxu0 0.0
        %650 = vmatprep.subr.mxu0 0.0
        %651 = vmatpush2.msra.mxu0 0.0
        %652 = vmatprep.subr.mxu0 0.0
        %653 = vmatpush2.msra.mxu0 0.0
        %654 = vmatprep.subr.mxu0 0.0
        %655 = vmatpush2.msra.mxu0 0.0
        %656 = vmatprep.subr.mxu0 0.0
        %657 = vmatpush2.msra.mxu0 0.0
        %658 = vmatprep.subr.mxu0 0.0
        %659 = vmatpush2.msra.mxu0 0.0
        %660 = vmatprep.subr.mxu0 0.0
        %661 = vmatpush2.msra.mxu0 0.0
        %662 = vmatprep.subr.mxu0 0.0
        %663 = vmatpush2.msra.mxu0 0.0
        %664 = vmatprep.subr.mxu0 0.0
        %665 = vmatpush2.msra.mxu0 0.0
        %666 = vmatprep.mubr.f32.mxu0 0.0
        %667 = vmatmul.mubr.f32.gmra.mxu0 %v600
        %v668 = vpop.f32.mrf.mxu0
        %v669 = vadd.f32 %v541, %v668
        %v670 = vpop.f32.mrf.mxu0
        %671 = vdwg.mxu0
        %672 = vmatprep.subr.mxu0 0.0
        %673 = vmatpush1.msra.mxu0 0.0
        %674 = vmatprep.subr.mxu0 0.0
        %675 = vmatpush1.msra.mxu0 0.0
        %676 = vmatprep.subr.mxu0 0.0
        %677 = vmatpush1.msra.mxu0 0.0
        %678 = vmatprep.subr.mxu0 0.0
        %679 = vmatpush1.msra.mxu0 0.0
        %680 = vmatprep.subr.mxu0 0.0
        %681 = vmatpush1.msra.mxu0 0.0
        %682 = vmatprep.subr.mxu0 0.0
        %683 = vmatpush1.msra.mxu0 0.0
        %684 = vmatprep.subr.mxu0 0.0
        %685 = vmatpush1.msra.mxu0 0.0
        %686 = vmatprep.subr.mxu0 0.0
        %687 = vmatpush1.msra.mxu0 0.0
        %688 = vmatprep.subr.mxu0 0.0
        %689 = vmatpush1.msra.mxu0 0.0
        %690 = vmatprep.subr.mxu0 0.0
        %691 = vmatpush1.msra.mxu0 0.0
        %692 = vmatprep.subr.mxu0 0.0
        %693 = vmatpush1.msra.mxu0 0.0
        %694 = vmatprep.subr.mxu0 0.0
        %695 = vmatpush1.msra.mxu0 0.0
        %696 = vmatprep.subr.mxu0 0.0
        %697 = vmatpush1.msra.mxu0 %v473
        %698 = vmatprep.subr.mxu0 0.0
        %699 = vmatpush1.msra.mxu0 %v472
        %700 = vmatprep.subr.mxu0 0.0
        %701 = vmatpush1.msra.mxu0 %v471
        %702 = vmatprep.subr.mxu0 0.0
        %703 = vmatpush1.msra.mxu0 %v470
        %704 = vmatprep.subr.mxu0 0.0
        %705 = vmatpush2.msra.mxu0 0.0
        %706 = vmatprep.subr.mxu0 0.0
        %707 = vmatpush2.msra.mxu0 0.0
        %708 = vmatprep.subr.mxu0 0.0
        %709 = vmatpush2.msra.mxu0 0.0
        %710 = vmatprep.subr.mxu0 0.0
        %711 = vmatpush2.msra.mxu0 0.0
        %712 = vmatprep.subr.mxu0 0.0
        %713 = vmatpush2.msra.mxu0 0.0
        %714 = vmatprep.subr.mxu0 0.0
        %715 = vmatpush2.msra.mxu0 0.0
        %716 = vmatprep.subr.mxu0 0.0
        %717 = vmatpush2.msra.mxu0 0.0
        %718 = vmatprep.subr.mxu0 0.0
        %719 = vmatpush2.msra.mxu0 0.0
        %720 = vmatprep.subr.mxu0 0.0
        %721 = vmatpush2.msra.mxu0 0.0
        %722 = vmatprep.subr.mxu0 0.0
        %723 = vmatpush2.msra.mxu0 0.0
        %724 = vmatprep.subr.mxu0 0.0
        %725 = vmatpush2.msra.mxu0 0.0
        %726 = vmatprep.subr.mxu0 0.0
        %727 = vmatpush2.msra.mxu0 0.0
        %728 = vmatprep.subr.mxu0 0.0
        %729 = vmatpush2.msra.mxu0 0.0
        %730 = vmatprep.subr.mxu0 0.0
        %731 = vmatpush2.msra.mxu0 0.0
        %732 = vmatprep.subr.mxu0 0.0
        %733 = vmatpush2.msra.mxu0 0.0
        %734 = vmatprep.subr.mxu0 0.0
        %735 = vmatpush2.msra.mxu0 0.0
        %736 = vmatprep.mubr.f32.mxu0 0.0
        %737 = vmatmul.mubr.f32.gmra.mxu0 %v600
        %v738 = vpop.f32.mrf.mxu0
        %v739 = vadd.f32 %v545, %v738
        %v740 = vpop.f32.mrf.mxu0
        %741 = vdwg.mxu0
        %742 = vmatprep.subr.mxu0 0.0
        %743 = vmatpush1.msra.mxu0 0.0
        %744 = vmatprep.subr.mxu0 0.0
        %745 = vmatpush1.msra.mxu0 0.0
        %746 = vmatprep.subr.mxu0 0.0
        %747 = vmatpush1.msra.mxu0 0.0
        %748 = vmatprep.subr.mxu0 0.0
        %749 = vmatpush1.msra.mxu0 0.0
        %750 = vmatprep.subr.mxu0 0.0
        %751 = vmatpush1.msra.mxu0 0.0
        %752 = vmatprep.subr.mxu0 0.0
        %753 = vmatpush1.msra.mxu0 0.0
        %754 = vmatprep.subr.mxu0 0.0
        %755 = vmatpush1.msra.mxu0 0.0
        %756 = vmatprep.subr.mxu0 0.0
        %757 = vmatpush1.msra.mxu0 0.0
        %758 = vmatprep.subr.mxu0 0.0
        %759 = vmatpush1.msra.mxu0 0.0
        %760 = vmatprep.subr.mxu0 0.0
        %761 = vmatpush1.msra.mxu0 0.0
        %762 = vmatprep.subr.mxu0 0.0
        %763 = vmatpush1.msra.mxu0 0.0
        %764 = vmatprep.subr.mxu0 0.0
        %765 = vmatpush1.msra.mxu0 0.0
        %766 = vmatprep.subr.mxu0 0.0
        %767 = vmatpush1.msra.mxu0 %v477
        %768 = vmatprep.subr.mxu0 0.0
        %769 = vmatpush1.msra.mxu0 %v476
        %770 = vmatprep.subr.mxu0 0.0
        %771 = vmatpush1.msra.mxu0 %v475
        %772 = vmatprep.subr.mxu0 0.0
        %773 = vmatpush1.msra.mxu0 %v474
        %774 = vmatprep.subr.mxu0 0.0
        %775 = vmatpush2.msra.mxu0 0.0
        %776 = vmatprep.subr.mxu0 0.0
        %777 = vmatpush2.msra.mxu0 0.0
        %778 = vmatprep.subr.mxu0 0.0
        %779 = vmatpush2.msra.mxu0 0.0
        %780 = vmatprep.subr.mxu0 0.0
        %781 = vmatpush2.msra.mxu0 0.0
        %782 = vmatprep.subr.mxu0 0.0
        %783 = vmatpush2.msra.mxu0 0.0
        %784 = vmatprep.subr.mxu0 0.0
        %785 = vmatpush2.msra.mxu0 0.0
        %786 = vmatprep.subr.mxu0 0.0
        %787 = vmatpush2.msra.mxu0 0.0
        %788 = vmatprep.subr.mxu0 0.0
        %789 = vmatpush2.msra.mxu0 0.0
        %790 = vmatprep.subr.mxu0 0.0
        %791 = vmatpush2.msra.mxu0 0.0
        %792 = vmatprep.subr.mxu0 0.0
        %793 = vmatpush2.msra.mxu0 0.0
        %794 = vmatprep.subr.mxu0 0.0
        %795 = vmatpush2.msra.mxu0 0.0
        %796 = vmatprep.subr.mxu0 0.0
        %797 = vmatpush2.msra.mxu0 0.0
        %798 = vmatprep.subr.mxu0 0.0
        %799 = vmatpush2.msra.mxu0 0.0
        %800 = vmatprep.subr.mxu0 0.0
        %801 = vmatpush2.msra.mxu0 0.0
        %802 = vmatprep.subr.mxu0 0.0
        %803 = vmatpush2.msra.mxu0 0.0
        %804 = vmatprep.subr.mxu0 0.0
        %805 = vmatpush2.msra.mxu0 0.0
        %806 = vmatprep.mubr.f32.mxu0 0.0
        %807 = vmatmul.mubr.f32.gmra.mxu0 %v600
        %v808 = vpop.f32.mrf.mxu0
        %v809 = vadd.f32 %v549, %v808
        %v810 = vpop.f32.mrf.mxu0
        %811 = vdwg.mxu0
        %812 = vmatprep.subr.mxu0 0.0
        %813 = vmatpush1.msra.mxu0 0.0
        %814 = vmatprep.subr.mxu0 0.0
        %815 = vmatpush1.msra.mxu0 0.0
        %816 = vmatprep.subr.mxu0 0.0
        %817 = vmatpush1.msra.mxu0 0.0
        %818 = vmatprep.subr.mxu0 0.0
        %819 = vmatpush1.msra.mxu0 0.0
        %820 = vmatprep.subr.mxu0 0.0
        %821 = vmatpush1.msra.mxu0 0.0
        %822 = vmatprep.subr.mxu0 0.0
        %823 = vmatpush1.msra.mxu0 0.0
        %824 = vmatprep.subr.mxu0 0.0
        %825 = vmatpush1.msra.mxu0 0.0
        %826 = vmatprep.subr.mxu0 0.0
        %827 = vmatpush1.msra.mxu0 0.0
        %828 = vmatprep.subr.mxu0 0.0
        %829 = vmatpush1.msra.mxu0 0.0
        %830 = vmatprep.subr.mxu0 0.0
        %831 = vmatpush1.msra.mxu0 0.0
        %832 = vmatprep.subr.mxu0 0.0
        %833 = vmatpush1.msra.mxu0 0.0
        %834 = vmatprep.subr.mxu0 0.0
        %835 = vmatpush1.msra.mxu0 0.0
        %836 = vmatprep.subr.mxu0 0.0
        %837 = vmatpush1.msra.mxu0 %v481
        %838 = vmatprep.subr.mxu0 0.0
        %839 = vmatpush1.msra.mxu0 %v480
        %840 = vmatprep.subr.mxu0 0.0
        %841 = vmatpush1.msra.mxu0 %v479
        %842 = vmatprep.subr.mxu0 0.0
        %843 = vmatpush1.msra.mxu0 %v478
        %844 = vmatprep.subr.mxu0 0.0
        %845 = vmatpush2.msra.mxu0 0.0
        %846 = vmatprep.subr.mxu0 0.0
        %847 = vmatpush2.msra.mxu0 0.0
        %848 = vmatprep.subr.mxu0 0.0
        %849 = vmatpush2.msra.mxu0 0.0
        %850 = vmatprep.subr.mxu0 0.0
        %851 = vmatpush2.msra.mxu0 0.0
        %852 = vmatprep.subr.mxu0 0.0
        %853 = vmatpush2.msra.mxu0 0.0
        %854 = vmatprep.subr.mxu0 0.0
        %855 = vmatpush2.msra.mxu0 0.0
        %856 = vmatprep.subr.mxu0 0.0
        %857 = vmatpush2.msra.mxu0 0.0
        %858 = vmatprep.subr.mxu0 0.0
        %859 = vmatpush2.msra.mxu0 0.0
        %860 = vmatprep.subr.mxu0 0.0
        %861 = vmatpush2.msra.mxu0 0.0
        %862 = vmatprep.subr.mxu0 0.0
        %863 = vmatpush2.msra.mxu0 0.0
        %864 = vmatprep.subr.mxu0 0.0
        %865 = vmatpush2.msra.mxu0 0.0
        %866 = vmatprep.subr.mxu0 0.0
        %867 = vmatpush2.msra.mxu0 0.0
        %868 = vmatprep.subr.mxu0 0.0
        %869 = vmatpush2.msra.mxu0 0.0
        %870 = vmatprep.subr.mxu0 0.0
        %871 = vmatpush2.msra.mxu0 0.0
        %872 = vmatprep.subr.mxu0 0.0
        %873 = vmatpush2.msra.mxu0 0.0
        %874 = vmatprep.subr.mxu0 0.0
        %875 = vmatpush2.msra.mxu0 0.0
        %876 = vmatprep.mubr.f32.mxu0 0.0
        %877 = vmatmul.mubr.f32.gmra.mxu0 %v600
        %v878 = vpop.f32.mrf.mxu0
        %v879 = vadd.f32 %v553, %v878
        %v880 = vpop.f32.mrf.mxu0
        %881 = vdwg.mxu0
        %882 = vmatprep.subr.mxu0 0.0
        %883 = vmatpush1.msra.mxu0 0.0
        %884 = vmatprep.subr.mxu0 0.0
        %885 = vmatpush1.msra.mxu0 0.0
        %886 = vmatprep.subr.mxu0 0.0
        %887 = vmatpush1.msra.mxu0 0.0
        %888 = vmatprep.subr.mxu0 0.0
        %889 = vmatpush1.msra.mxu0 0.0
        %890 = vmatprep.subr.mxu0 0.0
        %891 = vmatpush1.msra.mxu0 0.0
        %892 = vmatprep.subr.mxu0 0.0
        %893 = vmatpush1.msra.mxu0 0.0
        %894 = vmatprep.subr.mxu0 0.0
        %895 = vmatpush1.msra.mxu0 0.0
        %896 = vmatprep.subr.mxu0 0.0
        %897 = vmatpush1.msra.mxu0 0.0
        %898 = vmatprep.subr.mxu0 0.0
        %899 = vmatpush1.msra.mxu0 0.0
        %900 = vmatprep.subr.mxu0 0.0
        %901 = vmatpush1.msra.mxu0 0.0
        %902 = vmatprep.subr.mxu0 0.0
        %903 = vmatpush1.msra.mxu0 0.0
        %904 = vmatprep.subr.mxu0 0.0
        %905 = vmatpush1.msra.mxu0 0.0
        %906 = vmatprep.subr.mxu0 0.0
        %907 = vmatpush1.msra.mxu0 %v485
        %908 = vmatprep.subr.mxu0 0.0
        %909 = vmatpush1.msra.mxu0 %v484
        %910 = vmatprep.subr.mxu0 0.0
        %911 = vmatpush1.msra.mxu0 %v483
        %912 = vmatprep.subr.mxu0 0.0
        %913 = vmatpush1.msra.mxu0 %v482
        %914 = vmatprep.subr.mxu0 0.0
        %915 = vmatpush2.msra.mxu0 0.0
        %916 = vmatprep.subr.mxu0 0.0
        %917 = vmatpush2.msra.mxu0 0.0
        %918 = vmatprep.subr.mxu0 0.0
        %919 = vmatpush2.msra.mxu0 0.0
        %920 = vmatprep.subr.mxu0 0.0
        %921 = vmatpush2.msra.mxu0 0.0
        %922 = vmatprep.subr.mxu0 0.0
        %923 = vmatpush2.msra.mxu0 0.0
        %924 = vmatprep.subr.mxu0 0.0
        %925 = vmatpush2.msra.mxu0 0.0
        %926 = vmatprep.subr.mxu0 0.0
        %927 = vmatpush2.msra.mxu0 0.0
        %928 = vmatprep.subr.mxu0 0.0
        %929 = vmatpush2.msra.mxu0 0.0
        %930 = vmatprep.subr.mxu0 0.0
        %931 = vmatpush2.msra.mxu0 0.0
        %932 = vmatprep.subr.mxu0 0.0
        %933 = vmatpush2.msra.mxu0 0.0
        %934 = vmatprep.subr.mxu0 0.0
        %935 = vmatpush2.msra.mxu0 0.0
        %936 = vmatprep.subr.mxu0 0.0
        %937 = vmatpush2.msra.mxu0 0.0
        %938 = vmatprep.subr.mxu0 0.0
        %939 = vmatpush2.msra.mxu0 0.0
        %940 = vmatprep.subr.mxu0 0.0
        %941 = vmatpush2.msra.mxu0 0.0
        %942 = vmatprep.subr.mxu0 0.0
        %943 = vmatpush2.msra.mxu0 0.0
        %944 = vmatprep.subr.mxu0 0.0
        %945 = vmatpush2.msra.mxu0 0.0
        %946 = vmatprep.mubr.f32.mxu0 0.0
        %947 = vmatmul.mubr.f32.gmra.mxu0 %v600
        %v948 = vpop.f32.mrf.mxu0
        %v949 = vadd.f32 %v557, %v948
        %v950 = vpop.f32.mrf.mxu0
        %951 = vdwg.mxu0
        %952 = vmatprep.subr.mxu0 0.0
        %953 = vmatpush1.msra.mxu0 0.0
        %954 = vmatprep.subr.mxu0 0.0
        %955 = vmatpush1.msra.mxu0 0.0
        %956 = vmatprep.subr.mxu0 0.0
        %957 = vmatpush1.msra.mxu0 0.0
        %958 = vmatprep.subr.mxu0 0.0
        %959 = vmatpush1.msra.mxu0 0.0
        %960 = vmatprep.subr.mxu0 0.0
        %961 = vmatpush1.msra.mxu0 0.0
        %962 = vmatprep.subr.mxu0 0.0
        %963 = vmatpush1.msra.mxu0 0.0
        %964 = vmatprep.subr.mxu0 0.0
        %965 = vmatpush1.msra.mxu0 0.0
        %966 = vmatprep.subr.mxu0 0.0
        %967 = vmatpush1.msra.mxu0 0.0
        %968 = vmatprep.subr.mxu0 0.0
        %969 = vmatpush1.msra.mxu0 0.0
        %970 = vmatprep.subr.mxu0 0.0
        %971 = vmatpush1.msra.mxu0 0.0
        %972 = vmatprep.subr.mxu0 0.0
        %973 = vmatpush1.msra.mxu0 0.0
        %974 = vmatprep.subr.mxu0 0.0
        %975 = vmatpush1.msra.mxu0 0.0
        %976 = vmatprep.subr.mxu0 0.0
        %977 = vmatpush1.msra.mxu0 %v489
        %978 = vmatprep.subr.mxu0 0.0
        %979 = vmatpush1.msra.mxu0 %v488
        %980 = vmatprep.subr.mxu0 0.0
        %981 = vmatpush1.msra.mxu0 %v487
        %982 = vmatprep.subr.mxu0 0.0
        %983 = vmatpush1.msra.mxu0 %v486
        %984 = vmatprep.subr.mxu0 0.0
        %985 = vmatpush2.msra.mxu0 0.0
        %986 = vmatprep.subr.mxu0 0.0
        %987 = vmatpush2.msra.mxu0 0.0
        %988 = vmatprep.subr.mxu0 0.0
        %989 = vmatpush2.msra.mxu0 0.0
        %990 = vmatprep.subr.mxu0 0.0
        %991 = vmatpush2.msra.mxu0 0.0
        %992 = vmatprep.subr.mxu0 0.0
        %993 = vmatpush2.msra.mxu0 0.0
        %994 = vmatprep.subr.mxu0 0.0
        %995 = vmatpush2.msra.mxu0 0.0
        %996 = vmatprep.subr.mxu0 0.0
        %997 = vmatpush2.msra.mxu0 0.0
        %998 = vmatprep.subr.mxu0 0.0
        %999 = vmatpush2.msra.mxu0 0.0
        %1000 = vmatprep.subr.mxu0 0.0
        %1001 = vmatpush2.msra.mxu0 0.0
        %1002 = vmatprep.subr.mxu0 0.0
        %1003 = vmatpush2.msra.mxu0 0.0
        %1004 = vmatprep.subr.mxu0 0.0
        %1005 = vmatpush2.msra.mxu0 0.0
        %1006 = vmatprep.subr.mxu0 0.0
        %1007 = vmatpush2.msra.mxu0 0.0
        %1008 = vmatprep.subr.mxu0 0.0
        %1009 = vmatpush2.msra.mxu0 0.0
        %1010 = vmatprep.subr.mxu0 0.0
        %1011 = vmatpush2.msra.mxu0 0.0
        %1012 = vmatprep.subr.mxu0 0.0
        %1013 = vmatpush2.msra.mxu0 0.0
        %1014 = vmatprep.subr.mxu0 0.0
        %1015 = vmatpush2.msra.mxu0 0.0
        %1016 = vmatprep.mubr.f32.mxu0 0.0
        %1017 = vmatmul.mubr.f32.gmra.mxu0 %v600
        %v1018 = vpop.f32.mrf.mxu0
        %v1019 = vadd.f32 %v561, %v1018
        %v1020 = vpop.f32.mrf.mxu0
        %1021 = vdwg.mxu0
        %1022 = vmatprep.subr.mxu0 0.0
        %1023 = vmatpush1.msra.mxu0 0.0
        %1024 = vmatprep.subr.mxu0 0.0
        %1025 = vmatpush1.msra.mxu0 0.0
        %1026 = vmatprep.subr.mxu0 0.0
        %1027 = vmatpush1.msra.mxu0 0.0
        %1028 = vmatprep.subr.mxu0 0.0
        %1029 = vmatpush1.msra.mxu0 0.0
        %1030 = vmatprep.subr.mxu0 0.0
        %1031 = vmatpush1.msra.mxu0 0.0
        %1032 = vmatprep.subr.mxu0 0.0
        %1033 = vmatpush1.msra.mxu0 0.0
        %1034 = vmatprep.subr.mxu0 0.0
        %1035 = vmatpush1.msra.mxu0 0.0
        %1036 = vmatprep.subr.mxu0 0.0
        %1037 = vmatpush1.msra.mxu0 0.0
        %1038 = vmatprep.subr.mxu0 0.0
        %1039 = vmatpush1.msra.mxu0 0.0
        %1040 = vmatprep.subr.mxu0 0.0
        %1041 = vmatpush1.msra.mxu0 0.0
        %1042 = vmatprep.subr.mxu0 0.0
        %1043 = vmatpush1.msra.mxu0 0.0
        %1044 = vmatprep.subr.mxu0 0.0
        %1045 = vmatpush1.msra.mxu0 0.0
        %1046 = vmatprep.subr.mxu0 0.0
        %1047 = vmatpush1.msra.mxu0 %v493
        %1048 = vmatprep.subr.mxu0 0.0
        %1049 = vmatpush1.msra.mxu0 %v492
        %1050 = vmatprep.subr.mxu0 0.0
        %1051 = vmatpush1.msra.mxu0 %v491
        %1052 = vmatprep.subr.mxu0 0.0
        %1053 = vmatpush1.msra.mxu0 %v490
        %1054 = vmatprep.subr.mxu0 0.0
        %1055 = vmatpush2.msra.mxu0 0.0
        %1056 = vmatprep.subr.mxu0 0.0
        %1057 = vmatpush2.msra.mxu0 0.0
        %1058 = vmatprep.subr.mxu0 0.0
        %1059 = vmatpush2.msra.mxu0 0.0
        %1060 = vmatprep.subr.mxu0 0.0
        %1061 = vmatpush2.msra.mxu0 0.0
        %1062 = vmatprep.subr.mxu0 0.0
        %1063 = vmatpush2.msra.mxu0 0.0
        %1064 = vmatprep.subr.mxu0 0.0
        %1065 = vmatpush2.msra.mxu0 0.0
        %1066 = vmatprep.subr.mxu0 0.0
        %1067 = vmatpush2.msra.mxu0 0.0
        %1068 = vmatprep.subr.mxu0 0.0
        %1069 = vmatpush2.msra.mxu0 0.0
        %1070 = vmatprep.subr.mxu0 0.0
        %1071 = vmatpush2.msra.mxu0 0.0
        %1072 = vmatprep.subr.mxu0 0.0
        %1073 = vmatpush2.msra.mxu0 0.0
        %1074 = vmatprep.subr.mxu0 0.0
        %1075 = vmatpush2.msra.mxu0 0.0
        %1076 = vmatprep.subr.mxu0 0.0
        %1077 = vmatpush2.msra.mxu0 0.0
        %1078 = vmatprep.subr.mxu0 0.0
        %1079 = vmatpush2.msra.mxu0 0.0
        %1080 = vmatprep.subr.mxu0 0.0
        %1081 = vmatpush2.msra.mxu0 0.0
        %1082 = vmatprep.subr.mxu0 0.0
        %1083 = vmatpush2.msra.mxu0 0.0
        %1084 = vmatprep.subr.mxu0 0.0
        %1085 = vmatpush2.msra.mxu0 0.0
        %1086 = vmatprep.mubr.f32.mxu0 0.0
        %1087 = vmatmul.mubr.f32.gmra.mxu0 %v600
        %v1088 = vpop.f32.mrf.mxu0
        %v1089 = vadd.f32 %v565, %v1088
        %v1090 = vpop.f32.mrf.mxu0
        %1091 = vdwg.mxu0
        %1092 = vmatprep.subr.mxu0 0.0
        %1093 = vmatpush1.msra.mxu0 0.0
        %1094 = vmatprep.subr.mxu0 0.0
        %1095 = vmatpush1.msra.mxu0 0.0
        %1096 = vmatprep.subr.mxu0 0.0
        %1097 = vmatpush1.msra.mxu0 0.0
        %1098 = vmatprep.subr.mxu0 0.0
        %1099 = vmatpush1.msra.mxu0 0.0
        %1100 = vmatprep.subr.mxu0 0.0
        %1101 = vmatpush1.msra.mxu0 0.0
        %1102 = vmatprep.subr.mxu0 0.0
        %1103 = vmatpush1.msra.mxu0 0.0
        %1104 = vmatprep.subr.mxu0 0.0
        %1105 = vmatpush1.msra.mxu0 0.0
        %1106 = vmatprep.subr.mxu0 0.0
        %1107 = vmatpush1.msra.mxu0 0.0
        %1108 = vmatprep.subr.mxu0 0.0
        %1109 = vmatpush1.msra.mxu0 0.0
        %1110 = vmatprep.subr.mxu0 0.0
        %1111 = vmatpush1.msra.mxu0 0.0
        %1112 = vmatprep.subr.mxu0 0.0
        %1113 = vmatpush1.msra.mxu0 0.0
        %1114 = vmatprep.subr.mxu0 0.0
        %1115 = vmatpush1.msra.mxu0 0.0
        %1116 = vmatprep.subr.mxu0 0.0
        %1117 = vmatpush1.msra.mxu0 %v497
        %1118 = vmatprep.subr.mxu0 0.0
        %1119 = vmatpush1.msra.mxu0 %v496
        %1120 = vmatprep.subr.mxu0 0.0
        %1121 = vmatpush1.msra.mxu0 %v495
        %1122 = vmatprep.subr.mxu0 0.0
        %1123 = vmatpush1.msra.mxu0 %v494
        %1124 = vmatprep.subr.mxu0 0.0
        %1125 = vmatpush2.msra.mxu0 0.0
        %1126 = vmatprep.subr.mxu0 0.0
        %1127 = vmatpush2.msra.mxu0 0.0
        %1128 = vmatprep.subr.mxu0 0.0
        %1129 = vmatpush2.msra.mxu0 0.0
        %1130 = vmatprep.subr.mxu0 0.0
        %1131 = vmatpush2.msra.mxu0 0.0
        %1132 = vmatprep.subr.mxu0 0.0
        %1133 = vmatpush2.msra.mxu0 0.0
        %1134 = vmatprep.subr.mxu0 0.0
        %1135 = vmatpush2.msra.mxu0 0.0
        %1136 = vmatprep.subr.mxu0 0.0
        %1137 = vmatpush2.msra.mxu0 0.0
        %1138 = vmatprep.subr.mxu0 0.0
        %1139 = vmatpush2.msra.mxu0 0.0
        %1140 = vmatprep.subr.mxu0 0.0
        %1141 = vmatpush2.msra.mxu0 0.0
        %1142 = vmatprep.subr.mxu0 0.0
        %1143 = vmatpush2.msra.mxu0 0.0
        %1144 = vmatprep.subr.mxu0 0.0
        %1145 = vmatpush2.msra.mxu0 0.0
        %1146 = vmatprep.subr.mxu0 0.0
        %1147 = vmatpush2.msra.mxu0 0.0
        %1148 = vmatprep.subr.mxu0 0.0
        %1149 = vmatpush2.msra.mxu0 0.0
        %1150 = vmatprep.subr.mxu0 0.0
        %1151 = vmatpush2.msra.mxu0 0.0
        %1152 = vmatprep.subr.mxu0 0.0
        %1153 = vmatpush2.msra.mxu0 0.0
        %1154 = vmatprep.subr.mxu0 0.0
        %1155 = vmatpush2.msra.mxu0 0.0
        %1156 = vmatprep.mubr.f32.mxu0 0.0
        %1157 = vmatmul.mubr.f32.gmra.mxu0 %v600
        %v1158 = vpop.f32.mrf.mxu0
        %v1159 = vadd.f32 %v569, %v1158
        %v1160 = vpop.f32.mrf.mxu0
        %1161 = vdwg.mxu0
        %1162 = vmatprep.subr.mxu0 0.0
        %1163 = vmatpush1.msra.mxu0 0.0
        %1164 = vmatprep.subr.mxu0 0.0
        %1165 = vmatpush1.msra.mxu0 0.0
        %1166 = vmatprep.subr.mxu0 0.0
        %1167 = vmatpush1.msra.mxu0 0.0
        %1168 = vmatprep.subr.mxu0 0.0
        %1169 = vmatpush1.msra.mxu0 0.0
        %1170 = vmatprep.subr.mxu0 0.0
        %1171 = vmatpush1.msra.mxu0 0.0
        %1172 = vmatprep.subr.mxu0 0.0
        %1173 = vmatpush1.msra.mxu0 0.0
        %1174 = vmatprep.subr.mxu0 0.0
        %1175 = vmatpush1.msra.mxu0 0.0
        %1176 = vmatprep.subr.mxu0 0.0
        %1177 = vmatpush1.msra.mxu0 0.0
        %1178 = vmatprep.subr.mxu0 0.0
        %1179 = vmatpush1.msra.mxu0 0.0
        %1180 = vmatprep.subr.mxu0 0.0
        %1181 = vmatpush1.msra.mxu0 0.0
        %1182 = vmatprep.subr.mxu0 0.0
        %1183 = vmatpush1.msra.mxu0 0.0
        %1184 = vmatprep.subr.mxu0 0.0
        %1185 = vmatpush1.msra.mxu0 0.0
        %1186 = vmatprep.subr.mxu0 0.0
        %1187 = vmatpush1.msra.mxu0 %v501
        %1188 = vmatprep.subr.mxu0 0.0
        %1189 = vmatpush1.msra.mxu0 %v500
        %1190 = vmatprep.subr.mxu0 0.0
        %1191 = vmatpush1.msra.mxu0 %v499
        %1192 = vmatprep.subr.mxu0 0.0
        %1193 = vmatpush1.msra.mxu0 %v498
        %1194 = vmatprep.subr.mxu0 0.0
        %1195 = vmatpush2.msra.mxu0 0.0
        %1196 = vmatprep.subr.mxu0 0.0
        %1197 = vmatpush2.msra.mxu0 0.0
        %1198 = vmatprep.subr.mxu0 0.0
        %1199 = vmatpush2.msra.mxu0 0.0
        %1200 = vmatprep.subr.mxu0 0.0
        %1201 = vmatpush2.msra.mxu0 0.0
        %1202 = vmatprep.subr.mxu0 0.0
        %1203 = vmatpush2.msra.mxu0 0.0
        %1204 = vmatprep.subr.mxu0 0.0
        %1205 = vmatpush2.msra.mxu0 0.0
        %1206 = vmatprep.subr.mxu0 0.0
        %1207 = vmatpush2.msra.mxu0 0.0
        %1208 = vmatprep.subr.mxu0 0.0
        %1209 = vmatpush2.msra.mxu0 0.0
        %1210 = vmatprep.subr.mxu0 0.0
        %1211 = vmatpush2.msra.mxu0 0.0
        %1212 = vmatprep.subr.mxu0 0.0
        %1213 = vmatpush2.msra.mxu0 0.0
        %1214 = vmatprep.subr.mxu0 0.0
        %1215 = vmatpush2.msra.mxu0 0.0
        %1216 = vmatprep.subr.mxu0 0.0
        %1217 = vmatpush2.msra.mxu0 0.0
        %1218 = vmatprep.subr.mxu0 0.0
        %1219 = vmatpush2.msra.mxu0 0.0
        %1220 = vmatprep.subr.mxu0 0.0
        %1221 = vmatpush2.msra.mxu0 0.0
        %1222 = vmatprep.subr.mxu0 0.0
        %1223 = vmatpush2.msra.mxu0 0.0
        %1224 = vmatprep.subr.mxu0 0.0
        %1225 = vmatpush2.msra.mxu0 0.0
        %1226 = vmatprep.mubr.f32.mxu0 0.0
        %1227 = vmatmul.mubr.f32.gmra.mxu0 %v600
        %v1228 = vpop.f32.mrf.mxu0
        %v1229 = vadd.f32 %v573, %v1228
        %v1230 = vpop.f32.mrf.mxu0
        %1231 = vdwg.mxu0
        %1232 = vmatprep.subr.mxu0 0.0
        %1233 = vmatpush1.msra.mxu0 0.0
        %1234 = vmatprep.subr.mxu0 0.0
        %1235 = vmatpush1.msra.mxu0 0.0
        %1236 = vmatprep.subr.mxu0 0.0
        %1237 = vmatpush1.msra.mxu0 0.0
        %1238 = vmatprep.subr.mxu0 0.0
        %1239 = vmatpush1.msra.mxu0 0.0
        %1240 = vmatprep.subr.mxu0 0.0
        %1241 = vmatpush1.msra.mxu0 0.0
        %1242 = vmatprep.subr.mxu0 0.0
        %1243 = vmatpush1.msra.mxu0 0.0
        %1244 = vmatprep.subr.mxu0 0.0
        %1245 = vmatpush1.msra.mxu0 0.0
        %1246 = vmatprep.subr.mxu0 0.0
        %1247 = vmatpush1.msra.mxu0 0.0
        %1248 = vmatprep.subr.mxu0 0.0
        %1249 = vmatpush1.msra.mxu0 0.0
        %1250 = vmatprep.subr.mxu0 0.0
        %1251 = vmatpush1.msra.mxu0 0.0
        %1252 = vmatprep.subr.mxu0 0.0
        %1253 = vmatpush1.msra.mxu0 0.0
        %1254 = vmatprep.subr.mxu0 0.0
        %1255 = vmatpush1.msra.mxu0 0.0
        %1256 = vmatprep.subr.mxu0 0.0
        %1257 = vmatpush1.msra.mxu0 %v505
        %1258 = vmatprep.subr.mxu0 0.0
        %1259 = vmatpush1.msra.mxu0 %v504
        %1260 = vmatprep.subr.mxu0 0.0
        %1261 = vmatpush1.msra.mxu0 %v503
        %1262 = vmatprep.subr.mxu0 0.0
        %1263 = vmatpush1.msra.mxu0 %v502
        %1264 = vmatprep.subr.mxu0 0.0
        %1265 = vmatpush2.msra.mxu0 0.0
        %1266 = vmatprep.subr.mxu0 0.0
        %1267 = vmatpush2.msra.mxu0 0.0
        %1268 = vmatprep.subr.mxu0 0.0
        %1269 = vmatpush2.msra.mxu0 0.0
        %1270 = vmatprep.subr.mxu0 0.0
        %1271 = vmatpush2.msra.mxu0 0.0
        %1272 = vmatprep.subr.mxu0 0.0
        %1273 = vmatpush2.msra.mxu0 0.0
        %1274 = vmatprep.subr.mxu0 0.0
        %1275 = vmatpush2.msra.mxu0 0.0
        %1276 = vmatprep.subr.mxu0 0.0
        %1277 = vmatpush2.msra.mxu0 0.0
        %1278 = vmatprep.subr.mxu0 0.0
        %1279 = vmatpush2.msra.mxu0 0.0
        %1280 = vmatprep.subr.mxu0 0.0
        %1281 = vmatpush2.msra.mxu0 0.0
        %1282 = vmatprep.subr.mxu0 0.0
        %1283 = vmatpush2.msra.mxu0 0.0
        %1284 = vmatprep.subr.mxu0 0.0
        %1285 = vmatpush2.msra.mxu0 0.0
        %1286 = vmatprep.subr.mxu0 0.0
        %1287 = vmatpush2.msra.mxu0 0.0
        %1288 = vmatprep.subr.mxu0 0.0
        %1289 = vmatpush2.msra.mxu0 0.0
        %1290 = vmatprep.subr.mxu0 0.0
        %1291 = vmatpush2.msra.mxu0 0.0
        %1292 = vmatprep.subr.mxu0 0.0
        %1293 = vmatpush2.msra.mxu0 0.0
        %1294 = vmatprep.subr.mxu0 0.0
        %1295 = vmatpush2.msra.mxu0 0.0
        %1296 = vmatprep.mubr.f32.mxu0 0.0
        %1297 = vmatmul.mubr.f32.gmra.mxu0 %v600
        %v1298 = vpop.f32.mrf.mxu0
        %v1299 = vadd.f32 %v577, %v1298
        %v1300 = vpop.f32.mrf.mxu0
        %1301 = vdwg.mxu0
        %1302 = vmatprep.subr.mxu0 0.0
        %1303 = vmatpush1.msra.mxu0 0.0
        %1304 = vmatprep.subr.mxu0 0.0
        %1305 = vmatpush1.msra.mxu0 0.0
        %1306 = vmatprep.subr.mxu0 0.0
        %1307 = vmatpush1.msra.mxu0 0.0
        %1308 = vmatprep.subr.mxu0 0.0
        %1309 = vmatpush1.msra.mxu0 0.0
        %1310 = vmatprep.subr.mxu0 0.0
        %1311 = vmatpush1.msra.mxu0 0.0
        %1312 = vmatprep.subr.mxu0 0.0
        %1313 = vmatpush1.msra.mxu0 0.0
        %1314 = vmatprep.subr.mxu0 0.0
        %1315 = vmatpush1.msra.mxu0 0.0
        %1316 = vmatprep.subr.mxu0 0.0
        %1317 = vmatpush1.msra.mxu0 0.0
        %1318 = vmatprep.subr.mxu0 0.0
        %1319 = vmatpush1.msra.mxu0 0.0
        %1320 = vmatprep.subr.mxu0 0.0
        %1321 = vmatpush1.msra.mxu0 0.0
        %1322 = vmatprep.subr.mxu0 0.0
        %1323 = vmatpush1.msra.mxu0 0.0
        %1324 = vmatprep.subr.mxu0 0.0
        %1325 = vmatpush1.msra.mxu0 0.0
        %1326 = vmatprep.subr.mxu0 0.0
        %1327 = vmatpush1.msra.mxu0 %v509
        %1328 = vmatprep.subr.mxu0 0.0
        %1329 = vmatpush1.msra.mxu0 %v508
        %1330 = vmatprep.subr.mxu0 0.0
        %1331 = vmatpush1.msra.mxu0 %v507
        %1332 = vmatprep.subr.mxu0 0.0
        %1333 = vmatpush1.msra.mxu0 %v506
        %1334 = vmatprep.subr.mxu0 0.0
        %1335 = vmatpush2.msra.mxu0 0.0
        %1336 = vmatprep.subr.mxu0 0.0
        %1337 = vmatpush2.msra.mxu0 0.0
        %1338 = vmatprep.subr.mxu0 0.0
        %1339 = vmatpush2.msra.mxu0 0.0
        %1340 = vmatprep.subr.mxu0 0.0
        %1341 = vmatpush2.msra.mxu0 0.0
        %1342 = vmatprep.subr.mxu0 0.0
        %1343 = vmatpush2.msra.mxu0 0.0
        %1344 = vmatprep.subr.mxu0 0.0
        %1345 = vmatpush2.msra.mxu0 0.0
        %1346 = vmatprep.subr.mxu0 0.0
        %1347 = vmatpush2.msra.mxu0 0.0
        %1348 = vmatprep.subr.mxu0 0.0
        %1349 = vmatpush2.msra.mxu0 0.0
        %1350 = vmatprep.subr.mxu0 0.0
        %1351 = vmatpush2.msra.mxu0 0.0
        %1352 = vmatprep.subr.mxu0 0.0
        %1353 = vmatpush2.msra.mxu0 0.0
        %1354 = vmatprep.subr.mxu0 0.0
        %1355 = vmatpush2.msra.mxu0 0.0
        %1356 = vmatprep.subr.mxu0 0.0
        %1357 = vmatpush2.msra.mxu0 0.0
        %1358 = vmatprep.subr.mxu0 0.0
        %1359 = vmatpush2.msra.mxu0 0.0
        %1360 = vmatprep.subr.mxu0 0.0
        %1361 = vmatpush2.msra.mxu0 0.0
        %1362 = vmatprep.subr.mxu0 0.0
        %1363 = vmatpush2.msra.mxu0 0.0
        %1364 = vmatprep.subr.mxu0 0.0
        %1365 = vmatpush2.msra.mxu0 0.0
        %1366 = vmatprep.mubr.f32.mxu0 0.0
        %1367 = vmatmul.mubr.f32.gmra.mxu0 %v600
        %v1368 = vpop.f32.mrf.mxu0
        %v1369 = vadd.f32 %v581, %v1368
        %v1370 = vpop.f32.mrf.mxu0
        %1371 = vdwg.mxu0
        %1372 = vmatprep.subr.mxu0 0.0
        %1373 = vmatpush1.msra.mxu0 0.0
        %1374 = vmatprep.subr.mxu0 0.0
        %1375 = vmatpush1.msra.mxu0 0.0
        %1376 = vmatprep.subr.mxu0 0.0
        %1377 = vmatpush1.msra.mxu0 0.0
        %1378 = vmatprep.subr.mxu0 0.0
        %1379 = vmatpush1.msra.mxu0 0.0
        %1380 = vmatprep.subr.mxu0 0.0
        %1381 = vmatpush1.msra.mxu0 0.0
        %1382 = vmatprep.subr.mxu0 0.0
        %1383 = vmatpush1.msra.mxu0 0.0
        %1384 = vmatprep.subr.mxu0 0.0
        %1385 = vmatpush1.msra.mxu0 0.0
        %1386 = vmatprep.subr.mxu0 0.0
        %1387 = vmatpush1.msra.mxu0 0.0
        %1388 = vmatprep.subr.mxu0 0.0
        %1389 = vmatpush1.msra.mxu0 0.0
        %1390 = vmatprep.subr.mxu0 0.0
        %1391 = vmatpush1.msra.mxu0 0.0
        %1392 = vmatprep.subr.mxu0 0.0
        %1393 = vmatpush1.msra.mxu0 0.0
        %1394 = vmatprep.subr.mxu0 0.0
        %1395 = vmatpush1.msra.mxu0 0.0
        %1396 = vmatprep.subr.mxu0 0.0
        %1397 = vmatpush1.msra.mxu0 %v513
        %1398 = vmatprep.subr.mxu0 0.0
        %1399 = vmatpush1.msra.mxu0 %v512
        %1400 = vmatprep.subr.mxu0 0.0
        %1401 = vmatpush1.msra.mxu0 %v511
        %1402 = vmatprep.subr.mxu0 0.0
        %1403 = vmatpush1.msra.mxu0 %v510
        %1404 = vmatprep.subr.mxu0 0.0
        %1405 = vmatpush2.msra.mxu0 0.0
        %1406 = vmatprep.subr.mxu0 0.0
        %1407 = vmatpush2.msra.mxu0 0.0
        %1408 = vmatprep.subr.mxu0 0.0
        %1409 = vmatpush2.msra.mxu0 0.0
        %1410 = vmatprep.subr.mxu0 0.0
        %1411 = vmatpush2.msra.mxu0 0.0
        %1412 = vmatprep.subr.mxu0 0.0
        %1413 = vmatpush2.msra.mxu0 0.0
        %1414 = vmatprep.subr.mxu0 0.0
        %1415 = vmatpush2.msra.mxu0 0.0
        %1416 = vmatprep.subr.mxu0 0.0
        %1417 = vmatpush2.msra.mxu0 0.0
        %1418 = vmatprep.subr.mxu0 0.0
        %1419 = vmatpush2.msra.mxu0 0.0
        %1420 = vmatprep.subr.mxu0 0.0
        %1421 = vmatpush2.msra.mxu0 0.0
        %1422 = vmatprep.subr.mxu0 0.0
        %1423 = vmatpush2.msra.mxu0 0.0
        %1424 = vmatprep.subr.mxu0 0.0
        %1425 = vmatpush2.msra.mxu0 0.0
        %1426 = vmatprep.subr.mxu0 0.0
        %1427 = vmatpush2.msra.mxu0 0.0
        %1428 = vmatprep.subr.mxu0 0.0
        %1429 = vmatpush2.msra.mxu0 0.0
        %1430 = vmatprep.subr.mxu0 0.0
        %1431 = vmatpush2.msra.mxu0 0.0
        %1432 = vmatprep.subr.mxu0 0.0
        %1433 = vmatpush2.msra.mxu0 0.0
        %1434 = vmatprep.subr.mxu0 0.0
        %1435 = vmatpush2.msra.mxu0 0.0
        %1436 = vmatprep.mubr.f32.mxu0 0.0
        %1437 = vmatmul.mubr.f32.gmra.mxu0 %v600
        %v1438 = vpop.f32.mrf.mxu0
        %v1439 = vadd.f32 %v585, %v1438
        %v1440 = vpop.f32.mrf.mxu0
        %1441 = vdwg.mxu0
        %vm1442 = vcmask 64512
        %v1444 = vsel %vm1442, %v669, 0
        %v1447 = vsel %vm1442, %v949, 0
        %1449 = vmatprep.subr.mxu0 0.0
        %1450 = vmatpush1.xpose.msra.mxu0 0.0
        %1451 = vmatprep.subr.mxu0 0.0
        %1452 = vmatpush1.xpose.msra.mxu0 0.0
        %1453 = vmatprep.subr.mxu0 0.0
        %1454 = vmatpush1.xpose.msra.mxu0 0.0
        %1455 = vmatprep.subr.mxu0 0.0
        %1456 = vmatpush1.xpose.msra.mxu0 0.0
        %1457 = vmatprep.subr.mxu0 0.0
        %1458 = vmatpush1.xpose.msra.mxu0 0.0
        %1459 = vmatprep.subr.mxu0 0.0
        %1460 = vmatpush1.xpose.msra.mxu0 0.0
        %1461 = vmatprep.subr.mxu0 0.0
        %1462 = vmatpush1.xpose.msra.mxu0 0.0
        %1463 = vmatprep.subr.mxu0 0.0
        %1464 = vmatpush1.xpose.msra.mxu0 0.0
        %1465 = vmatprep.subr.mxu0 0.0
        %1466 = vmatpush1.xpose.msra.mxu0 0.0
        %1467 = vmatprep.subr.mxu0 0.0
        %1468 = vmatpush1.xpose.msra.mxu0 0.0
        %1469 = vmatprep.subr.mxu0 0.0
        %1470 = vmatpush1.xpose.msra.mxu0 0.0
        %1471 = vmatprep.subr.mxu0 0.0
        %1472 = vmatpush1.xpose.msra.mxu0 0.0
        %1473 = vmatprep.subr.mxu0 0.0
        %1474 = vmatpush1.xpose.msra.mxu0 0.0
        %1475 = vmatprep.subr.mxu0 0.0
        %1476 = vmatpush1.xpose.msra.mxu0 0.0
        %1477 = vmatprep.subr.mxu0 0.0
        %1478 = vmatpush1.xpose.msra.mxu0 0.0
        %1479 = vmatprep.subr.mxu0 0.0
        %1480 = vmatpush1.xpose.msra.mxu0 %v1447
        %1481 = vmatprep.subr.mxu0 0.0
        %1482 = vmatpush2.xpose.msra.mxu0 0.0
        %1483 = vmatprep.subr.mxu0 0.0
        %1484 = vmatpush2.xpose.msra.mxu0 0.0
        %1485 = vmatprep.subr.mxu0 0.0
        %1486 = vmatpush2.xpose.msra.mxu0 0.0
        %1487 = vmatprep.subr.mxu0 0.0
        %1488 = vmatpush2.xpose.msra.mxu0 0.0
        %1489 = vmatprep.subr.mxu0 0.0
        %1490 = vmatpush2.xpose.msra.mxu0 0.0
        %1491 = vmatprep.subr.mxu0 0.0
        %1492 = vmatpush2.xpose.msra.mxu0 0.0
        %1493 = vmatprep.subr.mxu0 0.0
        %1494 = vmatpush2.xpose.msra.mxu0 0.0
        %1495 = vmatprep.subr.mxu0 0.0
        %1496 = vmatpush2.xpose.msra.mxu0 0.0
        %1497 = vmatprep.subr.mxu0 0.0
        %1498 = vmatpush2.xpose.msra.mxu0 0.0
        %1499 = vmatprep.subr.mxu0 0.0
        %1500 = vmatpush2.xpose.msra.mxu0 0.0
        %1501 = vmatprep.subr.mxu0 0.0
        %1502 = vmatpush2.xpose.msra.mxu0 0.0
        %1503 = vmatprep.subr.mxu0 0.0
        %1504 = vmatpush2.xpose.msra.mxu0 0.0
        %1505 = vmatprep.subr.mxu0 0.0
        %1506 = vmatpush2.xpose.msra.mxu0 0.0
        %1507 = vmatprep.subr.mxu0 0.0
        %1508 = vmatpush2.xpose.msra.mxu0 0.0
        %1509 = vmatprep.subr.mxu0 0.0
        %1510 = vmatpush2.xpose.msra.mxu0 0.0
        %1511 = vmatprep.subr.mxu0 0.0
        %1512 = vmatpush2.xpose.msra.mxu0 0.0
        %1513 = vmatprep.mubr.f32.mxu0 0.0
        %1514 = vmatmul.mubr.f32.gmra.mxu0 %v1444
        %v1515 = vpop.f32.mrf.mxu0
        %v1516 = vadd.f32 0.0, %v1515
        %v1517 = vpop.f32.mrf.mxu0
        %1518 = vdwg.mxu0
        %v1520 = vsel %vm1442, %v739, 0
        %v1523 = vsel %vm1442, %v1019, 0
        %1525 = vmatprep.subr.mxu0 0.0
        %1526 = vmatpush1.xpose.msra.mxu0 0.0
        %1527 = vmatprep.subr.mxu0 0.0
        %1528 = vmatpush1.xpose.msra.mxu0 0.0
        %1529 = vmatprep.subr.mxu0 0.0
        %1530 = vmatpush1.xpose.msra.mxu0 0.0
        %1531 = vmatprep.subr.mxu0 0.0
        %1532 = vmatpush1.xpose.msra.mxu0 0.0
        %1533 = vmatprep.subr.mxu0 0.0
        %1534 = vmatpush1.xpose.msra.mxu0 0.0
        %1535 = vmatprep.subr.mxu0 0.0
        %1536 = vmatpush1.xpose.msra.mxu0 0.0
        %1537 = vmatprep.subr.mxu0 0.0
        %1538 = vmatpush1.xpose.msra.mxu0 0.0
        %1539 = vmatprep.subr.mxu0 0.0
        %1540 = vmatpush1.xpose.msra.mxu0 0.0
        %1541 = vmatprep.subr.mxu0 0.0
        %1542 = vmatpush1.xpose.msra.mxu0 0.0
        %1543 = vmatprep.subr.mxu0 0.0
        %1544 = vmatpush1.xpose.msra.mxu0 0.0
        %1545 = vmatprep.subr.mxu0 0.0
        %1546 = vmatpush1.xpose.msra.mxu0 0.0
        %1547 = vmatprep.subr.mxu0 0.0
        %1548 = vmatpush1.xpose.msra.mxu0 0.0
        %1549 = vmatprep.subr.mxu0 0.0
        %1550 = vmatpush1.xpose.msra.mxu0 0.0
        %1551 = vmatprep.subr.mxu0 0.0
        %1552 = vmatpush1.xpose.msra.mxu0 0.0
        %1553 = vmatprep.subr.mxu0 0.0
        %1554 = vmatpush1.xpose.msra.mxu0 0.0
        %1555 = vmatprep.subr.mxu0 0.0
        %1556 = vmatpush1.xpose.msra.mxu0 %v1523
        %1557 = vmatprep.subr.mxu0 0.0
        %1558 = vmatpush2.xpose.msra.mxu0 0.0
        %1559 = vmatprep.subr.mxu0 0.0
        %1560 = vmatpush2.xpose.msra.mxu0 0.0
        %1561 = vmatprep.subr.mxu0 0.0
        %1562 = vmatpush2.xpose.msra.mxu0 0.0
        %1563 = vmatprep.subr.mxu0 0.0
        %1564 = vmatpush2.xpose.msra.mxu0 0.0
        %1565 = vmatprep.subr.mxu0 0.0
        %1566 = vmatpush2.xpose.msra.mxu0 0.0
        %1567 = vmatprep.subr.mxu0 0.0
        %1568 = vmatpush2.xpose.msra.mxu0 0.0
        %1569 = vmatprep.subr.mxu0 0.0
        %1570 = vmatpush2.xpose.msra.mxu0 0.0
        %1571 = vmatprep.subr.mxu0 0.0
        %1572 = vmatpush2.xpose.msra.mxu0 0.0
        %1573 = vmatprep.subr.mxu0 0.0
        %1574 = vmatpush2.xpose.msra.mxu0 0.0
        %1575 = vmatprep.subr.mxu0 0.0
        %1576 = vmatpush2.xpose.msra.mxu0 0.0
        %1577 = vmatprep.subr.mxu0 0.0
        %1578 = vmatpush2.xpose.msra.mxu0 0.0
        %1579 = vmatprep.subr.mxu0 0.0
        %1580 = vmatpush2.xpose.msra.mxu0 0.0
        %1581 = vmatprep.subr.mxu0 0.0
        %1582 = vmatpush2.xpose.msra.mxu0 0.0
        %1583 = vmatprep.subr.mxu0 0.0
        %1584 = vmatpush2.xpose.msra.mxu0 0.0
        %1585 = vmatprep.subr.mxu0 0.0
        %1586 = vmatpush2.xpose.msra.mxu0 0.0
        %1587 = vmatprep.subr.mxu0 0.0
        %1588 = vmatpush2.xpose.msra.mxu0 0.0
        %1589 = vmatprep.mubr.f32.mxu0 0.0
        %1590 = vmatmul.mubr.f32.gmra.mxu0 %v1520
        %v1591 = vpop.f32.mrf.mxu0
        %v1592 = vadd.f32 0.0, %v1591
        %v1593 = vpop.f32.mrf.mxu0
        %1594 = vdwg.mxu0
        %v1596 = vsel %vm1442, %v809, 0
        %v1599 = vsel %vm1442, %v1089, 0
        %1601 = vmatprep.subr.mxu0 0.0
        %1602 = vmatpush1.xpose.msra.mxu0 0.0
        %1603 = vmatprep.subr.mxu0 0.0
        %1604 = vmatpush1.xpose.msra.mxu0 0.0
        %1605 = vmatprep.subr.mxu0 0.0
        %1606 = vmatpush1.xpose.msra.mxu0 0.0
        %1607 = vmatprep.subr.mxu0 0.0
        %1608 = vmatpush1.xpose.msra.mxu0 0.0
        %1609 = vmatprep.subr.mxu0 0.0
        %1610 = vmatpush1.xpose.msra.mxu0 0.0
        %1611 = vmatprep.subr.mxu0 0.0
        %1612 = vmatpush1.xpose.msra.mxu0 0.0
        %1613 = vmatprep.subr.mxu0 0.0
        %1614 = vmatpush1.xpose.msra.mxu0 0.0
        %1615 = vmatprep.subr.mxu0 0.0
        %1616 = vmatpush1.xpose.msra.mxu0 0.0
        %1617 = vmatprep.subr.mxu0 0.0
        %1618 = vmatpush1.xpose.msra.mxu0 0.0
        %1619 = vmatprep.subr.mxu0 0.0
        %1620 = vmatpush1.xpose.msra.mxu0 0.0
        %1621 = vmatprep.subr.mxu0 0.0
        %1622 = vmatpush1.xpose.msra.mxu0 0.0
        %1623 = vmatprep.subr.mxu0 0.0
        %1624 = vmatpush1.xpose.msra.mxu0 0.0
        %1625 = vmatprep.subr.mxu0 0.0
        %1626 = vmatpush1.xpose.msra.mxu0 0.0
        %1627 = vmatprep.subr.mxu0 0.0
        %1628 = vmatpush1.xpose.msra.mxu0 0.0
        %1629 = vmatprep.subr.mxu0 0.0
        %1630 = vmatpush1.xpose.msra.mxu0 0.0
        %1631 = vmatprep.subr.mxu0 0.0
        %1632 = vmatpush1.xpose.msra.mxu0 %v1599
        %1633 = vmatprep.subr.mxu0 0.0
        %1634 = vmatpush2.xpose.msra.mxu0 0.0
        %1635 = vmatprep.subr.mxu0 0.0
        %1636 = vmatpush2.xpose.msra.mxu0 0.0
        %1637 = vmatprep.subr.mxu0 0.0
        %1638 = vmatpush2.xpose.msra.mxu0 0.0
        %1639 = vmatprep.subr.mxu0 0.0
        %1640 = vmatpush2.xpose.msra.mxu0 0.0
        %1641 = vmatprep.subr.mxu0 0.0
        %1642 = vmatpush2.xpose.msra.mxu0 0.0
        %1643 = vmatprep.subr.mxu0 0.0
        %1644 = vmatpush2.xpose.msra.mxu0 0.0
        %1645 = vmatprep.subr.mxu0 0.0
        %1646 = vmatpush2.xpose.msra.mxu0 0.0
        %1647 = vmatprep.subr.mxu0 0.0
        %1648 = vmatpush2.xpose.msra.mxu0 0.0
        %1649 = vmatprep.subr.mxu0 0.0
        %1650 = vmatpush2.xpose.msra.mxu0 0.0
        %1651 = vmatprep.subr.mxu0 0.0
        %1652 = vmatpush2.xpose.msra.mxu0 0.0
        %1653 = vmatprep.subr.mxu0 0.0
        %1654 = vmatpush2.xpose.msra.mxu0 0.0
        %1655 = vmatprep.subr.mxu0 0.0
        %1656 = vmatpush2.xpose.msra.mxu0 0.0
        %1657 = vmatprep.subr.mxu0 0.0
        %1658 = vmatpush2.xpose.msra.mxu0 0.0
        %1659 = vmatprep.subr.mxu0 0.0
        %1660 = vmatpush2.xpose.msra.mxu0 0.0
        %1661 = vmatprep.subr.mxu0 0.0
        %1662 = vmatpush2.xpose.msra.mxu0 0.0
        %1663 = vmatprep.subr.mxu0 0.0
        %1664 = vmatpush2.xpose.msra.mxu0 0.0
        %1665 = vmatprep.mubr.f32.mxu0 0.0
        %1666 = vmatmul.mubr.f32.gmra.mxu0 %v1596
        %v1667 = vpop.f32.mrf.mxu0
        %v1668 = vadd.f32 0.0, %v1667
        %v1669 = vpop.f32.mrf.mxu0
        %1670 = vdwg.mxu0
        %v1672 = vsel %vm1442, %v879, 0
        %v1675 = vsel %vm1442, %v1159, 0
        %1677 = vmatprep.subr.mxu0 0.0
        %1678 = vmatpush1.xpose.msra.mxu0 0.0
        %1679 = vmatprep.subr.mxu0 0.0
        %1680 = vmatpush1.xpose.msra.mxu0 0.0
        %1681 = vmatprep.subr.mxu0 0.0
        %1682 = vmatpush1.xpose.msra.mxu0 0.0
        %1683 = vmatprep.subr.mxu0 0.0
        %1684 = vmatpush1.xpose.msra.mxu0 0.0
        %1685 = vmatprep.subr.mxu0 0.0
        %1686 = vmatpush1.xpose.msra.mxu0 0.0
        %1687 = vmatprep.subr.mxu0 0.0
        %1688 = vmatpush1.xpose.msra.mxu0 0.0
        %1689 = vmatprep.subr.mxu0 0.0
        %1690 = vmatpush1.xpose.msra.mxu0 0.0
        %1691 = vmatprep.subr.mxu0 0.0
        %1692 = vmatpush1.xpose.msra.mxu0 0.0
        %1693 = vmatprep.subr.mxu0 0.0
        %1694 = vmatpush1.xpose.msra.mxu0 0.0
        %1695 = vmatprep.subr.mxu0 0.0
        %1696 = vmatpush1.xpose.msra.mxu0 0.0
        %1697 = vmatprep.subr.mxu0 0.0
        %1698 = vmatpush1.xpose.msra.mxu0 0.0
        %1699 = vmatprep.subr.mxu0 0.0
        %1700 = vmatpush1.xpose.msra.mxu0 0.0
        %1701 = vmatprep.subr.mxu0 0.0
        %1702 = vmatpush1.xpose.msra.mxu0 0.0
        %1703 = vmatprep.subr.mxu0 0.0
        %1704 = vmatpush1.xpose.msra.mxu0 0.0
        %1705 = vmatprep.subr.mxu0 0.0
        %1706 = vmatpush1.xpose.msra.mxu0 0.0
        %1707 = vmatprep.subr.mxu0 0.0
        %1708 = vmatpush1.xpose.msra.mxu0 %v1675
        %1709 = vmatprep.subr.mxu0 0.0
        %1710 = vmatpush2.xpose.msra.mxu0 0.0
        %1711 = vmatprep.subr.mxu0 0.0
        %1712 = vmatpush2.xpose.msra.mxu0 0.0
        %1713 = vmatprep.subr.mxu0 0.0
        %1714 = vmatpush2.xpose.msra.mxu0 0.0
        %1715 = vmatprep.subr.mxu0 0.0
        %1716 = vmatpush2.xpose.msra.mxu0 0.0
        %1717 = vmatprep.subr.mxu0 0.0
        %1718 = vmatpush2.xpose.msra.mxu0 0.0
        %1719 = vmatprep.subr.mxu0 0.0
        %1720 = vmatpush2.xpose.msra.mxu0 0.0
        %1721 = vmatprep.subr.mxu0 0.0
        %1722 = vmatpush2.xpose.msra.mxu0 0.0
        %1723 = vmatprep.subr.mxu0 0.0
        %1724 = vmatpush2.xpose.msra.mxu0 0.0
        %1725 = vmatprep.subr.mxu0 0.0
        %1726 = vmatpush2.xpose.msra.mxu0 0.0
        %1727 = vmatprep.subr.mxu0 0.0
        %1728 = vmatpush2.xpose.msra.mxu0 0.0
        %1729 = vmatprep.subr.mxu0 0.0
        %1730 = vmatpush2.xpose.msra.mxu0 0.0
        %1731 = vmatprep.subr.mxu0 0.0
        %1732 = vmatpush2.xpose.msra.mxu0 0.0
        %1733 = vmatprep.subr.mxu0 0.0
        %1734 = vmatpush2.xpose.msra.mxu0 0.0
        %1735 = vmatprep.subr.mxu0 0.0
        %1736 = vmatpush2.xpose.msra.mxu0 0.0
        %1737 = vmatprep.subr.mxu0 0.0
        %1738 = vmatpush2.xpose.msra.mxu0 0.0
        %1739 = vmatprep.subr.mxu0 0.0
        %1740 = vmatpush2.xpose.msra.mxu0 0.0
        %1741 = vmatprep.mubr.f32.mxu0 0.0
        %1742 = vmatmul.mubr.f32.gmra.mxu0 %v1672
        %v1743 = vpop.f32.mrf.mxu0
        %v1744 = vadd.f32 0.0, %v1743
        %v1745 = vpop.f32.mrf.mxu0
        %1746 = vdwg.mxu0
        %v1747 = vsel %vm1442, %v1516, -inf
        %1748 = vmax.xlane.f32.xlu0 %v1747
        %v1749 = vpop.xlane.xlu0 %1748
        %v1750 = vsel %vm1442, %v1592, -inf
        %1751 = vmax.xlane.f32.xlu0 %v1750
        %v1752 = vpop.xlane.xlu0 %1751
        %v1753 = vsel %vm1442, %v1668, -inf
        %1754 = vmax.xlane.f32.xlu0 %v1753
        %v1755 = vpop.xlane.xlu0 %1754
        %v1756 = vsel %vm1442, %v1744, -inf
        %1757 = vmax.xlane.f32.xlu0 %v1756
        %v1758 = vpop.xlane.xlu0 %1757
        %v1759 = vsub.f32 %v1516, %v1749
        %v1760 = vsub.f32 %v1592, %v1752
        %v1761 = vsub.f32 %v1668, %v1755
        %v1762 = vsub.f32 %v1744, %v1758
        %v1763 = vmul.f32 %v1759, 1.442695
        %v1764 = vpow.pop %v1763
        %v1765 = vmul.f32 %v1760, 1.442695
        %v1766 = vpow.pop %v1765
        %v1767 = vmul.f32 %v1761, 1.442695
        %v1768 = vpow.pop %v1767
        %v1769 = vmul.f32 %v1762, 1.442695
        %v1770 = vpow.pop %v1769
        %v1771 = vsel %vm1442, %v1764, 0.0
        %1772 = vadd.xlane.f32.xlu0 %v1771
        %v1773 = vpop.xlane.xlu0 %1772
        %v1774 = vsel %vm1442, %v1766, 0.0
        %1775 = vadd.xlane.f32.xlu0 %v1774
        %v1776 = vpop.xlane.xlu0 %1775
        %v1777 = vsel %vm1442, %v1768, 0.0
        %1778 = vadd.xlane.f32.xlu0 %v1777
        %v1779 = vpop.xlane.xlu0 %1778
        %v1780 = vsel %vm1442, %v1770, 0.0
        %1781 = vadd.xlane.f32.xlu0 %v1780
        %v1782 = vpop.xlane.xlu0 %1781
        %v1783 = vrcp.pop %v1773
        %v1784 = vrcp.pop %v1776
        %v1785 = vrcp.pop %v1779
        %v1786 = vrcp.pop %v1782
        %v1787 = vmul.f32 %v1764, %v1783
        %v1788 = vmul.f32 %v1766, %v1784
        %v1789 = vmul.f32 %v1768, %v1785
        %v1790 = vmul.f32 %v1770, %v1786
        %v1792 = vsel %vm1442, %v1787, 0
        %1794 = vmatprep.subr.mxu0 0.0
        %1795 = vmatpush1.msra.mxu0 0.0
        %1796 = vmatprep.subr.mxu0 0.0
        %1797 = vmatpush1.msra.mxu0 0.0
        %1798 = vmatprep.subr.mxu0 0.0
        %1799 = vmatpush1.msra.mxu0 0.0
        %1800 = vmatprep.subr.mxu0 0.0
        %1801 = vmatpush1.msra.mxu0 0.0
        %1802 = vmatprep.subr.mxu0 0.0
        %1803 = vmatpush1.msra.mxu0 0.0
        %1804 = vmatprep.subr.mxu0 0.0
        %1805 = vmatpush1.msra.mxu0 0.0
        %1806 = vmatprep.subr.mxu0 0.0
        %1807 = vmatpush1.msra.mxu0 0.0
        %1808 = vmatprep.subr.mxu0 0.0
        %1809 = vmatpush1.msra.mxu0 0.0
        %1810 = vmatprep.subr.mxu0 0.0
        %1811 = vmatpush1.msra.mxu0 0.0
        %1812 = vmatprep.subr.mxu0 0.0
        %1813 = vmatpush1.msra.mxu0 0.0
        %1814 = vmatprep.subr.mxu0 0.0
        %1815 = vmatpush1.msra.mxu0 0.0
        %1816 = vmatprep.subr.mxu0 0.0
        %1817 = vmatpush1.msra.mxu0 0.0
        %1818 = vmatprep.subr.mxu0 0.0
        %1819 = vmatpush1.msra.mxu0 0.0
        %1820 = vmatprep.subr.mxu0 0.0
        %1821 = vmatpush1.msra.mxu0 0.0
        %1822 = vmatprep.subr.mxu0 0.0
        %1823 = vmatpush1.msra.mxu0 0.0
        %1824 = vmatprep.subr.mxu0 0.0
        %1825 = vmatpush1.msra.mxu0 %v1229
        %1826 = vmatprep.subr.mxu0 0.0
        %1827 = vmatpush2.msra.mxu0 0.0
        %1828 = vmatprep.subr.mxu0 0.0
        %1829 = vmatpush2.msra.mxu0 0.0
        %1830 = vmatprep.subr.mxu0 0.0
        %1831 = vmatpush2.msra.mxu0 0.0
        %1832 = vmatprep.subr.mxu0 0.0
        %1833 = vmatpush2.msra.mxu0 0.0
        %1834 = vmatprep.subr.mxu0 0.0
        %1835 = vmatpush2.msra.mxu0 0.0
        %1836 = vmatprep.subr.mxu0 0.0
        %1837 = vmatpush2.msra.mxu0 0.0
        %1838 = vmatprep.subr.mxu0 0.0
        %1839 = vmatpush2.msra.mxu0 0.0
        %1840 = vmatprep.subr.mxu0 0.0
        %1841 = vmatpush2.msra.mxu0 0.0
        %1842 = vmatprep.subr.mxu0 0.0
        %1843 = vmatpush2.msra.mxu0 0.0
        %1844 = vmatprep.subr.mxu0 0.0
        %1845 = vmatpush2.msra.mxu0 0.0
        %1846 = vmatprep.subr.mxu0 0.0
        %1847 = vmatpush2.msra.mxu0 0.0
        %1848 = vmatprep.subr.mxu0 0.0
        %1849 = vmatpush2.msra.mxu0 0.0
        %1850 = vmatprep.subr.mxu0 0.0
        %1851 = vmatpush2.msra.mxu0 0.0
        %1852 = vmatprep.subr.mxu0 0.0
        %1853 = vmatpush2.msra.mxu0 0.0
        %1854 = vmatprep.subr.mxu0 0.0
        %1855 = vmatpush2.msra.mxu0 0.0
        %1856 = vmatprep.subr.mxu0 0.0
        %1857 = vmatpush2.msra.mxu0 0.0
        %1858 = vmatprep.mubr.f32.mxu0 0.0
        %1859 = vmatmul.mubr.f32.gmra.mxu0 %v1792
        %v1860 = vpop.f32.mrf.mxu0
        %v1861 = vadd.f32 0.0, %v1860
        %v1862 = vpop.f32.mrf.mxu0
        %1863 = vdwg.mxu0
        %v1865 = vsel %vm1442, %v1788, 0
        %1867 = vmatprep.subr.mxu0 0.0
        %1868 = vmatpush1.msra.mxu0 0.0
        %1869 = vmatprep.subr.mxu0 0.0
        %1870 = vmatpush1.msra.mxu0 0.0
        %1871 = vmatprep.subr.mxu0 0.0
        %1872 = vmatpush1.msra.mxu0 0.0
        %1873 = vmatprep.subr.mxu0 0.0
        %1874 = vmatpush1.msra.mxu0 0.0
        %1875 = vmatprep.subr.mxu0 0.0
        %1876 = vmatpush1.msra.mxu0 0.0
        %1877 = vmatprep.subr.mxu0 0.0
        %1878 = vmatpush1.msra.mxu0 0.0
        %1879 = vmatprep.subr.mxu0 0.0
        %1880 = vmatpush1.msra.mxu0 0.0
        %1881 = vmatprep.subr.mxu0 0.0
        %1882 = vmatpush1.msra.mxu0 0.0
        %1883 = vmatprep.subr.mxu0 0.0
        %1884 = vmatpush1.msra.mxu0 0.0
        %1885 = vmatprep.subr.mxu0 0.0
        %1886 = vmatpush1.msra.mxu0 0.0
        %1887 = vmatprep.subr.mxu0 0.0
        %1888 = vmatpush1.msra.mxu0 0.0
        %1889 = vmatprep.subr.mxu0 0.0
        %1890 = vmatpush1.msra.mxu0 0.0
        %1891 = vmatprep.subr.mxu0 0.0
        %1892 = vmatpush1.msra.mxu0 0.0
        %1893 = vmatprep.subr.mxu0 0.0
        %1894 = vmatpush1.msra.mxu0 0.0
        %1895 = vmatprep.subr.mxu0 0.0
        %1896 = vmatpush1.msra.mxu0 0.0
        %1897 = vmatprep.subr.mxu0 0.0
        %1898 = vmatpush1.msra.mxu0 %v1299
        %1899 = vmatprep.subr.mxu0 0.0
        %1900 = vmatpush2.msra.mxu0 0.0
        %1901 = vmatprep.subr.mxu0 0.0
        %1902 = vmatpush2.msra.mxu0 0.0
        %1903 = vmatprep.subr.mxu0 0.0
        %1904 = vmatpush2.msra.mxu0 0.0
        %1905 = vmatprep.subr.mxu0 0.0
        %1906 = vmatpush2.msra.mxu0 0.0
        %1907 = vmatprep.subr.mxu0 0.0
        %1908 = vmatpush2.msra.mxu0 0.0
        %1909 = vmatprep.subr.mxu0 0.0
        %1910 = vmatpush2.msra.mxu0 0.0
        %1911 = vmatprep.subr.mxu0 0.0
        %1912 = vmatpush2.msra.mxu0 0.0
        %1913 = vmatprep.subr.mxu0 0.0
        %1914 = vmatpush2.msra.mxu0 0.0
        %1915 = vmatprep.subr.mxu0 0.0
        %1916 = vmatpush2.msra.mxu0 0.0
        %1917 = vmatprep.subr.mxu0 0.0
        %1918 = vmatpush2.msra.mxu0 0.0
        %1919 = vmatprep.subr.mxu0 0.0
        %1920 = vmatpush2.msra.mxu0 0.0
        %1921 = vmatprep.subr.mxu0 0.0
        %1922 = vmatpush2.msra.mxu0 0.0
        %1923 = vmatprep.subr.mxu0 0.0
        %1924 = vmatpush2.msra.mxu0 0.0
        %1925 = vmatprep.subr.mxu0 0.0
        %1926 = vmatpush2.msra.mxu0 0.0
        %1927 = vmatprep.subr.mxu0 0.0
        %1928 = vmatpush2.msra.mxu0 0.0
        %1929 = vmatprep.subr.mxu0 0.0
        %1930 = vmatpush2.msra.mxu0 0.0
        %1931 = vmatprep.mubr.f32.mxu0 0.0
        %1932 = vmatmul.mubr.f32.gmra.mxu0 %v1865
        %v1933 = vpop.f32.mrf.mxu0
        %v1934 = vadd.f32 0.0, %v1933
        %v1935 = vpop.f32.mrf.mxu0
        %1936 = vdwg.mxu0
        %v1938 = vsel %vm1442, %v1789, 0
        %1940 = vmatprep.subr.mxu0 0.0
        %1941 = vmatpush1.msra.mxu0 0.0
        %1942 = vmatprep.subr.mxu0 0.0
        %1943 = vmatpush1.msra.mxu0 0.0
        %1944 = vmatprep.subr.mxu0 0.0
        %1945 = vmatpush1.msra.mxu0 0.0
        %1946 = vmatprep.subr.mxu0 0.0
        %1947 = vmatpush1.msra.mxu0 0.0
        %1948 = vmatprep.subr.mxu0 0.0
        %1949 = vmatpush1.msra.mxu0 0.0
        %1950 = vmatprep.subr.mxu0 0.0
        %1951 = vmatpush1.msra.mxu0 0.0
        %1952 = vmatprep.subr.mxu0 0.0
        %1953 = vmatpush1.msra.mxu0 0.0
        %1954 = vmatprep.subr.mxu0 0.0
        %1955 = vmatpush1.msra.mxu0 0.0
        %1956 = vmatprep.subr.mxu0 0.0
        %1957 = vmatpush1.msra.mxu0 0.0
        %1958 = vmatprep.subr.mxu0 0.0
        %1959 = vmatpush1.msra.mxu0 0.0
        %1960 = vmatprep.subr.mxu0 0.0
        %1961 = vmatpush1.msra.mxu0 0.0
        %1962 = vmatprep.subr.mxu0 0.0
        %1963 = vmatpush1.msra.mxu0 0.0
        %1964 = vmatprep.subr.mxu0 0.0
        %1965 = vmatpush1.msra.mxu0 0.0
        %1966 = vmatprep.subr.mxu0 0.0
        %1967 = vmatpush1.msra.mxu0 0.0
        %1968 = vmatprep.subr.mxu0 0.0
        %1969 = vmatpush1.msra.mxu0 0.0
        %1970 = vmatprep.subr.mxu0 0.0
        %1971 = vmatpush1.msra.mxu0 %v1369
        %1972 = vmatprep.subr.mxu0 0.0
        %1973 = vmatpush2.msra.mxu0 0.0
        %1974 = vmatprep.subr.mxu0 0.0
        %1975 = vmatpush2.msra.mxu0 0.0
        %1976 = vmatprep.subr.mxu0 0.0
        %1977 = vmatpush2.msra.mxu0 0.0
        %1978 = vmatprep.subr.mxu0 0.0
        %1979 = vmatpush2.msra.mxu0 0.0
        %1980 = vmatprep.subr.mxu0 0.0
        %1981 = vmatpush2.msra.mxu0 0.0
        %1982 = vmatprep.subr.mxu0 0.0
        %1983 = vmatpush2.msra.mxu0 0.0
        %1984 = vmatprep.subr.mxu0 0.0
        %1985 = vmatpush2.msra.mxu0 0.0
        %1986 = vmatprep.subr.mxu0 0.0
        %1987 = vmatpush2.msra.mxu0 0.0
        %1988 = vmatprep.subr.mxu0 0.0
        %1989 = vmatpush2.msra.mxu0 0.0
        %1990 = vmatprep.subr.mxu0 0.0
        %1991 = vmatpush2.msra.mxu0 0.0
        %1992 = vmatprep.subr.mxu0 0.0
        %1993 = vmatpush2.msra.mxu0 0.0
        %1994 = vmatprep.subr.mxu0 0.0
        %1995 = vmatpush2.msra.mxu0 0.0
        %1996 = vmatprep.subr.mxu0 0.0
        %1997 = vmatpush2.msra.mxu0 0.0
        %1998 = vmatprep.subr.mxu0 0.0
        %1999 = vmatpush2.msra.mxu0 0.0
        %2000 = vmatprep.subr.mxu0 0.0
        %2001 = vmatpush2.msra.mxu0 0.0
        %2002 = vmatprep.subr.mxu0 0.0
        %2003 = vmatpush2.msra.mxu0 0.0
        %2004 = vmatprep.mubr.f32.mxu0 0.0
        %2005 = vmatmul.mubr.f32.gmra.mxu0 %v1938
        %v2006 = vpop.f32.mrf.mxu0
        %v2007 = vadd.f32 0.0, %v2006
        %v2008 = vpop.f32.mrf.mxu0
        %2009 = vdwg.mxu0
        %v2011 = vsel %vm1442, %v1790, 0
        %2013 = vmatprep.subr.mxu0 0.0
        %2014 = vmatpush1.msra.mxu0 0.0
        %2015 = vmatprep.subr.mxu0 0.0
        %2016 = vmatpush1.msra.mxu0 0.0
        %2017 = vmatprep.subr.mxu0 0.0
        %2018 = vmatpush1.msra.mxu0 0.0
        %2019 = vmatprep.subr.mxu0 0.0
        %2020 = vmatpush1.msra.mxu0 0.0
        %2021 = vmatprep.subr.mxu0 0.0
        %2022 = vmatpush1.msra.mxu0 0.0
        %2023 = vmatprep.subr.mxu0 0.0
        %2024 = vmatpush1.msra.mxu0 0.0
        %2025 = vmatprep.subr.mxu0 0.0
        %2026 = vmatpush1.msra.mxu0 0.0
        %2027 = vmatprep.subr.mxu0 0.0
        %2028 = vmatpush1.msra.mxu0 0.0
        %2029 = vmatprep.subr.mxu0 0.0
        %2030 = vmatpush1.msra.mxu0 0.0
        %2031 = vmatprep.subr.mxu0 0.0
        %2032 = vmatpush1.msra.mxu0 0.0
        %2033 = vmatprep.subr.mxu0 0.0
        %2034 = vmatpush1.msra.mxu0 0.0
        %2035 = vmatprep.subr.mxu0 0.0
        %2036 = vmatpush1.msra.mxu0 0.0
        %2037 = vmatprep.subr.mxu0 0.0
        %2038 = vmatpush1.msra.mxu0 0.0
        %2039 = vmatprep.subr.mxu0 0.0
        %2040 = vmatpush1.msra.mxu0 0.0
        %2041 = vmatprep.subr.mxu0 0.0
        %2042 = vmatpush1.msra.mxu0 0.0
        %2043 = vmatprep.subr.mxu0 0.0
        %2044 = vmatpush1.msra.mxu0 %v1439
        %2045 = vmatprep.subr.mxu0 0.0
        %2046 = vmatpush2.msra.mxu0 0.0
        %2047 = vmatprep.subr.mxu0 0.0
        %2048 = vmatpush2.msra.mxu0 0.0
        %2049 = vmatprep.subr.mxu0 0.0
        %2050 = vmatpush2.msra.mxu0 0.0
        %2051 = vmatprep.subr.mxu0 0.0
        %2052 = vmatpush2.msra.mxu0 0.0
        %2053 = vmatprep.subr.mxu0 0.0
        %2054 = vmatpush2.msra.mxu0 0.0
        %2055 = vmatprep.subr.mxu0 0.0
        %2056 = vmatpush2.msra.mxu0 0.0
        %2057 = vmatprep.subr.mxu0 0.0
        %2058 = vmatpush2.msra.mxu0 0.0
        %2059 = vmatprep.subr.mxu0 0.0
        %2060 = vmatpush2.msra.mxu0 0.0
        %2061 = vmatprep.subr.mxu0 0.0
        %2062 = vmatpush2.msra.mxu0 0.0
        %2063 = vmatprep.subr.mxu0 0.0
        %2064 = vmatpush2.msra.mxu0 0.0
        %2065 = vmatprep.subr.mxu0 0.0
        %2066 = vmatpush2.msra.mxu0 0.0
        %2067 = vmatprep.subr.mxu0 0.0
        %2068 = vmatpush2.msra.mxu0 0.0
        %2069 = vmatprep.subr.mxu0 0.0
        %2070 = vmatpush2.msra.mxu0 0.0
        %2071 = vmatprep.subr.mxu0 0.0
        %2072 = vmatpush2.msra.mxu0 0.0
        %2073 = vmatprep.subr.mxu0 0.0
        %2074 = vmatpush2.msra.mxu0 0.0
        %2075 = vmatprep.subr.mxu0 0.0
        %2076 = vmatpush2.msra.mxu0 0.0
        %2077 = vmatprep.mubr.f32.mxu0 0.0
        %2078 = vmatmul.mubr.f32.gmra.mxu0 %v2011
        %v2079 = vpop.f32.mrf.mxu0
        %v2080 = vadd.f32 0.0, %v2079
        %v2081 = vpop.f32.mrf.mxu0
        %2082 = vdwg.mxu0
        %v2083 = vld [vmem:[%s4] sm:$0xff]
        %v2084 = vld [vmem:[%s4 + $0x8] sm:$0xff]
        %v2085 = vld [vmem:[%s4 + $0x10] sm:$0xff]
        %v2086 = vld [vmem:[%s4 + $0x18] sm:$0xff]
        %v2088 = vsel %vm1442, %v1861, 0
        %2090 = vmatprep.subr.mxu0 0.0
        %2091 = vmatpush1.msra.mxu0 0.0
        %2092 = vmatprep.subr.mxu0 0.0
        %2093 = vmatpush1.msra.mxu0 0.0
        %2094 = vmatprep.subr.mxu0 0.0
        %2095 = vmatpush1.msra.mxu0 0.0
        %2096 = vmatprep.subr.mxu0 0.0
        %2097 = vmatpush1.msra.mxu0 0.0
        %2098 = vmatprep.subr.mxu0 0.0
        %2099 = vmatpush1.msra.mxu0 0.0
        %2100 = vmatprep.subr.mxu0 0.0
        %2101 = vmatpush1.msra.mxu0 0.0
        %2102 = vmatprep.subr.mxu0 0.0
        %2103 = vmatpush1.msra.mxu0 0.0
        %2104 = vmatprep.subr.mxu0 0.0
        %2105 = vmatpush1.msra.mxu0 0.0
        %2106 = vmatprep.subr.mxu0 0.0
        %2107 = vmatpush1.msra.mxu0 0.0
        %2108 = vmatprep.subr.mxu0 0.0
        %2109 = vmatpush1.msra.mxu0 0.0
        %2110 = vmatprep.subr.mxu0 0.0
        %2111 = vmatpush1.msra.mxu0 0.0
        %2112 = vmatprep.subr.mxu0 0.0
        %2113 = vmatpush1.msra.mxu0 0.0
        %2114 = vmatprep.subr.mxu0 0.0
        %2115 = vmatpush1.msra.mxu0 0.0
        %2116 = vmatprep.subr.mxu0 0.0
        %2117 = vmatpush1.msra.mxu0 0.0
        %2118 = vmatprep.subr.mxu0 0.0
        %2119 = vmatpush1.msra.mxu0 0.0
        %2120 = vmatprep.subr.mxu0 0.0
        %2121 = vmatpush1.msra.mxu0 %v2083
        %2122 = vmatprep.subr.mxu0 0.0
        %2123 = vmatpush2.msra.mxu0 0.0
        %2124 = vmatprep.subr.mxu0 0.0
        %2125 = vmatpush2.msra.mxu0 0.0
        %2126 = vmatprep.subr.mxu0 0.0
        %2127 = vmatpush2.msra.mxu0 0.0
        %2128 = vmatprep.subr.mxu0 0.0
        %2129 = vmatpush2.msra.mxu0 0.0
        %2130 = vmatprep.subr.mxu0 0.0
        %2131 = vmatpush2.msra.mxu0 0.0
        %2132 = vmatprep.subr.mxu0 0.0
        %2133 = vmatpush2.msra.mxu0 0.0
        %2134 = vmatprep.subr.mxu0 0.0
        %2135 = vmatpush2.msra.mxu0 0.0
        %2136 = vmatprep.subr.mxu0 0.0
        %2137 = vmatpush2.msra.mxu0 0.0
        %2138 = vmatprep.subr.mxu0 0.0
        %2139 = vmatpush2.msra.mxu0 0.0
        %2140 = vmatprep.subr.mxu0 0.0
        %2141 = vmatpush2.msra.mxu0 0.0
        %2142 = vmatprep.subr.mxu0 0.0
        %2143 = vmatpush2.msra.mxu0 0.0
        %2144 = vmatprep.subr.mxu0 0.0
        %2145 = vmatpush2.msra.mxu0 0.0
        %2146 = vmatprep.subr.mxu0 0.0
        %2147 = vmatpush2.msra.mxu0 0.0
        %2148 = vmatprep.subr.mxu0 0.0
        %2149 = vmatpush2.msra.mxu0 0.0
        %2150 = vmatprep.subr.mxu0 0.0
        %2151 = vmatpush2.msra.mxu0 0.0
        %2152 = vmatprep.subr.mxu0 0.0
        %2153 = vmatpush2.msra.mxu0 0.0
        %2154 = vmatprep.mubr.f32.mxu0 0.0
        %2155 = vmatmul.mubr.f32.gmra.mxu0 %v2088
        %v2156 = vpop.f32.mrf.mxu0
        %v2157 = vadd.f32 0.0, %v2156
        %v2158 = vpop.f32.mrf.mxu0
        %2159 = vdwg.mxu0
        %v2161 = vsel %vm1442, %v1934, 0
        %2163 = vmatprep.subr.mxu0 0.0
        %2164 = vmatpush1.msra.mxu0 0.0
        %2165 = vmatprep.subr.mxu0 0.0
        %2166 = vmatpush1.msra.mxu0 0.0
        %2167 = vmatprep.subr.mxu0 0.0
        %2168 = vmatpush1.msra.mxu0 0.0
        %2169 = vmatprep.subr.mxu0 0.0
        %2170 = vmatpush1.msra.mxu0 0.0
        %2171 = vmatprep.subr.mxu0 0.0
        %2172 = vmatpush1.msra.mxu0 0.0
        %2173 = vmatprep.subr.mxu0 0.0
        %2174 = vmatpush1.msra.mxu0 0.0
        %2175 = vmatprep.subr.mxu0 0.0
        %2176 = vmatpush1.msra.mxu0 0.0
        %2177 = vmatprep.subr.mxu0 0.0
        %2178 = vmatpush1.msra.mxu0 0.0
        %2179 = vmatprep.subr.mxu0 0.0
        %2180 = vmatpush1.msra.mxu0 0.0
        %2181 = vmatprep.subr.mxu0 0.0
        %2182 = vmatpush1.msra.mxu0 0.0
        %2183 = vmatprep.subr.mxu0 0.0
        %2184 = vmatpush1.msra.mxu0 0.0
        %2185 = vmatprep.subr.mxu0 0.0
        %2186 = vmatpush1.msra.mxu0 0.0
        %2187 = vmatprep.subr.mxu0 0.0
        %2188 = vmatpush1.msra.mxu0 0.0
        %2189 = vmatprep.subr.mxu0 0.0
        %2190 = vmatpush1.msra.mxu0 0.0
        %2191 = vmatprep.subr.mxu0 0.0
        %2192 = vmatpush1.msra.mxu0 0.0
        %2193 = vmatprep.subr.mxu0 0.0
        %2194 = vmatpush1.msra.mxu0 %v2084
        %2195 = vmatprep.subr.mxu0 0.0
        %2196 = vmatpush2.msra.mxu0 0.0
        %2197 = vmatprep.subr.mxu0 0.0
        %2198 = vmatpush2.msra.mxu0 0.0
        %2199 = vmatprep.subr.mxu0 0.0
        %2200 = vmatpush2.msra.mxu0 0.0
        %2201 = vmatprep.subr.mxu0 0.0
        %2202 = vmatpush2.msra.mxu0 0.0
        %2203 = vmatprep.subr.mxu0 0.0
        %2204 = vmatpush2.msra.mxu0 0.0
        %2205 = vmatprep.subr.mxu0 0.0
        %2206 = vmatpush2.msra.mxu0 0.0
        %2207 = vmatprep.subr.mxu0 0.0
        %2208 = vmatpush2.msra.mxu0 0.0
        %2209 = vmatprep.subr.mxu0 0.0
        %2210 = vmatpush2.msra.mxu0 0.0
        %2211 = vmatprep.subr.mxu0 0.0
        %2212 = vmatpush2.msra.mxu0 0.0
        %2213 = vmatprep.subr.mxu0 0.0
        %2214 = vmatpush2.msra.mxu0 0.0
        %2215 = vmatprep.subr.mxu0 0.0
        %2216 = vmatpush2.msra.mxu0 0.0
        %2217 = vmatprep.subr.mxu0 0.0
        %2218 = vmatpush2.msra.mxu0 0.0
        %2219 = vmatprep.subr.mxu0 0.0
        %2220 = vmatpush2.msra.mxu0 0.0
        %2221 = vmatprep.subr.mxu0 0.0
        %2222 = vmatpush2.msra.mxu0 0.0
        %2223 = vmatprep.subr.mxu0 0.0
        %2224 = vmatpush2.msra.mxu0 0.0
        %2225 = vmatprep.subr.mxu0 0.0
        %2226 = vmatpush2.msra.mxu0 0.0
        %2227 = vmatprep.mubr.f32.mxu0 0.0
        %2228 = vmatmul.mubr.f32.gmra.mxu0 %v2161
        %v2229 = vpop.f32.mrf.mxu0
        %v2230 = vadd.f32 0.0, %v2229
        %v2231 = vpop.f32.mrf.mxu0
        %2232 = vdwg.mxu0
        %v2234 = vsel %vm1442, %v2007, 0
        %2236 = vmatprep.subr.mxu0 0.0
        %2237 = vmatpush1.msra.mxu0 0.0
        %2238 = vmatprep.subr.mxu0 0.0
        %2239 = vmatpush1.msra.mxu0 0.0
        %2240 = vmatprep.subr.mxu0 0.0
        %2241 = vmatpush1.msra.mxu0 0.0
        %2242 = vmatprep.subr.mxu0 0.0
        %2243 = vmatpush1.msra.mxu0 0.0
        %2244 = vmatprep.subr.mxu0 0.0
        %2245 = vmatpush1.msra.mxu0 0.0
        %2246 = vmatprep.subr.mxu0 0.0
        %2247 = vmatpush1.msra.mxu0 0.0
        %2248 = vmatprep.subr.mxu0 0.0
        %2249 = vmatpush1.msra.mxu0 0.0
        %2250 = vmatprep.subr.mxu0 0.0
        %2251 = vmatpush1.msra.mxu0 0.0
        %2252 = vmatprep.subr.mxu0 0.0
        %2253 = vmatpush1.msra.mxu0 0.0
        %2254 = vmatprep.subr.mxu0 0.0
        %2255 = vmatpush1.msra.mxu0 0.0
        %2256 = vmatprep.subr.mxu0 0.0
        %2257 = vmatpush1.msra.mxu0 0.0
        %2258 = vmatprep.subr.mxu0 0.0
        %2259 = vmatpush1.msra.mxu0 0.0
        %2260 = vmatprep.subr.mxu0 0.0
        %2261 = vmatpush1.msra.mxu0 0.0
        %2262 = vmatprep.subr.mxu0 0.0
        %2263 = vmatpush1.msra.mxu0 0.0
        %2264 = vmatprep.subr.mxu0 0.0
        %2265 = vmatpush1.msra.mxu0 0.0
        %2266 = vmatprep.subr.mxu0 0.0
        %2267 = vmatpush1.msra.mxu0 %v2085
        %2268 = vmatprep.subr.mxu0 0.0
        %2269 = vmatpush2.msra.mxu0 0.0
        %2270 = vmatprep.subr.mxu0 0.0
        %2271 = vmatpush2.msra.mxu0 0.0
        %2272 = vmatprep.subr.mxu0 0.0
        %2273 = vmatpush2.msra.mxu0 0.0
        %2274 = vmatprep.subr.mxu0 0.0
        %2275 = vmatpush2.msra.mxu0 0.0
        %2276 = vmatprep.subr.mxu0 0.0
        %2277 = vmatpush2.msra.mxu0 0.0
        %2278 = vmatprep.subr.mxu0 0.0
        %2279 = vmatpush2.msra.mxu0 0.0
        %2280 = vmatprep.subr.mxu0 0.0
        %2281 = vmatpush2.msra.mxu0 0.0
        %2282 = vmatprep.subr.mxu0 0.0
        %2283 = vmatpush2.msra.mxu0 0.0
        %2284 = vmatprep.subr.mxu0 0.0
        %2285 = vmatpush2.msra.mxu0 0.0
        %2286 = vmatprep.subr.mxu0 0.0
        %2287 = vmatpush2.msra.mxu0 0.0
        %2288 = vmatprep.subr.mxu0 0.0
        %2289 = vmatpush2.msra.mxu0 0.0
        %2290 = vmatprep.subr.mxu0 0.0
        %2291 = vmatpush2.msra.mxu0 0.0
        %2292 = vmatprep.subr.mxu0 0.0
        %2293 = vmatpush2.msra.mxu0 0.0
        %2294 = vmatprep.subr.mxu0 0.0
        %2295 = vmatpush2.msra.mxu0 0.0
        %2296 = vmatprep.subr.mxu0 0.0
        %2297 = vmatpush2.msra.mxu0 0.0
        %2298 = vmatprep.subr.mxu0 0.0
        %2299 = vmatpush2.msra.mxu0 0.0
        %2300 = vmatprep.mubr.f32.mxu0 0.0
        %2301 = vmatmul.mubr.f32.gmra.mxu0 %v2234
        %v2302 = vpop.f32.mrf.mxu0
        %v2303 = vadd.f32 0.0, %v2302
        %v2304 = vpop.f32.mrf.mxu0
        %2305 = vdwg.mxu0
        %v2307 = vsel %vm1442, %v2080, 0
        %2309 = vmatprep.subr.mxu0 0.0
        %2310 = vmatpush1.msra.mxu0 0.0
        %2311 = vmatprep.subr.mxu0 0.0
        %2312 = vmatpush1.msra.mxu0 0.0
        %2313 = vmatprep.subr.mxu0 0.0
        %2314 = vmatpush1.msra.mxu0 0.0
        %2315 = vmatprep.subr.mxu0 0.0
        %2316 = vmatpush1.msra.mxu0 0.0
        %2317 = vmatprep.subr.mxu0 0.0
        %2318 = vmatpush1.msra.mxu0 0.0
        %2319 = vmatprep.subr.mxu0 0.0
        %2320 = vmatpush1.msra.mxu0 0.0
        %2321 = vmatprep.subr.mxu0 0.0
        %2322 = vmatpush1.msra.mxu0 0.0
        %2323 = vmatprep.subr.mxu0 0.0
        %2324 = vmatpush1.msra.mxu0 0.0
        %2325 = vmatprep.subr.mxu0 0.0
        %2326 = vmatpush1.msra.mxu0 0.0
        %2327 = vmatprep.subr.mxu0 0.0
        %2328 = vmatpush1.msra.mxu0 0.0
        %2329 = vmatprep.subr.mxu0 0.0
        %2330 = vmatpush1.msra.mxu0 0.0
        %2331 = vmatprep.subr.mxu0 0.0
        %2332 = vmatpush1.msra.mxu0 0.0
        %2333 = vmatprep.subr.mxu0 0.0
        %2334 = vmatpush1.msra.mxu0 0.0
        %2335 = vmatprep.subr.mxu0 0.0
        %2336 = vmatpush1.msra.mxu0 0.0
        %2337 = vmatprep.subr.mxu0 0.0
        %2338 = vmatpush1.msra.mxu0 0.0
        %2339 = vmatprep.subr.mxu0 0.0
        %2340 = vmatpush1.msra.mxu0 %v2086
        %2341 = vmatprep.subr.mxu0 0.0
        %2342 = vmatpush2.msra.mxu0 0.0
        %2343 = vmatprep.subr.mxu0 0.0
        %2344 = vmatpush2.msra.mxu0 0.0
        %2345 = vmatprep.subr.mxu0 0.0
        %2346 = vmatpush2.msra.mxu0 0.0
        %2347 = vmatprep.subr.mxu0 0.0
        %2348 = vmatpush2.msra.mxu0 0.0
        %2349 = vmatprep.subr.mxu0 0.0
        %2350 = vmatpush2.msra.mxu0 0.0
        %2351 = vmatprep.subr.mxu0 0.0
        %2352 = vmatpush2.msra.mxu0 0.0
        %2353 = vmatprep.subr.mxu0 0.0
        %2354 = vmatpush2.msra.mxu0 0.0
        %2355 = vmatprep.subr.mxu0 0.0
        %2356 = vmatpush2.msra.mxu0 0.0
        %2357 = vmatprep.subr.mxu0 0.0
        %2358 = vmatpush2.msra.mxu0 0.0
        %2359 = vmatprep.subr.mxu0 0.0
        %2360 = vmatpush2.msra.mxu0 0.0
        %2361 = vmatprep.subr.mxu0 0.0
        %2362 = vmatpush2.msra.mxu0 0.0
        %2363 = vmatprep.subr.mxu0 0.0
        %2364 = vmatpush2.msra.mxu0 0.0
        %2365 = vmatprep.subr.mxu0 0.0
        %2366 = vmatpush2.msra.mxu0 0.0
        %2367 = vmatprep.subr.mxu0 0.0
        %2368 = vmatpush2.msra.mxu0 0.0
        %2369 = vmatprep.subr.mxu0 0.0
        %2370 = vmatpush2.msra.mxu0 0.0
        %2371 = vmatprep.subr.mxu0 0.0
        %2372 = vmatpush2.msra.mxu0 0.0
        %2373 = vmatprep.mubr.f32.mxu0 0.0
        %2374 = vmatmul.mubr.f32.gmra.mxu0 %v2307
        %v2375 = vpop.f32.mrf.mxu0
        %v2376 = vadd.f32 0.0, %v2375
        %v2377 = vpop.f32.mrf.mxu0
        %2378 = vdwg.mxu0
        %v2379 = vsel %vm598, %v2157, 0.0
        %v2380 = vsel %vm598, %v2230, 0.0
        %v2381 = vadd.f32 %v2379, %v2380
        %v2382 = vsel %vm598, %v2303, 0.0
        %v2383 = vadd.f32 %v2381, %v2382
        %v2384 = vsel %vm598, %v2376, 0.0
        %v2385 = vadd.f32 %v2383, %v2384
        %v2386 = vld [vmem:[%s5] sm:$0x1]
        %v2388 = vlaneseq
        %v2389 = vshrl.u32 %v2388, 7
        %v2390 = vsub.s32 0, %v2389
        %v2391 = vrot.slane %v2386, %v2390
        %v2393 = vadd.f32 %v2385, %v2391
        %v2394 = vadd.f32 %v465, %v2393
        %v2395 = vld [vmem:[%s10] sm:$0x1]
        %v2396 = vld [vmem:[%s11] sm:$0x1]
        %v2397 = vsel %vm598, %v2394, 0.0
        %2398 = vadd.xlane.f32.xlu0 %v2397
        %v2399 = vpop.xlane.xlu0 %2398
        %v2400 = vrcp.pop 32.0
        %v2401 = vmul.f32 %v2399, %v2400
        %v2402 = vsub.f32 %v2394, %v2401
        %v2403 = vmul.f32 %v2402, %v2402
        %v2404 = vsel %vm598, %v2403, 0.0
        %2405 = vadd.xlane.f32.xlu0 %v2404
        %v2406 = vpop.xlane.xlu0 %2405
        %v2407 = vmul.f32 %v2406, %v2400
        %v2408 = vadd.f32 %v2407, 1e-05
        %v2409 = vrsqrt.pop %v2408
        %v2410 = vmul.f32 %v2402, %v2409
        %v2412 = vlaneseq
        %v2413 = vshrl.u32 %v2412, 7
        %v2414 = vsub.s32 0, %v2413
        %v2415 = vrot.slane %v2395, %v2414
        %v2417 = vmul.f32 %v2410, %v2415
        %v2419 = vlaneseq
        %v2420 = vshrl.u32 %v2419, 7
        %v2421 = vsub.s32 0, %v2420
        %v2422 = vrot.slane %v2396, %v2421
        %v2424 = vadd.f32 %v2417, %v2422
        %v2425 = vld [vmem:[%s6] sm:$0xff]
        %v2426 = vld [vmem:[%s6 + $0x8] sm:$0xff]
        %v2427 = vld [vmem:[%s6 + $0x10] sm:$0xff]
        %v2428 = vld [vmem:[%s6 + $0x18] sm:$0xff]
        %v2429 = vld [vmem:[%s7] sm:$0x1]
        %v2431 = vlaneseq
        %v2432 = vshrl.u32 %v2431, 7
        %v2433 = vsub.s32 0, %v2432
        %v2434 = vrot.slane %v2429, %v2433
        %v2437 = vsel %vm598, %v2424, 0
        %2439 = vmatprep.subr.mxu0 0.0
        %2440 = vmatpush1.msra.mxu0 0.0
        %2441 = vmatprep.subr.mxu0 0.0
        %2442 = vmatpush1.msra.mxu0 0.0
        %2443 = vmatprep.subr.mxu0 0.0
        %2444 = vmatpush1.msra.mxu0 0.0
        %2445 = vmatprep.subr.mxu0 0.0
        %2446 = vmatpush1.msra.mxu0 0.0
        %2447 = vmatprep.subr.mxu0 0.0
        %2448 = vmatpush1.msra.mxu0 0.0
        %2449 = vmatprep.subr.mxu0 0.0
        %2450 = vmatpush1.msra.mxu0 0.0
        %2451 = vmatprep.subr.mxu0 0.0
        %2452 = vmatpush1.msra.mxu0 0.0
        %2453 = vmatprep.subr.mxu0 0.0
        %2454 = vmatpush1.msra.mxu0 0.0
        %2455 = vmatprep.subr.mxu0 0.0
        %2456 = vmatpush1.msra.mxu0 0.0
        %2457 = vmatprep.subr.mxu0 0.0
        %2458 = vmatpush1.msra.mxu0 0.0
        %2459 = vmatprep.subr.mxu0 0.0
        %2460 = vmatpush1.msra.mxu0 0.0
        %2461 = vmatprep.subr.mxu0 0.0
        %2462 = vmatpush1.msra.mxu0 0.0
        %2463 = vmatprep.subr.mxu0 0.0
        %2464 = vmatpush1.msra.mxu0 %v2428
        %2465 = vmatprep.subr.mxu0 0.0
        %2466 = vmatpush1.msra.mxu0 %v2427
        %2467 = vmatprep.subr.mxu0 0.0
        %2468 = vmatpush1.msra.mxu0 %v2426
        %2469 = vmatprep.subr.mxu0 0.0
        %2470 = vmatpush1.msra.mxu0 %v2425
        %2471 = vmatprep.subr.mxu0 0.0
        %2472 = vmatpush2.msra.mxu0 0.0
        %2473 = vmatprep.subr.mxu0 0.0
        %2474 = vmatpush2.msra.mxu0 0.0
        %2475 = vmatprep.subr.mxu0 0.0
        %2476 = vmatpush2.msra.mxu0 0.0
        %2477 = vmatprep.subr.mxu0 0.0
        %2478 = vmatpush2.msra.mxu0 0.0
        %2479 = vmatprep.subr.mxu0 0.0
        %2480 = vmatpush2.msra.mxu0 0.0
        %2481 = vmatprep.subr.mxu0 0.0
        %2482 = vmatpush2.msra.mxu0 0.0
        %2483 = vmatprep.subr.mxu0 0.0
        %2484 = vmatpush2.msra.mxu0 0.0
        %2485 = vmatprep.subr.mxu0 0.0
        %2486 = vmatpush2.msra.mxu0 0.0
        %2487 = vmatprep.subr.mxu0 0.0
        %2488 = vmatpush2.msra.mxu0 0.0
        %2489 = vmatprep.subr.mxu0 0.0
        %2490 = vmatpush2.msra.mxu0 0.0
        %2491 = vmatprep.subr.mxu0 0.0
        %2492 = vmatpush2.msra.mxu0 0.0
        %2493 = vmatprep.subr.mxu0 0.0
        %2494 = vmatpush2.msra.mxu0 0.0
        %2495 = vmatprep.subr.mxu0 0.0
        %2496 = vmatpush2.msra.mxu0 0.0
        %2497 = vmatprep.subr.mxu0 0.0
        %2498 = vmatpush2.msra.mxu0 0.0
        %2499 = vmatprep.subr.mxu0 0.0
        %2500 = vmatpush2.msra.mxu0 0.0
        %2501 = vmatprep.subr.mxu0 0.0
        %2502 = vmatpush2.msra.mxu0 0.0
        %2503 = vmatprep.mubr.f32.mxu0 0.0
        %2504 = vmatmul.mubr.f32.gmra.mxu0 %v2437
        %v2505 = vpop.f32.mrf.mxu0
        %v2506 = vadd.f32 %v2434, %v2505
        %v2507 = vpop.f32.mrf.mxu0
        %2508 = vdwg.mxu0
        %v2509 = vmax.f32 %v2506, 0.0
        %v2510 = vld [vmem:[%s8] sm:$0xff]
        %v2511 = vld [vmem:[%s8 + $0x8] sm:$0xff]
        %v2512 = vld [vmem:[%s8 + $0x10] sm:$0xff]
        %v2513 = vld [vmem:[%s8 + $0x18] sm:$0xff]
        %v2514 = vld [vmem:[%s8 + $0x20] sm:$0xff]
        %v2515 = vld [vmem:[%s8 + $0x28] sm:$0xff]
        %v2516 = vld [vmem:[%s8 + $0x30] sm:$0xff]
        %v2517 = vld [vmem:[%s8 + $0x38] sm:$0xff]
        %v2518 = vld [vmem:[%s9] sm:$0x1]
        %v2520 = vlaneseq
        %v2521 = vshrl.u32 %v2520, 7
        %v2522 = vsub.s32 0, %v2521
        %v2523 = vrot.slane %v2518, %v2522
        %vm2525 = vcmask 523264
        %v2527 = vsel %vm2525, %v2509, 0
        %2529 = vmatprep.subr.mxu0 0.0
        %2530 = vmatpush1.msra.mxu0 0.0
        %2531 = vmatprep.subr.mxu0 0.0
        %2532 = vmatpush1.msra.mxu0 0.0
        %2533 = vmatprep.subr.mxu0 0.0
        %2534 = vmatpush1.msra.mxu0 0.0
        %2535 = vmatprep.subr.mxu0 0.0
        %2536 = vmatpush1.msra.mxu0 0.0
        %2537 = vmatprep.subr.mxu0 0.0
        %2538 = vmatpush1.msra.mxu0 0.0
        %2539 = vmatprep.subr.mxu0 0.0
        %2540 = vmatpush1.msra.mxu0 0.0
        %2541 = vmatprep.subr.mxu0 0.0
        %2542 = vmatpush1.msra.mxu0 0.0
        %2543 = vmatprep.subr.mxu0 0.0
        %2544 = vmatpush1.msra.mxu0 0.0
        %2545 = vmatprep.subr.mxu0 0.0
        %2546 = vmatpush1.msra.mxu0 %v2517
        %2547 = vmatprep.subr.mxu0 0.0
        %2548 = vmatpush1.msra.mxu0 %v2516
        %2549 = vmatprep.subr.mxu0 0.0
        %2550 = vmatpush1.msra.mxu0 %v2515
        %2551 = vmatprep.subr.mxu0 0.0
        %2552 = vmatpush1.msra.mxu0 %v2514
        %2553 = vmatprep.subr.mxu0 0.0
        %2554 = vmatpush1.msra.mxu0 %v2513
        %2555 = vmatprep.subr.mxu0 0.0
        %2556 = vmatpush1.msra.mxu0 %v2512
        %2557 = vmatprep.subr.mxu0 0.0
        %2558 = vmatpush1.msra.mxu0 %v2511
        %2559 = vmatprep.subr.mxu0 0.0
        %2560 = vmatpush1.msra.mxu0 %v2510
        %2561 = vmatprep.subr.mxu0 0.0
        %2562 = vmatpush2.msra.mxu0 0.0
        %2563 = vmatprep.subr.mxu0 0.0
        %2564 = vmatpush2.msra.mxu0 0.0
        %2565 = vmatprep.subr.mxu0 0.0
        %2566 = vmatpush2.msra.mxu0 0.0
        %2567 = vmatprep.subr.mxu0 0.0
        %2568 = vmatpush2.msra.mxu0 0.0
        %2569 = vmatprep.subr.mxu0 0.0
        %2570 = vmatpush2.msra.mxu0 0.0
        %2571 = vmatprep.subr.mxu0 0.0
        %2572 = vmatpush2.msra.mxu0 0.0
        %2573 = vmatprep.subr.mxu0 0.0
        %2574 = vmatpush2.msra.mxu0 0.0
        %2575 = vmatprep.subr.mxu0 0.0
        %2576 = vmatpush2.msra.mxu0 0.0
        %2577 = vmatprep.subr.mxu0 0.0
        %2578 = vmatpush2.msra.mxu0 0.0
        %2579 = vmatprep.subr.mxu0 0.0
        %2580 = vmatpush2.msra.mxu0 0.0
        %2581 = vmatprep.subr.mxu0 0.0
        %2582 = vmatpush2.msra.mxu0 0.0
        %2583 = vmatprep.subr.mxu0 0.0
        %2584 = vmatpush2.msra.mxu0 0.0
        %2585 = vmatprep.subr.mxu0 0.0
        %2586 = vmatpush2.msra.mxu0 0.0
        %2587 = vmatprep.subr.mxu0 0.0
        %2588 = vmatpush2.msra.mxu0 0.0
        %2589 = vmatprep.subr.mxu0 0.0
        %2590 = vmatpush2.msra.mxu0 0.0
        %2591 = vmatprep.subr.mxu0 0.0
        %2592 = vmatpush2.msra.mxu0 0.0
        %2593 = vmatprep.mubr.f32.mxu0 0.0
        %2594 = vmatmul.mubr.f32.gmra.mxu0 %v2527
        %v2595 = vpop.f32.mrf.mxu0
        %v2596 = vadd.f32 %v2523, %v2595
        %v2597 = vpop.f32.mrf.mxu0
        %2598 = vdwg.mxu0
        %v2599 = vadd.f32 %v2424, %v2596
        %v2600 = vld [vmem:[%s12] sm:$0x1]
        %v2601 = vld [vmem:[%s13] sm:$0x1]
        %v2602 = vsel %vm598, %v2599, 0.0
        %2603 = vadd.xlane.f32.xlu0 %v2602
        %v2604 = vpop.xlane.xlu0 %2603
        %v2605 = vmul.f32 %v2604, %v2400
        %v2606 = vsub.f32 %v2599, %v2605
        %v2607 = vmul.f32 %v2606, %v2606
        %v2608 = vsel %vm598, %v2607, 0.0
        %2609 = vadd.xlane.f32.xlu0 %v2608
        %v2610 = vpop.xlane.xlu0 %2609
        %v2611 = vmul.f32 %v2610, %v2400
        %v2612 = vadd.f32 %v2611, 1e-05
        %v2613 = vrsqrt.pop %v2612
        %v2614 = vmul.f32 %v2606, %v2613
        %v2616 = vlaneseq
        %v2617 = vshrl.u32 %v2616, 7
        %v2618 = vsub.s32 0, %v2617
        %v2619 = vrot.slane %v2600, %v2618
        %v2621 = vmul.f32 %v2614, %v2619
        %v2623 = vlaneseq
        %v2624 = vshrl.u32 %v2623, 7
        %v2625 = vsub.s32 0, %v2624
        %v2626 = vrot.slane %v2601, %v2625
        %v2628 = vadd.f32 %v2621, %v2626
        %s2629 = scalar_lea.vmem %s2, 384
        %v2630 = vld [vmem:[%s2629] sm:$0xff]
        %v2631 = vld [vmem:[%s2629 + $0x8] sm:$0xff]
        %v2632 = vld [vmem:[%s2629 + $0x10] sm:$0xff]
        %v2633 = vld [vmem:[%s2629 + $0x18] sm:$0xff]
        %v2634 = vld [vmem:[%s2629 + $0x20] sm:$0xff]
        %v2635 = vld [vmem:[%s2629 + $0x28] sm:$0xff]
        %v2636 = vld [vmem:[%s2629 + $0x30] sm:$0xff]
        %v2637 = vld [vmem:[%s2629 + $0x38] sm:$0xff]
        %v2638 = vld [vmem:[%s2629 + $0x40] sm:$0xff]
        %v2639 = vld [vmem:[%s2629 + $0x48] sm:$0xff]
        %v2640 = vld [vmem:[%s2629 + $0x50] sm:$0xff]
        %v2641 = vld [vmem:[%s2629 + $0x58] sm:$0xff]
        %v2642 = vld [vmem:[%s2629 + $0x60] sm:$0xff]
        %v2643 = vld [vmem:[%s2629 + $0x68] sm:$0xff]
        %v2644 = vld [vmem:[%s2629 + $0x70] sm:$0xff]
        %v2645 = vld [vmem:[%s2629 + $0x78] sm:$0xff]
        %v2646 = vld [vmem:[%s2629 + $0x80] sm:$0xff]
        %v2647 = vld [vmem:[%s2629 + $0x88] sm:$0xff]
        %v2648 = vld [vmem:[%s2629 + $0x90] sm:$0xff]
        %v2649 = vld [vmem:[%s2629 + $0x98] sm:$0xff]
        %v2650 = vld [vmem:[%s2629 + $0xa0] sm:$0xff]
        %v2651 = vld [vmem:[%s2629 + $0xa8] sm:$0xff]
        %v2652 = vld [vmem:[%s2629 + $0xb0] sm:$0xff]
        %v2653 = vld [vmem:[%s2629 + $0xb8] sm:$0xff]
        %v2654 = vld [vmem:[%s2629 + $0xc0] sm:$0xff]
        %v2655 = vld [vmem:[%s2629 + $0xc8] sm:$0xff]
        %v2656 = vld [vmem:[%s2629 + $0xd0] sm:$0xff]
        %v2657 = vld [vmem:[%s2629 + $0xd8] sm:$0xff]
        %v2658 = vld [vmem:[%s2629 + $0xe0] sm:$0xff]
        %v2659 = vld [vmem:[%s2629 + $0xe8] sm:$0xff]
        %v2660 = vld [vmem:[%s2629 + $0xf0] sm:$0xff]
        %v2661 = vld [vmem:[%s2629 + $0xf8] sm:$0xff]
        %v2662 = vld [vmem:[%s2629 + $0x100] sm:$0xff]
        %v2663 = vld [vmem:[%s2629 + $0x108] sm:$0xff]
        %v2664 = vld [vmem:[%s2629 + $0x110] sm:$0xff]
        %v2665 = vld [vmem:[%s2629 + $0x118] sm:$0xff]
        %v2666 = vld [vmem:[%s2629 + $0x120] sm:$0xff]
        %v2667 = vld [vmem:[%s2629 + $0x128] sm:$0xff]
        %v2668 = vld [vmem:[%s2629 + $0x130] sm:$0xff]
        %v2669 = vld [vmem:[%s2629 + $0x138] sm:$0xff]
        %v2670 = vld [vmem:[%s2629 + $0x140] sm:$0xff]
        %v2671 = vld [vmem:[%s2629 + $0x148] sm:$0xff]
        %v2672 = vld [vmem:[%s2629 + $0x150] sm:$0xff]
        %v2673 = vld [vmem:[%s2629 + $0x158] sm:$0xff]
        %v2674 = vld [vmem:[%s2629 + $0x160] sm:$0xff]
        %v2675 = vld [vmem:[%s2629 + $0x168] sm:$0xff]
        %v2676 = vld [vmem:[%s2629 + $0x170] sm:$0xff]
        %v2677 = vld [vmem:[%s2629 + $0x178] sm:$0xff]
        %s2678 = scalar_lea.vmem %s3, 12
        %v2679 = vld [vmem:[%s2678] sm:$0x1]
        %v2680 = vld [vmem:[%s2678 + $0x1] sm:$0x1]
        %v2681 = vld [vmem:[%s2678 + $0x2] sm:$0x1]
        %v2682 = vld [vmem:[%s2678 + $0x3] sm:$0x1]
        %v2683 = vld [vmem:[%s2678 + $0x4] sm:$0x1]
        %v2684 = vld [vmem:[%s2678 + $0x5] sm:$0x1]
        %v2685 = vld [vmem:[%s2678 + $0x6] sm:$0x1]
        %v2686 = vld [vmem:[%s2678 + $0x7] sm:$0x1]
        %v2687 = vld [vmem:[%s2678 + $0x8] sm:$0x1]
        %v2688 = vld [vmem:[%s2678 + $0x9] sm:$0x1]
        %v2689 = vld [vmem:[%s2678 + $0xa] sm:$0x1]
        %v2690 = vld [vmem:[%s2678 + $0xb] sm:$0x1]
        %v2703 = vlaneseq
        %v2704 = vshrl.u32 %v2703, 7
        %v2705 = vsub.s32 0, %v2704
        %v2706 = vrot.slane %v2679, %v2705
        %v2707 = vlaneseq
        %v2708 = vshrl.u32 %v2707, 7
        %v2709 = vsub.s32 0, %v2708
        %v2710 = vrot.slane %v2680, %v2709
        %v2711 = vlaneseq
        %v2712 = vshrl.u32 %v2711, 7
        %v2713 = vsub.s32 0, %v2712
        %v2714 = vrot.slane %v2681, %v2713
        %v2715 = vlaneseq
        %v2716 = vshrl.u32 %v2715, 7
        %v2717 = vsub.s32 0, %v2716
        %v2718 = vrot.slane %v2682, %v2717
        %v2719 = vlaneseq
        %v2720 = vshrl.u32 %v2719, 7
        %v2721 = vsub.s32 0, %v2720
        %v2722 = vrot.slane %v2683, %v2721
        %v2723 = vlaneseq
        %v2724 = vshrl.u32 %v2723, 7
        %v2725 = vsub.s32 0, %v2724
        %v2726 = vrot.slane %v2684, %v2725
        %v2727 = vlaneseq
        %v2728 = vshrl.u32 %v2727, 7
        %v2729 = vsub.s32 0, %v2728
        %v2730 = vrot.slane %v2685, %v2729
        %v2731 = vlaneseq
        %v2732 = vshrl.u32 %v2731, 7
        %v2733 = vsub.s32 0, %v2732
        %v2734 = vrot.slane %v2686, %v2733
        %v2735 = vlaneseq
        %v2736 = vshrl.u32 %v2735, 7
        %v2737 = vsub.s32 0, %v2736
        %v2738 = vrot.slane %v2687, %v2737
        %v2739 = vlaneseq
        %v2740 = vshrl.u32 %v2739, 7
        %v2741 = vsub.s32 0, %v2740
        %v2742 = vrot.slane %v2688, %v2741
        %v2743 = vlaneseq
        %v2744 = vshrl.u32 %v2743, 7
        %v2745 = vsub.s32 0, %v2744
        %v2746 = vrot.slane %v2689, %v2745
        %v2747 = vlaneseq
        %v2748 = vshrl.u32 %v2747, 7
        %v2749 = vsub.s32 0, %v2748
        %v2750 = vrot.slane %v2690, %v2749
        %v2764 = vsel %vm598, %v2628, 0
        %2766 = vmatprep.subr.mxu0 0.0
        %2767 = vmatpush1.msra.mxu0 0.0
        %2768 = vmatprep.subr.mxu0 0.0
        %2769 = vmatpush1.msra.mxu0 0.0
        %2770 = vmatprep.subr.mxu0 0.0
        %2771 = vmatpush1.msra.mxu0 0.0
        %2772 = vmatprep.subr.mxu0 0.0
        %2773 = vmatpush1.msra.mxu0 0.0
        %2774 = vmatprep.subr.mxu0 0.0
        %2775 = vmatpush1.msra.mxu0 0.0
        %2776 = vmatprep.subr.mxu0 0.0
        %2777 = vmatpush1.msra.mxu0 0.0
        %2778 = vmatprep.subr.mxu0 0.0
        %2779 = vmatpush1.msra.mxu0 0.0
        %2780 = vmatprep.subr.mxu0 0.0
        %2781 = vmatpush1.msra.mxu0 0.0
        %2782 = vmatprep.subr.mxu0 0.0
        %2783 = vmatpush1.msra.mxu0 0.0
        %2784 = vmatprep.subr.mxu0 0.0
        %2785 = vmatpush1.msra.mxu0 0.0
        %2786 = vmatprep.subr.mxu0 0.0
        %2787 = vmatpush1.msra.mxu0 0.0
        %2788 = vmatprep.subr.mxu0 0.0
        %2789 = vmatpush1.msra.mxu0 0.0
        %2790 = vmatprep.subr.mxu0 0.0
        %2791 = vmatpush1.msra.mxu0 %v2633
        %2792 = vmatprep.subr.mxu0 0.0
        %2793 = vmatpush1.msra.mxu0 %v2632
        %2794 = vmatprep.subr.mxu0 0.0
        %2795 = vmatpush1.msra.mxu0 %v2631
        %2796 = vmatprep.subr.mxu0 0.0
        %2797 = vmatpush1.msra.mxu0 %v2630
        %2798 = vmatprep.subr.mxu0 0.0
        %2799 = vmatpush2.msra.mxu0 0.0
        %2800 = vmatprep.subr.mxu0 0.0
        %2801 = vmatpush2.msra.mxu0 0.0
        %2802 = vmatprep.subr.mxu0 0.0
        %2803 = vmatpush2.msra.mxu0 0.0
        %2804 = vmatprep.subr.mxu0 0.0
        %2805 = vmatpush2.msra.mxu0 0.0
        %2806 = vmatprep.subr.mxu0 0.0
        %2807 = vmatpush2.msra.mxu0 0.0
        %2808 = vmatprep.subr.mxu0 0.0
        %2809 = vmatpush2.msra.mxu0 0.0
        %2810 = vmatprep.subr.mxu0 0.0
        %2811 = vmatpush2.msra.mxu0 0.0
        %2812 = vmatprep.subr.mxu0 0.0
        %2813 = vmatpush2.msra.mxu0 0.0
        %2814 = vmatprep.subr.mxu0 0.0
        %2815 = vmatpush2.msra.mxu0 0.0
        %2816 = vmatprep.subr.mxu0 0.0
        %2817 = vmatpush2.msra.mxu0 0.0
        %2818 = vmatprep.subr.mxu0 0.0
        %2819 = vmatpush2.msra.mxu0 0.0
        %2820 = vmatprep.subr.mxu0 0.0
        %2821 = vmatpush2.msra.mxu0 0.0
        %2822 = vmatprep.subr.mxu0 0.0
        %2823 = vmatpush2.msra.mxu0 0.0
        %2824 = vmatprep.subr.mxu0 0.0
        %2825 = vmatpush2.msra.mxu0 0.0
        %2826 = vmatprep.subr.mxu0 0.0
        %2827 = vmatpush2.msra.mxu0 0.0
        %2828 = vmatprep.subr.mxu0 0.0
        %2829 = vmatpush2.msra.mxu0 0.0
        %2830 = vmatprep.mubr.f32.mxu0 0.0
        %2831 = vmatmul.mubr.f32.gmra.mxu0 %v2764
        %v2832 = vpop.f32.mrf.mxu0
        %v2833 = vadd.f32 %v2706, %v2832
        %v2834 = vpop.f32.mrf.mxu0
        %2835 = vdwg.mxu0
        %2836 = vmatprep.subr.mxu0 0.0
        %2837 = vmatpush1.msra.mxu0 0.0
        %2838 = vmatprep.subr.mxu0 0.0
        %2839 = vmatpush1.msra.mxu0 0.0
        %2840 = vmatprep.subr.mxu0 0.0
        %2841 = vmatpush1.msra.mxu0 0.0
        %2842 = vmatprep.subr.mxu0 0.0
        %2843 = vmatpush1.msra.mxu0 0.0
        %2844 = vmatprep.subr.mxu0 0.0
        %2845 = vmatpush1.msra.mxu0 0.0
        %2846 = vmatprep.subr.mxu0 0.0
        %2847 = vmatpush1.msra.mxu0 0.0
        %2848 = vmatprep.subr.mxu0 0.0
        %2849 = vmatpush1.msra.mxu0 0.0
        %2850 = vmatprep.subr.mxu0 0.0
        %2851 = vmatpush1.msra.mxu0 0.0
        %2852 = vmatprep.subr.mxu0 0.0
        %2853 = vmatpush1.msra.mxu0 0.0
        %2854 = vmatprep.subr.mxu0 0.0
        %2855 = vmatpush1.msra.mxu0 0.0
        %2856 = vmatprep.subr.mxu0 0.0
        %2857 = vmatpush1.msra.mxu0 0.0
        %2858 = vmatprep.subr.mxu0 0.0
        %2859 = vmatpush1.msra.mxu0 0.0
        %2860 = vmatprep.subr.mxu0 0.0
        %2861 = vmatpush1.msra.mxu0 %v2637
        %2862 = vmatprep.subr.mxu0 0.0
        %2863 = vmatpush1.msra.mxu0 %v2636
        %2864 = vmatprep.subr.mxu0 0.0
        %2865 = vmatpush1.msra.mxu0 %v2635
        %2866 = vmatprep.subr.mxu0 0.0
        %2867 = vmatpush1.msra.mxu0 %v2634
        %2868 = vmatprep.subr.mxu0 0.0
        %2869 = vmatpush2.msra.mxu0 0.0
        %2870 = vmatprep.subr.mxu0 0.0
        %2871 = vmatpush2.msra.mxu0 0.0
        %2872 = vmatprep.subr.mxu0 0.0
        %2873 = vmatpush2.msra.mxu0 0.0
        %2874 = vmatprep.subr.mxu0 0.0
        %2875 = vmatpush2.msra.mxu0 0.0
        %2876 = vmatprep.subr.mxu0 0.0
        %2877 = vmatpush2.msra.mxu0 0.0
        %2878 = vmatprep.subr.mxu0 0.0
        %2879 = vmatpush2.msra.mxu0 0.0
        %2880 = vmatprep.subr.mxu0 0.0
        %2881 = vmatpush2.msra.mxu0 0.0
        %2882 = vmatprep.subr.mxu0 0.0
        %2883 = vmatpush2.msra.mxu0 0.0
        %2884 = vmatprep.subr.mxu0 0.0
        %2885 = vmatpush2.msra.mxu0 0.0
        %2886 = vmatprep.subr.mxu0 0.0
        %2887 = vmatpush2.msra.mxu0 0.0
        %2888 = vmatprep.subr.mxu0 0.0
        %2889 = vmatpush2.msra.mxu0 0.0
        %2890 = vmatprep.subr.mxu0 0.0
        %2891 = vmatpush2.msra.mxu0 0.0
        %2892 = vmatprep.subr.mxu0 0.0
        %2893 = vmatpush2.msra.mxu0 0.0
        %2894 = vmatprep.subr.mxu0 0.0
        %2895 = vmatpush2.msra.mxu0 0.0
        %2896 = vmatprep.subr.mxu0 0.0
        %2897 = vmatpush2.msra.mxu0 0.0
        %2898 = vmatprep.subr.mxu0 0.0
        %2899 = vmatpush2.msra.mxu0 0.0
        %2900 = vmatprep.mubr.f32.mxu0 0.0
        %2901 = vmatmul.mubr.f32.gmra.mxu0 %v2764
        %v2902 = vpop.f32.mrf.mxu0
        %v2903 = vadd.f32 %v2710, %v2902
        %v2904 = vpop.f32.mrf.mxu0
        %2905 = vdwg.mxu0
        %2906 = vmatprep.subr.mxu0 0.0
        %2907 = vmatpush1.msra.mxu0 0.0
        %2908 = vmatprep.subr.mxu0 0.0
        %2909 = vmatpush1.msra.mxu0 0.0
        %2910 = vmatprep.subr.mxu0 0.0
        %2911 = vmatpush1.msra.mxu0 0.0
        %2912 = vmatprep.subr.mxu0 0.0
        %2913 = vmatpush1.msra.mxu0 0.0
        %2914 = vmatprep.subr.mxu0 0.0
        %2915 = vmatpush1.msra.mxu0 0.0
        %2916 = vmatprep.subr.mxu0 0.0
        %2917 = vmatpush1.msra.mxu0 0.0
        %2918 = vmatprep.subr.mxu0 0.0
        %2919 = vmatpush1.msra.mxu0 0.0
        %2920 = vmatprep.subr.mxu0 0.0
        %2921 = vmatpush1.msra.mxu0 0.0
        %2922 = vmatprep.subr.mxu0 0.0
        %2923 = vmatpush1.msra.mxu0 0.0
        %2924 = vmatprep.subr.mxu0 0.0
        %2925 = vmatpush1.msra.mxu0 0.0
        %2926 = vmatprep.subr.mxu0 0.0
        %2927 = vmatpush1.msra.mxu0 0.0
        %2928 = vmatprep.subr.mxu0 0.0
        %2929 = vmatpush1.msra.mxu0 0.0
        %2930 = vmatprep.subr.mxu0 0.0
        %2931 = vmatpush1.msra.mxu0 %v2641
        %2932 = vmatprep.subr.mxu0 0.0
        %2933 = vmatpush1.msra.mxu0 %v2640
        %2934 = vmatprep.subr.mxu0 0.0
        %2935 = vmatpush1.msra.mxu0 %v2639
        %2936 = vmatprep.subr.mxu0 0.0
        %2937 = vmatpush1.msra.mxu0 %v2638
        %2938 = vmatprep.subr.mxu0 0.0
        %2939 = vmatpush2.msra.mxu0 0.0
        %2940 = vmatprep.subr.mxu0 0.0
        %2941 = vmatpush2.msra.mxu0 0.0
        %2942 = vmatprep.subr.mxu0 0.0
        %2943 = vmatpush2.msra.mxu0 0.0
        %2944 = vmatprep.subr.mxu0 0.0
        %2945 = vmatpush2.msra.mxu0 0.0
        %2946 = vmatprep.subr.mxu0 0.0
        %2947 = vmatpush2.msra.mxu0 0.0
        %2948 = vmatprep.subr.mxu0 0.0
        %2949 = vmatpush2.msra.mxu0 0.0
        %2950 = vmatprep.subr.mxu0 0.0
        %2951 = vmatpush2.msra.mxu0 0.0
        %2952 = vmatprep.subr.mxu0 0.0
        %2953 = vmatpush2.msra.mxu0 0.0
        %2954 = vmatprep.subr.mxu0 0.0
        %2955 = vmatpush2.msra.mxu0 0.0
        %2956 = vmatprep.subr.mxu0 0.0
        %2957 = vmatpush2.msra.mxu0 0.0
        %2958 = vmatprep.subr.mxu0 0.0
        %2959 = vmatpush2.msra.mxu0 0.0
        %2960 = vmatprep.subr.mxu0 0.0
        %2961 = vmatpush2.msra.mxu0 0.0
        %2962 = vmatprep.subr.mxu0 0.0
        %2963 = vmatpush2.msra.mxu0 0.0
        %2964 = vmatprep.subr.mxu0 0.0
        %2965 = vmatpush2.msra.mxu0 0.0
        %2966 = vmatprep.subr.mxu0 0.0
        %2967 = vmatpush2.msra.mxu0 0.0
        %2968 = vmatprep.subr.mxu0 0.0
        %2969 = vmatpush2.msra.mxu0 0.0
        %2970 = vmatprep.mubr.f32.mxu0 0.0
        %2971 = vmatmul.mubr.f32.gmra.mxu0 %v2764
        %v2972 = vpop.f32.mrf.mxu0
        %v2973 = vadd.f32 %v2714, %v2972
        %v2974 = vpop.f32.mrf.mxu0
        %2975 = vdwg.mxu0
        %2976 = vmatprep.subr.mxu0 0.0
        %2977 = vmatpush1.msra.mxu0 0.0
        %2978 = vmatprep.subr.mxu0 0.0
        %2979 = vmatpush1.msra.mxu0 0.0
        %2980 = vmatprep.subr.mxu0 0.0
        %2981 = vmatpush1.msra.mxu0 0.0
        %2982 = vmatprep.subr.mxu0 0.0
        %2983 = vmatpush1.msra.mxu0 0.0
        %2984 = vmatprep.subr.mxu0 0.0
        %2985 = vmatpush1.msra.mxu0 0.0
        %2986 = vmatprep.subr.mxu0 0.0
        %2987 = vmatpush1.msra.mxu0 0.0
        %2988 = vmatprep.subr.mxu0 0.0
        %2989 = vmatpush1.msra.mxu0 0.0
        %2990 = vmatprep.subr.mxu0 0.0
        %2991 = vmatpush1.msra.mxu0 0.0
        %2992 = vmatprep.subr.mxu0 0.0
        %2993 = vmatpush1.msra.mxu0 0.0
        %2994 = vmatprep.subr.mxu0 0.0
        %2995 = vmatpush1.msra.mxu0 0.0
        %2996 = vmatprep.subr.mxu0 0.0
        %2997 = vmatpush1.msra.mxu0 0.0
        %2998 = vmatprep.subr.mxu0 0.0
        %2999 = vmatpush1.msra.mxu0 0.0
        %3000 = vmatprep.subr.mxu0 0.0
        %3001 = vmatpush1.msra.mxu0 %v2645
        %3002 = vmatprep.subr.mxu0 0.0
        %3003 = vmatpush1.msra.mxu0 %v2644
        %3004 = vmatprep.subr.mxu0 0.0
        %3005 = vmatpush1.msra.mxu0 %v2643
        %3006 = vmatprep.subr.mxu0 0.0
        %3007 = vmatpush1.msra.mxu0 %v2642
        %3008 = vmatprep.subr.mxu0 0.0
        %3009 = vmatpush2.msra.mxu0 0.0
        %3010 = vmatprep.subr.mxu0 0.0
        %3011 = vmatpush2.msra.mxu0 0.0
        %3012 = vmatprep.subr.mxu0 0.0
        %3013 = vmatpush2.msra.mxu0 0.0
        %3014 = vmatprep.subr.mxu0 0.0
        %3015 = vmatpush2.msra.mxu0 0.0
        %3016 = vmatprep.subr.mxu0 0.0
        %3017 = vmatpush2.msra.mxu0 0.0
        %3018 = vmatprep.subr.mxu0 0.0
        %3019 = vmatpush2.msra.mxu0 0.0
        %3020 = vmatprep.subr.mxu0 0.0
        %3021 = vmatpush2.msra.mxu0 0.0
        %3022 = vmatprep.subr.mxu0 0.0
        %3023 = vmatpush2.msra.mxu0 0.0
        %3024 = vmatprep.subr.mxu0 0.0
        %3025 = vmatpush2.msra.mxu0 0.0
        %3026 = vmatprep.subr.mxu0 0.0
        %3027 = vmatpush2.msra.mxu0 0.0
        %3028 = vmatprep.subr.mxu0 0.0
        %3029 = vmatpush2.msra.mxu0 0.0
        %3030 = vmatprep.subr.mxu0 0.0
        %3031 = vmatpush2.msra.mxu0 0.0
        %3032 = vmatprep.subr.mxu0 0.0
        %3033 = vmatpush2.msra.mxu0 0.0
        %3034 = vmatprep.subr.mxu0 0.0
        %3035 = vmatpush2.msra.mxu0 0.0
        %3036 = vmatprep.subr.mxu0 0.0
        %3037 = vmatpush2.msra.mxu0 0.0
        %3038 = vmatprep.subr.mxu0 0.0
        %3039 = vmatpush2.msra.mxu0 0.0
        %3040 = vmatprep.mubr.f32.mxu0 0.0
        %3041 = vmatmul.mubr.f32.gmra.mxu0 %v2764
        %v3042 = vpop.f32.mrf.mxu0
        %v3043 = vadd.f32 %v2718, %v3042
        %v3044 = vpop.f32.mrf.mxu0
        %3045 = vdwg.mxu0
        %3046 = vmatprep.subr.mxu0 0.0
        %3047 = vmatpush1.msra.mxu0 0.0
        %3048 = vmatprep.subr.mxu0 0.0
        %3049 = vmatpush1.msra.mxu0 0.0
        %3050 = vmatprep.subr.mxu0 0.0
        %3051 = vmatpush1.msra.mxu0 0.0
        %3052 = vmatprep.subr.mxu0 0.0
        %3053 = vmatpush1.msra.mxu0 0.0
        %3054 = vmatprep.subr.mxu0 0.0
        %3055 = vmatpush1.msra.mxu0 0.0
        %3056 = vmatprep.subr.mxu0 0.0
        %3057 = vmatpush1.msra.mxu0 0.0
        %3058 = vmatprep.subr.mxu0 0.0
        %3059 = vmatpush1.msra.mxu0 0.0
        %3060 = vmatprep.subr.mxu0 0.0
        %3061 = vmatpush1.msra.mxu0 0.0
        %3062 = vmatprep.subr.mxu0 0.0
        %3063 = vmatpush1.msra.mxu0 0.0
        %3064 = vmatprep.subr.mxu0 0.0
        %3065 = vmatpush1.msra.mxu0 0.0
        %3066 = vmatprep.subr.mxu0 0.0
        %3067 = vmatpush1.msra.mxu0 0.0
        %3068 = vmatprep.subr.mxu0 0.0
        %3069 = vmatpush1.msra.mxu0 0.0
        %3070 = vmatprep.subr.mxu0 0.0
        %3071 = vmatpush1.msra.mxu0 %v2649
        %3072 = vmatprep.subr.mxu0 0.0
        %3073 = vmatpush1.msra.mxu0 %v2648
        %3074 = vmatprep.subr.mxu0 0.0
        %3075 = vmatpush1.msra.mxu0 %v2647
        %3076 = vmatprep.subr.mxu0 0.0
        %3077 = vmatpush1.msra.mxu0 %v2646
        %3078 = vmatprep.subr.mxu0 0.0
        %3079 = vmatpush2.msra.mxu0 0.0
        %3080 = vmatprep.subr.mxu0 0.0
        %3081 = vmatpush2.msra.mxu0 0.0
        %3082 = vmatprep.subr.mxu0 0.0
        %3083 = vmatpush2.msra.mxu0 0.0
        %3084 = vmatprep.subr.mxu0 0.0
        %3085 = vmatpush2.msra.mxu0 0.0
        %3086 = vmatprep.subr.mxu0 0.0
        %3087 = vmatpush2.msra.mxu0 0.0
        %3088 = vmatprep.subr.mxu0 0.0
        %3089 = vmatpush2.msra.mxu0 0.0
        %3090 = vmatprep.subr.mxu0 0.0
        %3091 = vmatpush2.msra.mxu0 0.0
        %3092 = vmatprep.subr.mxu0 0.0
        %3093 = vmatpush2.msra.mxu0 0.0
        %3094 = vmatprep.subr.mxu0 0.0
        %3095 = vmatpush2.msra.mxu0 0.0
        %3096 = vmatprep.subr.mxu0 0.0
        %3097 = vmatpush2.msra.mxu0 0.0
        %3098 = vmatprep.subr.mxu0 0.0
        %3099 = vmatpush2.msra.mxu0 0.0
        %3100 = vmatprep.subr.mxu0 0.0
        %3101 = vmatpush2.msra.mxu0 0.0
        %3102 = vmatprep.subr.mxu0 0.0
        %3103 = vmatpush2.msra.mxu0 0.0
        %3104 = vmatprep.subr.mxu0 0.0
        %3105 = vmatpush2.msra.mxu0 0.0
        %3106 = vmatprep.subr.mxu0 0.0
        %3107 = vmatpush2.msra.mxu0 0.0
        %3108 = vmatprep.subr.mxu0 0.0
        %3109 = vmatpush2.msra.mxu0 0.0
        %3110 = vmatprep.mubr.f32.mxu0 0.0
        %3111 = vmatmul.mubr.f32.gmra.mxu0 %v2764
        %v3112 = vpop.f32.mrf.mxu0
        %v3113 = vadd.f32 %v2722, %v3112
        %v3114 = vpop.f32.mrf.mxu0
        %3115 = vdwg.mxu0
        %3116 = vmatprep.subr.mxu0 0.0
        %3117 = vmatpush1.msra.mxu0 0.0
        %3118 = vmatprep.subr.mxu0 0.0
        %3119 = vmatpush1.msra.mxu0 0.0
        %3120 = vmatprep.subr.mxu0 0.0
        %3121 = vmatpush1.msra.mxu0 0.0
        %3122 = vmatprep.subr.mxu0 0.0
        %3123 = vmatpush1.msra.mxu0 0.0
        %3124 = vmatprep.subr.mxu0 0.0
        %3125 = vmatpush1.msra.mxu0 0.0
        %3126 = vmatprep.subr.mxu0 0.0
        %3127 = vmatpush1.msra.mxu0 0.0
        %3128 = vmatprep.subr.mxu0 0.0
        %3129 = vmatpush1.msra.mxu0 0.0
        %3130 = vmatprep.subr.mxu0 0.0
        %3131 = vmatpush1.msra.mxu0 0.0
        %3132 = vmatprep.subr.mxu0 0.0
        %3133 = vmatpush1.msra.mxu0 0.0
        %3134 = vmatprep.subr.mxu0 0.0
        %3135 = vmatpush1.msra.mxu0 0.0
        %3136 = vmatprep.subr.mxu0 0.0
        %3137 = vmatpush1.msra.mxu0 0.0
        %3138 = vmatprep.subr.mxu0 0.0
        %3139 = vmatpush1.msra.mxu0 0.0
        %3140 = vmatprep.subr.mxu0 0.0
        %3141 = vmatpush1.msra.mxu0 %v2653
        %3142 = vmatprep.subr.mxu0 0.0
        %3143 = vmatpush1.msra.mxu0 %v2652
        %3144 = vmatprep.subr.mxu0 0.0
        %3145 = vmatpush1.msra.mxu0 %v2651
        %3146 = vmatprep.subr.mxu0 0.0
        %3147 = vmatpush1.msra.mxu0 %v2650
        %3148 = vmatprep.subr.mxu0 0.0
        %3149 = vmatpush2.msra.mxu0 0.0
        %3150 = vmatprep.subr.mxu0 0.0
        %3151 = vmatpush2.msra.mxu0 0.0
        %3152 = vmatprep.subr.mxu0 0.0
        %3153 = vmatpush2.msra.mxu0 0.0
        %3154 = vmatprep.subr.mxu0 0.0
        %3155 = vmatpush2.msra.mxu0 0.0
        %3156 = vmatprep.subr.mxu0 0.0
        %3157 = vmatpush2.msra.mxu0 0.0
        %3158 = vmatprep.subr.mxu0 0.0
        %3159 = vmatpush2.msra.mxu0 0.0
        %3160 = vmatprep.subr.mxu0 0.0
        %3161 = vmatpush2.msra.mxu0 0.0
        %3162 = vmatprep.subr.mxu0 0.0
        %3163 = vmatpush2.msra.mxu0 0.0
        %3164 = vmatprep.subr.mxu0 0.0
        %3165 = vmatpush2.msra.mxu0 0.0
        %3166 = vmatprep.subr.mxu0 0.0
        %3167 = vmatpush2.msra.mxu0 0.0
        %3168 = vmatprep.subr.mxu0 0.0
        %3169 = vmatpush2.msra.mxu0 0.0
        %3170 = vmatprep.subr.mxu0 0.0
        %3171 = vmatpush2.msra.mxu0 0.0
        %3172 = vmatprep.subr.mxu0 0.0
        %3173 = vmatpush2.msra.mxu0 0.0
        %3174 = vmatprep.subr.mxu0 0.0
        %3175 = vmatpush2.msra.mxu0 0.0
        %3176 = vmatprep.subr.mxu0 0.0
        %3177 = vmatpush2.msra.mxu0 0.0
        %3178 = vmatprep.subr.mxu0 0.0
        %3179 = vmatpush2.msra.mxu0 0.0
        %3180 = vmatprep.mubr.f32.mxu0 0.0
        %3181 = vmatmul.mubr.f32.gmra.mxu0 %v2764
        %v3182 = vpop.f32.mrf.mxu0
        %v3183 = vadd.f32 %v2726, %v3182
        %v3184 = vpop.f32.mrf.mxu0
        %3185 = vdwg.mxu0
        %3186 = vmatprep.subr.mxu0 0.0
        %3187 = vmatpush1.msra.mxu0 0.0
        %3188 = vmatprep.subr.mxu0 0.0
        %3189 = vmatpush1.msra.mxu0 0.0
        %3190 = vmatprep.subr.mxu0 0.0
        %3191 = vmatpush1.msra.mxu0 0.0
        %3192 = vmatprep.subr.mxu0 0.0
        %3193 = vmatpush1.msra.mxu0 0.0
        %3194 = vmatprep.subr.mxu0 0.0
        %3195 = vmatpush1.msra.mxu0 0.0
        %3196 = vmatprep.subr.mxu0 0.0
        %3197 = vmatpush1.msra.mxu0 0.0
        %3198 = vmatprep.subr.mxu0 0.0
        %3199 = vmatpush1.msra.mxu0 0.0
        %3200 = vmatprep.subr.mxu0 0.0
        %3201 = vmatpush1.msra.mxu0 0.0
        %3202 = vmatprep.subr.mxu0 0.0
        %3203 = vmatpush1.msra.mxu0 0.0
        %3204 = vmatprep.subr.mxu0 0.0
        %3205 = vmatpush1.msra.mxu0 0.0
        %3206 = vmatprep.subr.mxu0 0.0
        %3207 = vmatpush1.msra.mxu0 0.0
        %3208 = vmatprep.subr.mxu0 0.0
        %3209 = vmatpush1.msra.mxu0 0.0
        %3210 = vmatprep.subr.mxu0 0.0
        %3211 = vmatpush1.msra.mxu0 %v2657
        %3212 = vmatprep.subr.mxu0 0.0
        %3213 = vmatpush1.msra.mxu0 %v2656
        %3214 = vmatprep.subr.mxu0 0.0
        %3215 = vmatpush1.msra.mxu0 %v2655
        %3216 = vmatprep.subr.mxu0 0.0
        %3217 = vmatpush1.msra.mxu0 %v2654
        %3218 = vmatprep.subr.mxu0 0.0
        %3219 = vmatpush2.msra.mxu0 0.0
        %3220 = vmatprep.subr.mxu0 0.0
        %3221 = vmatpush2.msra.mxu0 0.0
        %3222 = vmatprep.subr.mxu0 0.0
        %3223 = vmatpush2.msra.mxu0 0.0
        %3224 = vmatprep.subr.mxu0 0.0
        %3225 = vmatpush2.msra.mxu0 0.0
        %3226 = vmatprep.subr.mxu0 0.0
        %3227 = vmatpush2.msra.mxu0 0.0
        %3228 = vmatprep.subr.mxu0 0.0
        %3229 = vmatpush2.msra.mxu0 0.0
        %3230 = vmatprep.subr.mxu0 0.0
        %3231 = vmatpush2.msra.mxu0 0.0
        %3232 = vmatprep.subr.mxu0 0.0
        %3233 = vmatpush2.msra.mxu0 0.0
        %3234 = vmatprep.subr.mxu0 0.0
        %3235 = vmatpush2.msra.mxu0 0.0
        %3236 = vmatprep.subr.mxu0 0.0
        %3237 = vmatpush2.msra.mxu0 0.0
        %3238 = vmatprep.subr.mxu0 0.0
        %3239 = vmatpush2.msra.mxu0 0.0
        %3240 = vmatprep.subr.mxu0 0.0
        %3241 = vmatpush2.msra.mxu0 0.0
        %3242 = vmatprep.subr.mxu0 0.0
        %3243 = vmatpush2.msra.mxu0 0.0
        %3244 = vmatprep.subr.mxu0 0.0
        %3245 = vmatpush2.msra.mxu0 0.0
        %3246 = vmatprep.subr.mxu0 0.0
        %3247 = vmatpush2.msra.mxu0 0.0
        %3248 = vmatprep.subr.mxu0 0.0
        %3249 = vmatpush2.msra.mxu0 0.0
        %3250 = vmatprep.mubr.f32.mxu0 0.0
        %3251 = vmatmul.mubr.f32.gmra.mxu0 %v2764
        %v3252 = vpop.f32.mrf.mxu0
        %v3253 = vadd.f32 %v2730, %v3252
        %v3254 = vpop.f32.mrf.mxu0
        %3255 = vdwg.mxu0
        %3256 = vmatprep.subr.mxu0 0.0
        %3257 = vmatpush1.msra.mxu0 0.0
        %3258 = vmatprep.subr.mxu0 0.0
        %3259 = vmatpush1.msra.mxu0 0.0
        %3260 = vmatprep.subr.mxu0 0.0
        %3261 = vmatpush1.msra.mxu0 0.0
        %3262 = vmatprep.subr.mxu0 0.0
        %3263 = vmatpush1.msra.mxu0 0.0
        %3264 = vmatprep.subr.mxu0 0.0
        %3265 = vmatpush1.msra.mxu0 0.0
        %3266 = vmatprep.subr.mxu0 0.0
        %3267 = vmatpush1.msra.mxu0 0.0
        %3268 = vmatprep.subr.mxu0 0.0
        %3269 = vmatpush1.msra.mxu0 0.0
        %3270 = vmatprep.subr.mxu0 0.0
        %3271 = vmatpush1.msra.mxu0 0.0
        %3272 = vmatprep.subr.mxu0 0.0
        %3273 = vmatpush1.msra.mxu0 0.0
        %3274 = vmatprep.subr.mxu0 0.0
        %3275 = vmatpush1.msra.mxu0 0.0
        %3276 = vmatprep.subr.mxu0 0.0
        %3277 = vmatpush1.msra.mxu0 0.0
        %3278 = vmatprep.subr.mxu0 0.0
        %3279 = vmatpush1.msra.mxu0 0.0
        %3280 = vmatprep.subr.mxu0 0.0
        %3281 = vmatpush1.msra.mxu0 %v2661
        %3282 = vmatprep.subr.mxu0 0.0
        %3283 = vmatpush1.msra.mxu0 %v2660
        %3284 = vmatprep.subr.mxu0 0.0
        %3285 = vmatpush1.msra.mxu0 %v2659
        %3286 = vmatprep.subr.mxu0 0.0
        %3287 = vmatpush1.msra.mxu0 %v2658
        %3288 = vmatprep.subr.mxu0 0.0
        %3289 = vmatpush2.msra.mxu0 0.0
        %3290 = vmatprep.subr.mxu0 0.0
        %3291 = vmatpush2.msra.mxu0 0.0
        %3292 = vmatprep.subr.mxu0 0.0
        %3293 = vmatpush2.msra.mxu0 0.0
        %3294 = vmatprep.subr.mxu0 0.0
        %3295 = vmatpush2.msra.mxu0 0.0
        %3296 = vmatprep.subr.mxu0 0.0
        %3297 = vmatpush2.msra.mxu0 0.0
        %3298 = vmatprep.subr.mxu0 0.0
        %3299 = vmatpush2.msra.mxu0 0.0
        %3300 = vmatprep.subr.mxu0 0.0
        %3301 = vmatpush2.msra.mxu0 0.0
        %3302 = vmatprep.subr.mxu0 0.0
        %3303 = vmatpush2.msra.mxu0 0.0
        %3304 = vmatprep.subr.mxu0 0.0
        %3305 = vmatpush2.msra.mxu0 0.0
        %3306 = vmatprep.subr.mxu0 0.0
        %3307 = vmatpush2.msra.mxu0 0.0
        %3308 = vmatprep.subr.mxu0 0.0
        %3309 = vmatpush2.msra.mxu0 0.0
        %3310 = vmatprep.subr.mxu0 0.0
        %3311 = vmatpush2.msra.mxu0 0.0
        %3312 = vmatprep.subr.mxu0 0.0
        %3313 = vmatpush2.msra.mxu0 0.0
        %3314 = vmatprep.subr.mxu0 0.0
        %3315 = vmatpush2.msra.mxu0 0.0
        %3316 = vmatprep.subr.mxu0 0.0
        %3317 = vmatpush2.msra.mxu0 0.0
        %3318 = vmatprep.subr.mxu0 0.0
        %3319 = vmatpush2.msra.mxu0 0.0
        %3320 = vmatprep.mubr.f32.mxu0 0.0
        %3321 = vmatmul.mubr.f32.gmra.mxu0 %v2764
        %v3322 = vpop.f32.mrf.mxu0
        %v3323 = vadd.f32 %v2734, %v3322
        %v3324 = vpop.f32.mrf.mxu0
        %3325 = vdwg.mxu0
        %3326 = vmatprep.subr.mxu0 0.0
        %3327 = vmatpush1.msra.mxu0 0.0
        %3328 = vmatprep.subr.mxu0 0.0
        %3329 = vmatpush1.msra.mxu0 0.0
        %3330 = vmatprep.subr.mxu0 0.0
        %3331 = vmatpush1.msra.mxu0 0.0
        %3332 = vmatprep.subr.mxu0 0.0
        %3333 = vmatpush1.msra.mxu0 0.0
        %3334 = vmatprep.subr.mxu0 0.0
        %3335 = vmatpush1.msra.mxu0 0.0
        %3336 = vmatprep.subr.mxu0 0.0
        %3337 = vmatpush1.msra.mxu0 0.0
        %3338 = vmatprep.subr.mxu0 0.0
        %3339 = vmatpush1.msra.mxu0 0.0
        %3340 = vmatprep.subr.mxu0 0.0
        %3341 = vmatpush1.msra.mxu0 0.0
        %3342 = vmatprep.subr.mxu0 0.0
        %3343 = vmatpush1.msra.mxu0 0.0
        %3344 = vmatprep.subr.mxu0 0.0
        %3345 = vmatpush1.msra.mxu0 0.0
        %3346 = vmatprep.subr.mxu0 0.0
        %3347 = vmatpush1.msra.mxu0 0.0
        %3348 = vmatprep.subr.mxu0 0.0
        %3349 = vmatpush1.msra.mxu0 0.0
        %3350 = vmatprep.subr.mxu0 0.0
        %3351 = vmatpush1.msra.mxu0 %v2665
        %3352 = vmatprep.subr.mxu0 0.0
        %3353 = vmatpush1.msra.mxu0 %v2664
        %3354 = vmatprep.subr.mxu0 0.0
        %3355 = vmatpush1.msra.mxu0 %v2663
        %3356 = vmatprep.subr.mxu0 0.0
        %3357 = vmatpush1.msra.mxu0 %v2662
        %3358 = vmatprep.subr.mxu0 0.0
        %3359 = vmatpush2.msra.mxu0 0.0
        %3360 = vmatprep.subr.mxu0 0.0
        %3361 = vmatpush2.msra.mxu0 0.0
        %3362 = vmatprep.subr.mxu0 0.0
        %3363 = vmatpush2.msra.mxu0 0.0
        %3364 = vmatprep.subr.mxu0 0.0
        %3365 = vmatpush2.msra.mxu0 0.0
        %3366 = vmatprep.subr.mxu0 0.0
        %3367 = vmatpush2.msra.mxu0 0.0
        %3368 = vmatprep.subr.mxu0 0.0
        %3369 = vmatpush2.msra.mxu0 0.0
        %3370 = vmatprep.subr.mxu0 0.0
        %3371 = vmatpush2.msra.mxu0 0.0
        %3372 = vmatprep.subr.mxu0 0.0
        %3373 = vmatpush2.msra.mxu0 0.0
        %3374 = vmatprep.subr.mxu0 0.0
        %3375 = vmatpush2.msra.mxu0 0.0
        %3376 = vmatprep.subr.mxu0 0.0
        %3377 = vmatpush2.msra.mxu0 0.0
        %3378 = vmatprep.subr.mxu0 0.0
        %3379 = vmatpush2.msra.mxu0 0.0
        %3380 = vmatprep.subr.mxu0 0.0
        %3381 = vmatpush2.msra.mxu0 0.0
        %3382 = vmatprep.subr.mxu0 0.0
        %3383 = vmatpush2.msra.mxu0 0.0
        %3384 = vmatprep.subr.mxu0 0.0
        %3385 = vmatpush2.msra.mxu0 0.0
        %3386 = vmatprep.subr.mxu0 0.0
        %3387 = vmatpush2.msra.mxu0 0.0
        %3388 = vmatprep.subr.mxu0 0.0
        %3389 = vmatpush2.msra.mxu0 0.0
        %3390 = vmatprep.mubr.f32.mxu0 0.0
        %3391 = vmatmul.mubr.f32.gmra.mxu0 %v2764
        %v3392 = vpop.f32.mrf.mxu0
        %v3393 = vadd.f32 %v2738, %v3392
        %v3394 = vpop.f32.mrf.mxu0
        %3395 = vdwg.mxu0
        %3396 = vmatprep.subr.mxu0 0.0
        %3397 = vmatpush1.msra.mxu0 0.0
        %3398 = vmatprep.subr.mxu0 0.0
        %3399 = vmatpush1.msra.mxu0 0.0
        %3400 = vmatprep.subr.mxu0 0.0
        %3401 = vmatpush1.msra.mxu0 0.0
        %3402 = vmatprep.subr.mxu0 0.0
        %3403 = vmatpush1.msra.mxu0 0.0
        %3404 = vmatprep.subr.mxu0 0.0
        %3405 = vmatpush1.msra.mxu0 0.0
        %3406 = vmatprep.subr.mxu0 0.0
        %3407 = vmatpush1.msra.mxu0 0.0
        %3408 = vmatprep.subr.mxu0 0.0
        %3409 = vmatpush1.msra.mxu0 0.0
        %3410 = vmatprep.subr.mxu0 0.0
        %3411 = vmatpush1.msra.mxu0 0.0
        %3412 = vmatprep.subr.mxu0 0.0
        %3413 = vmatpush1.msra.mxu0 0.0
        %3414 = vmatprep.subr.mxu0 0.0
        %3415 = vmatpush1.msra.mxu0 0.0
        %3416 = vmatprep.subr.mxu0 0.0
        %3417 = vmatpush1.msra.mxu0 0.0
        %3418 = vmatprep.subr.mxu0 0.0
        %3419 = vmatpush1.msra.mxu0 0.0
        %3420 = vmatprep.subr.mxu0 0.0
        %3421 = vmatpush1.msra.mxu0 %v2669
        %3422 = vmatprep.subr.mxu0 0.0
        %3423 = vmatpush1.msra.mxu0 %v2668
        %3424 = vmatprep.subr.mxu0 0.0
        %3425 = vmatpush1.msra.mxu0 %v2667
        %3426 = vmatprep.subr.mxu0 0.0
        %3427 = vmatpush1.msra.mxu0 %v2666
        %3428 = vmatprep.subr.mxu0 0.0
        %3429 = vmatpush2.msra.mxu0 0.0
        %3430 = vmatprep.subr.mxu0 0.0
        %3431 = vmatpush2.msra.mxu0 0.0
        %3432 = vmatprep.subr.mxu0 0.0
        %3433 = vmatpush2.msra.mxu0 0.0
        %3434 = vmatprep.subr.mxu0 0.0
        %3435 = vmatpush2.msra.mxu0 0.0
        %3436 = vmatprep.subr.mxu0 0.0
        %3437 = vmatpush2.msra.mxu0 0.0
        %3438 = vmatprep.subr.mxu0 0.0
        %3439 = vmatpush2.msra.mxu0 0.0
        %3440 = vmatprep.subr.mxu0 0.0
        %3441 = vmatpush2.msra.mxu0 0.0
        %3442 = vmatprep.subr.mxu0 0.0
        %3443 = vmatpush2.msra.mxu0 0.0
        %3444 = vmatprep.subr.mxu0 0.0
        %3445 = vmatpush2.msra.mxu0 0.0
        %3446 = vmatprep.subr.mxu0 0.0
        %3447 = vmatpush2.msra.mxu0 0.0
        %3448 = vmatprep.subr.mxu0 0.0
        %3449 = vmatpush2.msra.mxu0 0.0
        %3450 = vmatprep.subr.mxu0 0.0
        %3451 = vmatpush2.msra.mxu0 0.0
        %3452 = vmatprep.subr.mxu0 0.0
        %3453 = vmatpush2.msra.mxu0 0.0
        %3454 = vmatprep.subr.mxu0 0.0
        %3455 = vmatpush2.msra.mxu0 0.0
        %3456 = vmatprep.subr.mxu0 0.0
        %3457 = vmatpush2.msra.mxu0 0.0
        %3458 = vmatprep.subr.mxu0 0.0
        %3459 = vmatpush2.msra.mxu0 0.0
        %3460 = vmatprep.mubr.f32.mxu0 0.0
        %3461 = vmatmul.mubr.f32.gmra.mxu0 %v2764
        %v3462 = vpop.f32.mrf.mxu0
        %v3463 = vadd.f32 %v2742, %v3462
        %v3464 = vpop.f32.mrf.mxu0
        %3465 = vdwg.mxu0
        %3466 = vmatprep.subr.mxu0 0.0
        %3467 = vmatpush1.msra.mxu0 0.0
        %3468 = vmatprep.subr.mxu0 0.0
        %3469 = vmatpush1.msra.mxu0 0.0
        %3470 = vmatprep.subr.mxu0 0.0
        %3471 = vmatpush1.msra.mxu0 0.0
        %3472 = vmatprep.subr.mxu0 0.0
        %3473 = vmatpush1.msra.mxu0 0.0
        %3474 = vmatprep.subr.mxu0 0.0
        %3475 = vmatpush1.msra.mxu0 0.0
        %3476 = vmatprep.subr.mxu0 0.0
        %3477 = vmatpush1.msra.mxu0 0.0
        %3478 = vmatprep.subr.mxu0 0.0
        %3479 = vmatpush1.msra.mxu0 0.0
        %3480 = vmatprep.subr.mxu0 0.0
        %3481 = vmatpush1.msra.mxu0 0.0
        %3482 = vmatprep.subr.mxu0 0.0
        %3483 = vmatpush1.msra.mxu0 0.0
        %3484 = vmatprep.subr.mxu0 0.0
        %3485 = vmatpush1.msra.mxu0 0.0
        %3486 = vmatprep.subr.mxu0 0.0
        %3487 = vmatpush1.msra.mxu0 0.0
        %3488 = vmatprep.subr.mxu0 0.0
        %3489 = vmatpush1.msra.mxu0 0.0
        %3490 = vmatprep.subr.mxu0 0.0
        %3491 = vmatpush1.msra.mxu0 %v2673
        %3492 = vmatprep.subr.mxu0 0.0
        %3493 = vmatpush1.msra.mxu0 %v2672
        %3494 = vmatprep.subr.mxu0 0.0
        %3495 = vmatpush1.msra.mxu0 %v2671
        %3496 = vmatprep.subr.mxu0 0.0
        %3497 = vmatpush1.msra.mxu0 %v2670
        %3498 = vmatprep.subr.mxu0 0.0
        %3499 = vmatpush2.msra.mxu0 0.0
        %3500 = vmatprep.subr.mxu0 0.0
        %3501 = vmatpush2.msra.mxu0 0.0
        %3502 = vmatprep.subr.mxu0 0.0
        %3503 = vmatpush2.msra.mxu0 0.0
        %3504 = vmatprep.subr.mxu0 0.0
        %3505 = vmatpush2.msra.mxu0 0.0
        %3506 = vmatprep.subr.mxu0 0.0
        %3507 = vmatpush2.msra.mxu0 0.0
        %3508 = vmatprep.subr.mxu0 0.0
        %3509 = vmatpush2.msra.mxu0 0.0
        %3510 = vmatprep.subr.mxu0 0.0
        %3511 = vmatpush2.msra.mxu0 0.0
        %3512 = vmatprep.subr.mxu0 0.0
        %3513 = vmatpush2.msra.mxu0 0.0
        %3514 = vmatprep.subr.mxu0 0.0
        %3515 = vmatpush2.msra.mxu0 0.0
        %3516 = vmatprep.subr.mxu0 0.0
        %3517 = vmatpush2.msra.mxu0 0.0
        %3518 = vmatprep.subr.mxu0 0.0
        %3519 = vmatpush2.msra.mxu0 0.0
        %3520 = vmatprep.subr.mxu0 0.0
        %3521 = vmatpush2.msra.mxu0 0.0
        %3522 = vmatprep.subr.mxu0 0.0
        %3523 = vmatpush2.msra.mxu0 0.0
        %3524 = vmatprep.subr.mxu0 0.0
        %3525 = vmatpush2.msra.mxu0 0.0
        %3526 = vmatprep.subr.mxu0 0.0
        %3527 = vmatpush2.msra.mxu0 0.0
        %3528 = vmatprep.subr.mxu0 0.0
        %3529 = vmatpush2.msra.mxu0 0.0
        %3530 = vmatprep.mubr.f32.mxu0 0.0
        %3531 = vmatmul.mubr.f32.gmra.mxu0 %v2764
        %v3532 = vpop.f32.mrf.mxu0
        %v3533 = vadd.f32 %v2746, %v3532
        %v3534 = vpop.f32.mrf.mxu0
        %3535 = vdwg.mxu0
        %3536 = vmatprep.subr.mxu0 0.0
        %3537 = vmatpush1.msra.mxu0 0.0
        %3538 = vmatprep.subr.mxu0 0.0
        %3539 = vmatpush1.msra.mxu0 0.0
        %3540 = vmatprep.subr.mxu0 0.0
        %3541 = vmatpush1.msra.mxu0 0.0
        %3542 = vmatprep.subr.mxu0 0.0
        %3543 = vmatpush1.msra.mxu0 0.0
        %3544 = vmatprep.subr.mxu0 0.0
        %3545 = vmatpush1.msra.mxu0 0.0
        %3546 = vmatprep.subr.mxu0 0.0
        %3547 = vmatpush1.msra.mxu0 0.0
        %3548 = vmatprep.subr.mxu0 0.0
        %3549 = vmatpush1.msra.mxu0 0.0
        %3550 = vmatprep.subr.mxu0 0.0
        %3551 = vmatpush1.msra.mxu0 0.0
        %3552 = vmatprep.subr.mxu0 0.0
        %3553 = vmatpush1.msra.mxu0 0.0
        %3554 = vmatprep.subr.mxu0 0.0
        %3555 = vmatpush1.msra.mxu0 0.0
        %3556 = vmatprep.subr.mxu0 0.0
        %3557 = vmatpush1.msra.mxu0 0.0
        %3558 = vmatprep.subr.mxu0 0.0
        %3559 = vmatpush1.msra.mxu0 0.0
        %3560 = vmatprep.subr.mxu0 0.0
        %3561 = vmatpush1.msra.mxu0 %v2677
        %3562 = vmatprep.subr.mxu0 0.0
        %3563 = vmatpush1.msra.mxu0 %v2676
        %3564 = vmatprep.subr.mxu0 0.0
        %3565 = vmatpush1.msra.mxu0 %v2675
        %3566 = vmatprep.subr.mxu0 0.0
        %3567 = vmatpush1.msra.mxu0 %v2674
        %3568 = vmatprep.subr.mxu0 0.0
        %3569 = vmatpush2.msra.mxu0 0.0
        %3570 = vmatprep.subr.mxu0 0.0
        %3571 = vmatpush2.msra.mxu0 0.0
        %3572 = vmatprep.subr.mxu0 0.0
        %3573 = vmatpush2.msra.mxu0 0.0
        %3574 = vmatprep.subr.mxu0 0.0
        %3575 = vmatpush2.msra.mxu0 0.0
        %3576 = vmatprep.subr.mxu0 0.0
        %3577 = vmatpush2.msra.mxu0 0.0
        %3578 = vmatprep.subr.mxu0 0.0
        %3579 = vmatpush2.msra.mxu0 0.0
        %3580 = vmatprep.subr.mxu0 0.0
        %3581 = vmatpush2.msra.mxu0 0.0
        %3582 = vmatprep.subr.mxu0 0.0
        %3583 = vmatpush2.msra.mxu0 0.0
        %3584 = vmatprep.subr.mxu0 0.0
        %3585 = vmatpush2.msra.mxu0 0.0
        %3586 = vmatprep.subr.mxu0 0.0
        %3587 = vmatpush2.msra.mxu0 0.0
        %3588 = vmatprep.subr.mxu0 0.0
        %3589 = vmatpush2.msra.mxu0 0.0
        %3590 = vmatprep.subr.mxu0 0.0
        %3591 = vmatpush2.msra.mxu0 0.0
        %3592 = vmatprep.subr.mxu0 0.0
        %3593 = vmatpush2.msra.mxu0 0.0
        %3594 = vmatprep.subr.mxu0 0.0
        %3595 = vmatpush2.msra.mxu0 0.0
        %3596 = vmatprep.subr.mxu0 0.0
        %3597 = vmatpush2.msra.mxu0 0.0
        %3598 = vmatprep.subr.mxu0 0.0
        %3599 = vmatpush2.msra.mxu0 0.0
        %3600 = vmatprep.mubr.f32.mxu0 0.0
        %3601 = vmatmul.mubr.f32.gmra.mxu0 %v2764
        %v3602 = vpop.f32.mrf.mxu0
        %v3603 = vadd.f32 %v2750, %v3602
        %v3604 = vpop.f32.mrf.mxu0
        %3605 = vdwg.mxu0
        %v3607 = vsel %vm1442, %v2833, 0
        %v3610 = vsel %vm1442, %v3113, 0
        %3612 = vmatprep.subr.mxu0 0.0
        %3613 = vmatpush1.xpose.msra.mxu0 0.0
        %3614 = vmatprep.subr.mxu0 0.0
        %3615 = vmatpush1.xpose.msra.mxu0 0.0
        %3616 = vmatprep.subr.mxu0 0.0
        %3617 = vmatpush1.xpose.msra.mxu0 0.0
        %3618 = vmatprep.subr.mxu0 0.0
        %3619 = vmatpush1.xpose.msra.mxu0 0.0
        %3620 = vmatprep.subr.mxu0 0.0
        %3621 = vmatpush1.xpose.msra.mxu0 0.0
        %3622 = vmatprep.subr.mxu0 0.0
        %3623 = vmatpush1.xpose.msra.mxu0 0.0
        %3624 = vmatprep.subr.mxu0 0.0
        %3625 = vmatpush1.xpose.msra.mxu0 0.0
        %3626 = vmatprep.subr.mxu0 0.0
        %3627 = vmatpush1.xpose.msra.mxu0 0.0
        %3628 = vmatprep.subr.mxu0 0.0
        %3629 = vmatpush1.xpose.msra.mxu0 0.0
        %3630 = vmatprep.subr.mxu0 0.0
        %3631 = vmatpush1.xpose.msra.mxu0 0.0
        %3632 = vmatprep.subr.mxu0 0.0
        %3633 = vmatpush1.xpose.msra.mxu0 0.0
        %3634 = vmatprep.subr.mxu0 0.0
        %3635 = vmatpush1.xpose.msra.mxu0 0.0
        %3636 = vmatprep.subr.mxu0 0.0
        %3637 = vmatpush1.xpose.msra.mxu0 0.0
        %3638 = vmatprep.subr.mxu0 0.0
        %3639 = vmatpush1.xpose.msra.mxu0 0.0
        %3640 = vmatprep.subr.mxu0 0.0
        %3641 = vmatpush1.xpose.msra.mxu0 0.0
        %3642 = vmatprep.subr.mxu0 0.0
        %3643 = vmatpush1.xpose.msra.mxu0 %v3610
        %3644 = vmatprep.subr.mxu0 0.0
        %3645 = vmatpush2.xpose.msra.mxu0 0.0
        %3646 = vmatprep.subr.mxu0 0.0
        %3647 = vmatpush2.xpose.msra.mxu0 0.0
        %3648 = vmatprep.subr.mxu0 0.0
        %3649 = vmatpush2.xpose.msra.mxu0 0.0
        %3650 = vmatprep.subr.mxu0 0.0
        %3651 = vmatpush2.xpose.msra.mxu0 0.0
        %3652 = vmatprep.subr.mxu0 0.0
        %3653 = vmatpush2.xpose.msra.mxu0 0.0
        %3654 = vmatprep.subr.mxu0 0.0
        %3655 = vmatpush2.xpose.msra.mxu0 0.0
        %3656 = vmatprep.subr.mxu0 0.0
        %3657 = vmatpush2.xpose.msra.mxu0 0.0
        %3658 = vmatprep.subr.mxu0 0.0
        %3659 = vmatpush2.xpose.msra.mxu0 0.0
        %3660 = vmatprep.subr.mxu0 0.0
        %3661 = vmatpush2.xpose.msra.mxu0 0.0
        %3662 = vmatprep.subr.mxu0 0.0
        %3663 = vmatpush2.xpose.msra.mxu0 0.0
        %3664 = vmatprep.subr.mxu0 0.0
        %3665 = vmatpush2.xpose.msra.mxu0 0.0
        %3666 = vmatprep.subr.mxu0 0.0
        %3667 = vmatpush2.xpose.msra.mxu0 0.0
        %3668 = vmatprep.subr.mxu0 0.0
        %3669 = vmatpush2.xpose.msra.mxu0 0.0
        %3670 = vmatprep.subr.mxu0 0.0
        %3671 = vmatpush2.xpose.msra.mxu0 0.0
        %3672 = vmatprep.subr.mxu0 0.0
        %3673 = vmatpush2.xpose.msra.mxu0 0.0
        %3674 = vmatprep.subr.mxu0 0.0
        %3675 = vmatpush2.xpose.msra.mxu0 0.0
        %3676 = vmatprep.mubr.f32.mxu0 0.0
        %3677 = vmatmul.mubr.f32.gmra.mxu0 %v3607
        %v3678 = vpop.f32.mrf.mxu0
        %v3679 = vadd.f32 0.0, %v3678
        %v3680 = vpop.f32.mrf.mxu0
        %3681 = vdwg.mxu0
        %v3683 = vsel %vm1442, %v2903, 0
        %v3686 = vsel %vm1442, %v3183, 0
        %3688 = vmatprep.subr.mxu0 0.0
        %3689 = vmatpush1.xpose.msra.mxu0 0.0
        %3690 = vmatprep.subr.mxu0 0.0
        %3691 = vmatpush1.xpose.msra.mxu0 0.0
        %3692 = vmatprep.subr.mxu0 0.0
        %3693 = vmatpush1.xpose.msra.mxu0 0.0
        %3694 = vmatprep.subr.mxu0 0.0
        %3695 = vmatpush1.xpose.msra.mxu0 0.0
        %3696 = vmatprep.subr.mxu0 0.0
        %3697 = vmatpush1.xpose.msra.mxu0 0.0
        %3698 = vmatprep.subr.mxu0 0.0
        %3699 = vmatpush1.xpose.msra.mxu0 0.0
        %3700 = vmatprep.subr.mxu0 0.0
        %3701 = vmatpush1.xpose.msra.mxu0 0.0
        %3702 = vmatprep.subr.mxu0 0.0
        %3703 = vmatpush1.xpose.msra.mxu0 0.0
        %3704 = vmatprep.subr.mxu0 0.0
        %3705 = vmatpush1.xpose.msra.mxu0 0.0
        %3706 = vmatprep.subr.mxu0 0.0
        %3707 = vmatpush1.xpose.msra.mxu0 0.0
        %3708 = vmatprep.subr.mxu0 0.0
        %3709 = vmatpush1.xpose.msra.mxu0 0.0
        %3710 = vmatprep.subr.mxu0 0.0
        %3711 = vmatpush1.xpose.msra.mxu0 0.0
        %3712 = vmatprep.subr.mxu0 0.0
        %3713 = vmatpush1.xpose.msra.mxu0 0.0
        %3714 = vmatprep.subr.mxu0 0.0
        %3715 = vmatpush1.xpose.msra.mxu0 0.0
        %3716 = vmatprep.subr.mxu0 0.0
        %3717 = vmatpush1.xpose.msra.mxu0 0.0
        %3718 = vmatprep.subr.mxu0 0.0
        %3719 = vmatpush1.xpose.msra.mxu0 %v3686
        %3720 = vmatprep.subr.mxu0 0.0
        %3721 = vmatpush2.xpose.msra.mxu0 0.0
        %3722 = vmatprep.subr.mxu0 0.0
        %3723 = vmatpush2.xpose.msra.mxu0 0.0
        %3724 = vmatprep.subr.mxu0 0.0
        %3725 = vmatpush2.xpose.msra.mxu0 0.0
        %3726 = vmatprep.subr.mxu0 0.0
        %3727 = vmatpush2.xpose.msra.mxu0 0.0
        %3728 = vmatprep.subr.mxu0 0.0
        %3729 = vmatpush2.xpose.msra.mxu0 0.0
        %3730 = vmatprep.subr.mxu0 0.0
        %3731 = vmatpush2.xpose.msra.mxu0 0.0
        %3732 = vmatprep.subr.mxu0 0.0
        %3733 = vmatpush2.xpose.msra.mxu0 0.0
        %3734 = vmatprep.subr.mxu0 0.0
        %3735 = vmatpush2.xpose.msra.mxu0 0.0
        %3736 = vmatprep.subr.mxu0 0.0
        %3737 = vmatpush2.xpose.msra.mxu0 0.0
        %3738 = vmatprep.subr.mxu0 0.0
        %3739 = vmatpush2.xpose.msra.mxu0 0.0
        %3740 = vmatprep.subr.mxu0 0.0
        %3741 = vmatpush2.xpose.msra.mxu0 0.0
        %3742 = vmatprep.subr.mxu0 0.0
        %3743 = vmatpush2.xpose.msra.mxu0 0.0
        %3744 = vmatprep.subr.mxu0 0.0
        %3745 = vmatpush2.xpose.msra.mxu0 0.0
        %3746 = vmatprep.subr.mxu0 0.0
        %3747 = vmatpush2.xpose.msra.mxu0 0.0
        %3748 = vmatprep.subr.mxu0 0.0
        %3749 = vmatpush2.xpose.msra.mxu0 0.0
        %3750 = vmatprep.subr.mxu0 0.0
        %3751 = vmatpush2.xpose.msra.mxu0 0.0
        %3752 = vmatprep.mubr.f32.mxu0 0.0
        %3753 = vmatmul.mubr.f32.gmra.mxu0 %v3683
        %v3754 = vpop.f32.mrf.mxu0
        %v3755 = vadd.f32 0.0, %v3754
        %v3756 = vpop.f32.mrf.mxu0
        %3757 = vdwg.mxu0
        %v3759 = vsel %vm1442, %v2973, 0
        %v3762 = vsel %vm1442, %v3253, 0
        %3764 = vmatprep.subr.mxu0 0.0
        %3765 = vmatpush1.xpose.msra.mxu0 0.0
        %3766 = vmatprep.subr.mxu0 0.0
        %3767 = vmatpush1.xpose.msra.mxu0 0.0
        %3768 = vmatprep.subr.mxu0 0.0
        %3769 = vmatpush1.xpose.msra.mxu0 0.0
        %3770 = vmatprep.subr.mxu0 0.0
        %3771 = vmatpush1.xpose.msra.mxu0 0.0
        %3772 = vmatprep.subr.mxu0 0.0
        %3773 = vmatpush1.xpose.msra.mxu0 0.0
        %3774 = vmatprep.subr.mxu0 0.0
        %3775 = vmatpush1.xpose.msra.mxu0 0.0
        %3776 = vmatprep.subr.mxu0 0.0
        %3777 = vmatpush1.xpose.msra.mxu0 0.0
        %3778 = vmatprep.subr.mxu0 0.0
        %3779 = vmatpush1.xpose.msra.mxu0 0.0
        %3780 = vmatprep.subr.mxu0 0.0
        %3781 = vmatpush1.xpose.msra.mxu0 0.0
        %3782 = vmatprep.subr.mxu0 0.0
        %3783 = vmatpush1.xpose.msra.mxu0 0.0
        %3784 = vmatprep.subr.mxu0 0.0
        %3785 = vmatpush1.xpose.msra.mxu0 0.0
        %3786 = vmatprep.subr.mxu0 0.0
        %3787 = vmatpush1.xpose.msra.mxu0 0.0
        %3788 = vmatprep.subr.mxu0 0.0
        %3789 = vmatpush1.xpose.msra.mxu0 0.0
        %3790 = vmatprep.subr.mxu0 0.0
        %3791 = vmatpush1.xpose.msra.mxu0 0.0
        %3792 = vmatprep.subr.mxu0 0.0
        %3793 = vmatpush1.xpose.msra.mxu0 0.0
        %3794 = vmatprep.subr.mxu0 0.0
        %3795 = vmatpush1.xpose.msra.mxu0 %v3762
        %3796 = vmatprep.subr.mxu0 0.0
        %3797 = vmatpush2.xpose.msra.mxu0 0.0
        %3798 = vmatprep.subr.mxu0 0.0
        %3799 = vmatpush2.xpose.msra.mxu0 0.0
        %3800 = vmatprep.subr.mxu0 0.0
        %3801 = vmatpush2.xpose.msra.mxu0 0.0
        %3802 = vmatprep.subr.mxu0 0.0
        %3803 = vmatpush2.xpose.msra.mxu0 0.0
        %3804 = vmatprep.subr.mxu0 0.0
        %3805 = vmatpush2.xpose.msra.mxu0 0.0
        %3806 = vmatprep.subr.mxu0 0.0
        %3807 = vmatpush2.xpose.msra.mxu0 0.0
        %3808 = vmatprep.subr.mxu0 0.0
        %3809 = vmatpush2.xpose.msra.mxu0 0.0
        %3810 = vmatprep.subr.mxu0 0.0
        %3811 = vmatpush2.xpose.msra.mxu0 0.0
        %3812 = vmatprep.subr.mxu0 0.0
        %3813 = vmatpush2.xpose.msra.mxu0 0.0
        %3814 = vmatprep.subr.mxu0 0.0
        %3815 = vmatpush2.xpose.msra.mxu0 0.0
        %3816 = vmatprep.subr.mxu0 0.0
        %3817 = vmatpush2.xpose.msra.mxu0 0.0
        %3818 = vmatprep.subr.mxu0 0.0
        %3819 = vmatpush2.xpose.msra.mxu0 0.0
        %3820 = vmatprep.subr.mxu0 0.0
        %3821 = vmatpush2.xpose.msra.mxu0 0.0
        %3822 = vmatprep.subr.mxu0 0.0
        %3823 = vmatpush2.xpose.msra.mxu0 0.0
        %3824 = vmatprep.subr.mxu0 0.0
        %3825 = vmatpush2.xpose.msra.mxu0 0.0
        %3826 = vmatprep.subr.mxu0 0.0
        %3827 = vmatpush2.xpose.msra.mxu0 0.0
        %3828 = vmatprep.mubr.f32.mxu0 0.0
        %3829 = vmatmul.mubr.f32.gmra.mxu0 %v3759
        %v3830 = vpop.f32.mrf.mxu0
        %v3831 = vadd.f32 0.0, %v3830
        %v3832 = vpop.f32.mrf.mxu0
        %3833 = vdwg.mxu0
        %v3835 = vsel %vm1442, %v3043, 0
        %v3838 = vsel %vm1442, %v3323, 0
        %3840 = vmatprep.subr.mxu0 0.0
        %3841 = vmatpush1.xpose.msra.mxu0 0.0
        %3842 = vmatprep.subr.mxu0 0.0
        %3843 = vmatpush1.xpose.msra.mxu0 0.0
        %3844 = vmatprep.subr.mxu0 0.0
        %3845 = vmatpush1.xpose.msra.mxu0 0.0
        %3846 = vmatprep.subr.mxu0 0.0
        %3847 = vmatpush1.xpose.msra.mxu0 0.0
        %3848 = vmatprep.subr.mxu0 0.0
        %3849 = vmatpush1.xpose.msra.mxu0 0.0
        %3850 = vmatprep.subr.mxu0 0.0
        %3851 = vmatpush1.xpose.msra.mxu0 0.0
        %3852 = vmatprep.subr.mxu0 0.0
        %3853 = vmatpush1.xpose.msra.mxu0 0.0
        %3854 = vmatprep.subr.mxu0 0.0
        %3855 = vmatpush1.xpose.msra.mxu0 0.0
        %3856 = vmatprep.subr.mxu0 0.0
        %3857 = vmatpush1.xpose.msra.mxu0 0.0
        %3858 = vmatprep.subr.mxu0 0.0
        %3859 = vmatpush1.xpose.msra.mxu0 0.0
        %3860 = vmatprep.subr.mxu0 0.0
        %3861 = vmatpush1.xpose.msra.mxu0 0.0
        %3862 = vmatprep.subr.mxu0 0.0
        %3863 = vmatpush1.xpose.msra.mxu0 0.0
        %3864 = vmatprep.subr.mxu0 0.0
        %3865 = vmatpush1.xpose.msra.mxu0 0.0
        %3866 = vmatprep.subr.mxu0 0.0
        %3867 = vmatpush1.xpose.msra.mxu0 0.0
        %3868 = vmatprep.subr.mxu0 0.0
        %3869 = vmatpush1.xpose.msra.mxu0 0.0
        %3870 = vmatprep.subr.mxu0 0.0
        %3871 = vmatpush1.xpose.msra.mxu0 %v3838
        %3872 = vmatprep.subr.mxu0 0.0
        %3873 = vmatpush2.xpose.msra.mxu0 0.0
        %3874 = vmatprep.subr.mxu0 0.0
        %3875 = vmatpush2.xpose.msra.mxu0 0.0
        %3876 = vmatprep.subr.mxu0 0.0
        %3877 = vmatpush2.xpose.msra.mxu0 0.0
        %3878 = vmatprep.subr.mxu0 0.0
        %3879 = vmatpush2.xpose.msra.mxu0 0.0
        %3880 = vmatprep.subr.mxu0 0.0
        %3881 = vmatpush2.xpose.msra.mxu0 0.0
        %3882 = vmatprep.subr.mxu0 0.0
        %3883 = vmatpush2.xpose.msra.mxu0 0.0
        %3884 = vmatprep.subr.mxu0 0.0
        %3885 = vmatpush2.xpose.msra.mxu0 0.0
        %3886 = vmatprep.subr.mxu0 0.0
        %3887 = vmatpush2.xpose.msra.mxu0 0.0
        %3888 = vmatprep.subr.mxu0 0.0
        %3889 = vmatpush2.xpose.msra.mxu0 0.0
        %3890 = vmatprep.subr.mxu0 0.0
        %3891 = vmatpush2.xpose.msra.mxu0 0.0
        %3892 = vmatprep.subr.mxu0 0.0
        %3893 = vmatpush2.xpose.msra.mxu0 0.0
        %3894 = vmatprep.subr.mxu0 0.0
        %3895 = vmatpush2.xpose.msra.mxu0 0.0
        %3896 = vmatprep.subr.mxu0 0.0
        %3897 = vmatpush2.xpose.msra.mxu0 0.0
        %3898 = vmatprep.subr.mxu0 0.0
        %3899 = vmatpush2.xpose.msra.mxu0 0.0
        %3900 = vmatprep.subr.mxu0 0.0
        %3901 = vmatpush2.xpose.msra.mxu0 0.0
        %3902 = vmatprep.subr.mxu0 0.0
        %3903 = vmatpush2.xpose.msra.mxu0 0.0
        %3904 = vmatprep.mubr.f32.mxu0 0.0
        %3905 = vmatmul.mubr.f32.gmra.mxu0 %v3835
        %v3906 = vpop.f32.mrf.mxu0
        %v3907 = vadd.f32 0.0, %v3906
        %v3908 = vpop.f32.mrf.mxu0
        %3909 = vdwg.mxu0
        %v3910 = vsel %vm1442, %v3679, -inf
        %3911 = vmax.xlane.f32.xlu0 %v3910
        %v3912 = vpop.xlane.xlu0 %3911
        %v3913 = vsel %vm1442, %v3755, -inf
        %3914 = vmax.xlane.f32.xlu0 %v3913
        %v3915 = vpop.xlane.xlu0 %3914
        %v3916 = vsel %vm1442, %v3831, -inf
        %3917 = vmax.xlane.f32.xlu0 %v3916
        %v3918 = vpop.xlane.xlu0 %3917
        %v3919 = vsel %vm1442, %v3907, -inf
        %3920 = vmax.xlane.f32.xlu0 %v3919
        %v3921 = vpop.xlane.xlu0 %3920
        %v3922 = vsub.f32 %v3679, %v3912
        %v3923 = vsub.f32 %v3755, %v3915
        %v3924 = vsub.f32 %v3831, %v3918
        %v3925 = vsub.f32 %v3907, %v3921
        %v3926 = vmul.f32 %v3922, 1.442695
        %v3927 = vpow.pop %v3926
        %v3928 = vmul.f32 %v3923, 1.442695
        %v3929 = vpow.pop %v3928
        %v3930 = vmul.f32 %v3924, 1.442695
        %v3931 = vpow.pop %v3930
        %v3932 = vmul.f32 %v3925, 1.442695
        %v3933 = vpow.pop %v3932
        %v3934 = vsel %vm1442, %v3927, 0.0
        %3935 = vadd.xlane.f32.xlu0 %v3934
        %v3936 = vpop.xlane.xlu0 %3935
        %v3937 = vsel %vm1442, %v3929, 0.0
        %3938 = vadd.xlane.f32.xlu0 %v3937
        %v3939 = vpop.xlane.xlu0 %3938
        %v3940 = vsel %vm1442, %v3931, 0.0
        %3941 = vadd.xlane.f32.xlu0 %v3940
        %v3942 = vpop.xlane.xlu0 %3941
        %v3943 = vsel %vm1442, %v3933, 0.0
        %3944 = vadd.xlane.f32.xlu0 %v3943
        %v3945 = vpop.xlane.xlu0 %3944
        %v3946 = vrcp.pop %v3936
        %v3947 = vrcp.pop %v3939
        %v3948 = vrcp.pop %v3942
        %v3949 = vrcp.pop %v3945
        %v3950 = vmul.f32 %v3927, %v3946
        %v3951 = vmul.f32 %v3929, %v3947
        %v3952 = vmul.f32 %v3931, %v3948
        %v3953 = vmul.f32 %v3933, %v3949
        %v3955 = vsel %vm1442, %v3950, 0
        %3957 = vmatprep.subr.mxu0 0.0
        %3958 = vmatpush1.msra.mxu0 0.0
        %3959 = vmatprep.subr.mxu0 0.0
        %3960 = vmatpush1.msra.mxu0 0.0
        %3961 = vmatprep.subr.mxu0 0.0
        %3962 = vmatpush1.msra.mxu0 0.0
        %3963 = vmatprep.subr.mxu0 0.0
        %3964 = vmatpush1.msra.mxu0 0.0
        %3965 = vmatprep.subr.mxu0 0.0
        %3966 = vmatpush1.msra.mxu0 0.0
        %3967 = vmatprep.subr.mxu0 0.0
        %3968 = vmatpush1.msra.mxu0 0.0
        %3969 = vmatprep.subr.mxu0 0.0
        %3970 = vmatpush1.msra.mxu0 0.0
        %3971 = vmatprep.subr.mxu0 0.0
        %3972 = vmatpush1.msra.mxu0 0.0
        %3973 = vmatprep.subr.mxu0 0.0
        %3974 = vmatpush1.msra.mxu0 0.0
        %3975 = vmatprep.subr.mxu0 0.0
        %3976 = vmatpush1.msra.mxu0 0.0
        %3977 = vmatprep.subr.mxu0 0.0
        %3978 = vmatpush1.msra.mxu0 0.0
        %3979 = vmatprep.subr.mxu0 0.0
        %3980 = vmatpush1.msra.mxu0 0.0
        %3981 = vmatprep.subr.mxu0 0.0
        %3982 = vmatpush1.msra.mxu0 0.0
        %3983 = vmatprep.subr.mxu0 0.0
        %3984 = vmatpush1.msra.mxu0 0.0
        %3985 = vmatprep.subr.mxu0 0.0
        %3986 = vmatpush1.msra.mxu0 0.0
        %3987 = vmatprep.subr.mxu0 0.0
        %3988 = vmatpush1.msra.mxu0 %v3393
        %3989 = vmatprep.subr.mxu0 0.0
        %3990 = vmatpush2.msra.mxu0 0.0
        %3991 = vmatprep.subr.mxu0 0.0
        %3992 = vmatpush2.msra.mxu0 0.0
        %3993 = vmatprep.subr.mxu0 0.0
        %3994 = vmatpush2.msra.mxu0 0.0
        %3995 = vmatprep.subr.mxu0 0.0
        %3996 = vmatpush2.msra.mxu0 0.0
        %3997 = vmatprep.subr.mxu0 0.0
        %3998 = vmatpush2.msra.mxu0 0.0
        %3999 = vmatprep.subr.mxu0 0.0
        %4000 = vmatpush2.msra.mxu0 0.0
        %4001 = vmatprep.subr.mxu0 0.0
        %4002 = vmatpush2.msra.mxu0 0.0
        %4003 = vmatprep.subr.mxu0 0.0
        %4004 = vmatpush2.msra.mxu0 0.0
        %4005 = vmatprep.subr.mxu0 0.0
        %4006 = vmatpush2.msra.mxu0 0.0
        %4007 = vmatprep.subr.mxu0 0.0
        %4008 = vmatpush2.msra.mxu0 0.0
        %4009 = vmatprep.subr.mxu0 0.0
        %4010 = vmatpush2.msra.mxu0 0.0
        %4011 = vmatprep.subr.mxu0 0.0
        %4012 = vmatpush2.msra.mxu0 0.0
        %4013 = vmatprep.subr.mxu0 0.0
        %4014 = vmatpush2.msra.mxu0 0.0
        %4015 = vmatprep.subr.mxu0 0.0
        %4016 = vmatpush2.msra.mxu0 0.0
        %4017 = vmatprep.subr.mxu0 0.0
        %4018 = vmatpush2.msra.mxu0 0.0
        %4019 = vmatprep.subr.mxu0 0.0
        %4020 = vmatpush2.msra.mxu0 0.0
        %4021 = vmatprep.mubr.f32.mxu0 0.0
        %4022 = vmatmul.mubr.f32.gmra.mxu0 %v3955
        %v4023 = vpop.f32.mrf.mxu0
        %v4024 = vadd.f32 0.0, %v4023
        %v4025 = vpop.f32.mrf.mxu0
        %4026 = vdwg.mxu0
        %v4028 = vsel %vm1442, %v3951, 0
        %4030 = vmatprep.subr.mxu0 0.0
        %4031 = vmatpush1.msra.mxu0 0.0
        %4032 = vmatprep.subr.mxu0 0.0
        %4033 = vmatpush1.msra.mxu0 0.0
        %4034 = vmatprep.subr.mxu0 0.0
        %4035 = vmatpush1.msra.mxu0 0.0
        %4036 = vmatprep.subr.mxu0 0.0
        %4037 = vmatpush1.msra.mxu0 0.0
        %4038 = vmatprep.subr.mxu0 0.0
        %4039 = vmatpush1.msra.mxu0 0.0
        %4040 = vmatprep.subr.mxu0 0.0
        %4041 = vmatpush1.msra.mxu0 0.0
        %4042 = vmatprep.subr.mxu0 0.0
        %4043 = vmatpush1.msra.mxu0 0.0
        %4044 = vmatprep.subr.mxu0 0.0
        %4045 = vmatpush1.msra.mxu0 0.0
        %4046 = vmatprep.subr.mxu0 0.0
        %4047 = vmatpush1.msra.mxu0 0.0
        %4048 = vmatprep.subr.mxu0 0.0
        %4049 = vmatpush1.msra.mxu0 0.0
        %4050 = vmatprep.subr.mxu0 0.0
        %4051 = vmatpush1.msra.mxu0 0.0
        %4052 = vmatprep.subr.mxu0 0.0
        %4053 = vmatpush1.msra.mxu0 0.0
        %4054 = vmatprep.subr.mxu0 0.0
        %4055 = vmatpush1.msra.mxu0 0.0
        %4056 = vmatprep.subr.mxu0 0.0
        %4057 = vmatpush1.msra.mxu0 0.0
        %4058 = vmatprep.subr.mxu0 0.0
        %4059 = vmatpush1.msra.mxu0 0.0
        %4060 = vmatprep.subr.mxu0 0.0
        %4061 = vmatpush1.msra.mxu0 %v3463
        %4062 = vmatprep.subr.mxu0 0.0
        %4063 = vmatpush2.msra.mxu0 0.0
        %4064 = vmatprep.subr.mxu0 0.0
        %4065 = vmatpush2.msra.mxu0 0.0
        %4066 = vmatprep.subr.mxu0 0.0
        %4067 = vmatpush2.msra.mxu0 0.0
        %4068 = vmatprep.subr.mxu0 0.0
        %4069 = vmatpush2.msra.mxu0 0.0
        %4070 = vmatprep.subr.mxu0 0.0
        %4071 = vmatpush2.msra.mxu0 0.0
        %4072 = vmatprep.subr.mxu0 0.0
        %4073 = vmatpush2.msra.mxu0 0.0
        %4074 = vmatprep.subr.mxu0 0.0
        %4075 = vmatpush2.msra.mxu0 0.0
        %4076 = vmatprep.subr.mxu0 0.0
        %4077 = vmatpush2.msra.mxu0 0.0
        %4078 = vmatprep.subr.mxu0 0.0
        %4079 = vmatpush2.msra.mxu0 0.0
        %4080 = vmatprep.subr.mxu0 0.0
        %4081 = vmatpush2.msra.mxu0 0.0
        %4082 = vmatprep.subr.mxu0 0.0
        %4083 = vmatpush2.msra.mxu0 0.0
        %4084 = vmatprep.subr.mxu0 0.0
        %4085 = vmatpush2.msra.mxu0 0.0
        %4086 = vmatprep.subr.mxu0 0.0
        %4087 = vmatpush2.msra.mxu0 0.0
        %4088 = vmatprep.subr.mxu0 0.0
        %4089 = vmatpush2.msra.mxu0 0.0
        %4090 = vmatprep.subr.mxu0 0.0
        %4091 = vmatpush2.msra.mxu0 0.0
        %4092 = vmatprep.subr.mxu0 0.0
        %4093 = vmatpush2.msra.mxu0 0.0
        %4094 = vmatprep.mubr.f32.mxu0 0.0
        %4095 = vmatmul.mubr.f32.gmra.mxu0 %v4028
        %v4096 = vpop.f32.mrf.mxu0
        %v4097 = vadd.f32 0.0, %v4096
        %v4098 = vpop.f32.mrf.mxu0
        %4099 = vdwg.mxu0
        %v4101 = vsel %vm1442, %v3952, 0
        %4103 = vmatprep.subr.mxu0 0.0
        %4104 = vmatpush1.msra.mxu0 0.0
        %4105 = vmatprep.subr.mxu0 0.0
        %4106 = vmatpush1.msra.mxu0 0.0
        %4107 = vmatprep.subr.mxu0 0.0
        %4108 = vmatpush1.msra.mxu0 0.0
        %4109 = vmatprep.subr.mxu0 0.0
        %4110 = vmatpush1.msra.mxu0 0.0
        %4111 = vmatprep.subr.mxu0 0.0
        %4112 = vmatpush1.msra.mxu0 0.0
        %4113 = vmatprep.subr.mxu0 0.0
        %4114 = vmatpush1.msra.mxu0 0.0
        %4115 = vmatprep.subr.mxu0 0.0
        %4116 = vmatpush1.msra.mxu0 0.0
        %4117 = vmatprep.subr.mxu0 0.0
        %4118 = vmatpush1.msra.mxu0 0.0
        %4119 = vmatprep.subr.mxu0 0.0
        %4120 = vmatpush1.msra.mxu0 0.0
        %4121 = vmatprep.subr.mxu0 0.0
        %4122 = vmatpush1.msra.mxu0 0.0
        %4123 = vmatprep.subr.mxu0 0.0
        %4124 = vmatpush1.msra.mxu0 0.0
        %4125 = vmatprep.subr.mxu0 0.0
        %4126 = vmatpush1.msra.mxu0 0.0
        %4127 = vmatprep.subr.mxu0 0.0
        %4128 = vmatpush1.msra.mxu0 0.0
        %4129 = vmatprep.subr.mxu0 0.0
        %4130 = vmatpush1.msra.mxu0 0.0
        %4131 = vmatprep.subr.mxu0 0.0
        %4132 = vmatpush1.msra.mxu0 0.0
        %4133 = vmatprep.subr.mxu0 0.0
        %4134 = vmatpush1.msra.mxu0 %v3533
        %4135 = vmatprep.subr.mxu0 0.0
        %4136 = vmatpush2.msra.mxu0 0.0
        %4137 = vmatprep.subr.mxu0 0.0
        %4138 = vmatpush2.msra.mxu0 0.0
        %4139 = vmatprep.subr.mxu0 0.0
        %4140 = vmatpush2.msra.mxu0 0.0
        %4141 = vmatprep.subr.mxu0 0.0
        %4142 = vmatpush2.msra.mxu0 0.0
        %4143 = vmatprep.subr.mxu0 0.0
        %4144 = vmatpush2.msra.mxu0 0.0
        %4145 = vmatprep.subr.mxu0 0.0
        %4146 = vmatpush2.msra.mxu0 0.0
        %4147 = vmatprep.subr.mxu0 0.0
        %4148 = vmatpush2.msra.mxu0 0.0
        %4149 = vmatprep.subr.mxu0 0.0
        %4150 = vmatpush2.msra.mxu0 0.0
        %4151 = vmatprep.subr.mxu0 0.0
        %4152 = vmatpush2.msra.mxu0 0.0
        %4153 = vmatprep.subr.mxu0 0.0
        %4154 = vmatpush2.msra.mxu0 0.0
        %4155 = vmatprep.subr.mxu0 0.0
        %4156 = vmatpush2.msra.mxu0 0.0
        %4157 = vmatprep.subr.mxu0 0.0
        %4158 = vmatpush2.msra.mxu0 0.0
        %4159 = vmatprep.subr.mxu0 0.0
        %4160 = vmatpush2.msra.mxu0 0.0
        %4161 = vmatprep.subr.mxu0 0.0
        %4162 = vmatpush2.msra.mxu0 0.0
        %4163 = vmatprep.subr.mxu0 0.0
        %4164 = vmatpush2.msra.mxu0 0.0
        %4165 = vmatprep.subr.mxu0 0.0
        %4166 = vmatpush2.msra.mxu0 0.0
        %4167 = vmatprep.mubr.f32.mxu0 0.0
        %4168 = vmatmul.mubr.f32.gmra.mxu0 %v4101
        %v4169 = vpop.f32.mrf.mxu0
        %v4170 = vadd.f32 0.0, %v4169
        %v4171 = vpop.f32.mrf.mxu0
        %4172 = vdwg.mxu0
        %v4174 = vsel %vm1442, %v3953, 0
        %4176 = vmatprep.subr.mxu0 0.0
        %4177 = vmatpush1.msra.mxu0 0.0
        %4178 = vmatprep.subr.mxu0 0.0
        %4179 = vmatpush1.msra.mxu0 0.0
        %4180 = vmatprep.subr.mxu0 0.0
        %4181 = vmatpush1.msra.mxu0 0.0
        %4182 = vmatprep.subr.mxu0 0.0
        %4183 = vmatpush1.msra.mxu0 0.0
        %4184 = vmatprep.subr.mxu0 0.0
        %4185 = vmatpush1.msra.mxu0 0.0
        %4186 = vmatprep.subr.mxu0 0.0
        %4187 = vmatpush1.msra.mxu0 0.0
        %4188 = vmatprep.subr.mxu0 0.0
        %4189 = vmatpush1.msra.mxu0 0.0
        %4190 = vmatprep.subr.mxu0 0.0
        %4191 = vmatpush1.msra.mxu0 0.0
        %4192 = vmatprep.subr.mxu0 0.0
        %4193 = vmatpush1.msra.mxu0 0.0
        %4194 = vmatprep.subr.mxu0 0.0
        %4195 = vmatpush1.msra.mxu0 0.0
        %4196 = vmatprep.subr.mxu0 0.0
        %4197 = vmatpush1.msra.mxu0 0.0
        %4198 = vmatprep.subr.mxu0 0.0
        %4199 = vmatpush1.msra.mxu0 0.0
        %4200 = vmatprep.subr.mxu0 0.0
        %4201 = vmatpush1.msra.mxu0 0.0
        %4202 = vmatprep.subr.mxu0 0.0
        %4203 = vmatpush1.msra.mxu0 0.0
        %4204 = vmatprep.subr.mxu0 0.0
        %4205 = vmatpush1.msra.mxu0 0.0
        %4206 = vmatprep.subr.mxu0 0.0
        %4207 = vmatpush1.msra.mxu0 %v3603
        %4208 = vmatprep.subr.mxu0 0.0
        %4209 = vmatpush2.msra.mxu0 0.0
        %4210 = vmatprep.subr.mxu0 0.0
        %4211 = vmatpush2.msra.mxu0 0.0
        %4212 = vmatprep.subr.mxu0 0.0
        %4213 = vmatpush2.msra.mxu0 0.0
        %4214 = vmatprep.subr.mxu0 0.0
        %4215 = vmatpush2.msra.mxu0 0.0
        %4216 = vmatprep.subr.mxu0 0.0
        %4217 = vmatpush2.msra.mxu0 0.0
        %4218 = vmatprep.subr.mxu0 0.0
        %4219 = vmatpush2.msra.mxu0 0.0
        %4220 = vmatprep.subr.mxu0 0.0
        %4221 = vmatpush2.msra.mxu0 0.0
        %4222 = vmatprep.subr.mxu0 0.0
        %4223 = vmatpush2.msra.mxu0 0.0
        %4224 = vmatprep.subr.mxu0 0.0
        %4225 = vmatpush2.msra.mxu0 0.0
        %4226 = vmatprep.subr.mxu0 0.0
        %4227 = vmatpush2.msra.mxu0 0.0
        %4228 = vmatprep.subr.mxu0 0.0
        %4229 = vmatpush2.msra.mxu0 0.0
        %4230 = vmatprep.subr.mxu0 0.0
        %4231 = vmatpush2.msra.mxu0 0.0
        %4232 = vmatprep.subr.mxu0 0.0
        %4233 = vmatpush2.msra.mxu0 0.0
        %4234 = vmatprep.subr.mxu0 0.0
        %4235 = vmatpush2.msra.mxu0 0.0
        %4236 = vmatprep.subr.mxu0 0.0
        %4237 = vmatpush2.msra.mxu0 0.0
        %4238 = vmatprep.subr.mxu0 0.0
        %4239 = vmatpush2.msra.mxu0 0.0
        %4240 = vmatprep.mubr.f32.mxu0 0.0
        %4241 = vmatmul.mubr.f32.gmra.mxu0 %v4174
        %v4242 = vpop.f32.mrf.mxu0
        %v4243 = vadd.f32 0.0, %v4242
        %v4244 = vpop.f32.mrf.mxu0
        %4245 = vdwg.mxu0
        %s4246 = scalar_lea.vmem %s4, 32
        %v4247 = vld [vmem:[%s4246] sm:$0xff]
        %v4248 = vld [vmem:[%s4246 + $0x8] sm:$0xff]
        %v4249 = vld [vmem:[%s4246 + $0x10] sm:$0xff]
        %v4250 = vld [vmem:[%s4246 + $0x18] sm:$0xff]
        %v4252 = vsel %vm1442, %v4024, 0
        %4254 = vmatprep.subr.mxu0 0.0
        %4255 = vmatpush1.msra.mxu0 0.0
        %4256 = vmatprep.subr.mxu0 0.0
        %4257 = vmatpush1.msra.mxu0 0.0
        %4258 = vmatprep.subr.mxu0 0.0
        %4259 = vmatpush1.msra.mxu0 0.0
        %4260 = vmatprep.subr.mxu0 0.0
        %4261 = vmatpush1.msra.mxu0 0.0
        %4262 = vmatprep.subr.mxu0 0.0
        %4263 = vmatpush1.msra.mxu0 0.0
        %4264 = vmatprep.subr.mxu0 0.0
        %4265 = vmatpush1.msra.mxu0 0.0
        %4266 = vmatprep.subr.mxu0 0.0
        %4267 = vmatpush1.msra.mxu0 0.0
        %4268 = vmatprep.subr.mxu0 0.0
        %4269 = vmatpush1.msra.mxu0 0.0
        %4270 = vmatprep.subr.mxu0 0.0
        %4271 = vmatpush1.msra.mxu0 0.0
        %4272 = vmatprep.subr.mxu0 0.0
        %4273 = vmatpush1.msra.mxu0 0.0
        %4274 = vmatprep.subr.mxu0 0.0
        %4275 = vmatpush1.msra.mxu0 0.0
        %4276 = vmatprep.subr.mxu0 0.0
        %4277 = vmatpush1.msra.mxu0 0.0
        %4278 = vmatprep.subr.mxu0 0.0
        %4279 = vmatpush1.msra.mxu0 0.0
        %4280 = vmatprep.subr.mxu0 0.0
        %4281 = vmatpush1.msra.mxu0 0.0
        %4282 = vmatprep.subr.mxu0 0.0
        %4283 = vmatpush1.msra.mxu0 0.0
        %4284 = vmatprep.subr.mxu0 0.0
        %4285 = vmatpush1.msra.mxu0 %v4247
        %4286 = vmatprep.subr.mxu0 0.0
        %4287 = vmatpush2.msra.mxu0 0.0
        %4288 = vmatprep.subr.mxu0 0.0
        %4289 = vmatpush2.msra.mxu0 0.0
        %4290 = vmatprep.subr.mxu0 0.0
        %4291 = vmatpush2.msra.mxu0 0.0
        %4292 = vmatprep.subr.mxu0 0.0
        %4293 = vmatpush2.msra.mxu0 0.0
        %4294 = vmatprep.subr.mxu0 0.0
        %4295 = vmatpush2.msra.mxu0 0.0
        %4296 = vmatprep.subr.mxu0 0.0
        %4297 = vmatpush2.msra.mxu0 0.0
        %4298 = vmatprep.subr.mxu0 0.0
        %4299 = vmatpush2.msra.mxu0 0.0
        %4300 = vmatprep.subr.mxu0 0.0
        %4301 = vmatpush2.msra.mxu0 0.0
        %4302 = vmatprep.subr.mxu0 0.0
        %4303 = vmatpush2.msra.mxu0 0.0
        %4304 = vmatprep.subr.mxu0 0.0
        %4305 = vmatpush2.msra.mxu0 0.0
        %4306 = vmatprep.subr.mxu0 0.0
        %4307 = vmatpush2.msra.mxu0 0.0
        %4308 = vmatprep.subr.mxu0 0.0
        %4309 = vmatpush2.msra.mxu0 0.0
        %4310 = vmatprep.subr.mxu0 0.0
        %4311 = vmatpush2.msra.mxu0 0.0
        %4312 = vmatprep.subr.mxu0 0.0
        %4313 = vmatpush2.msra.mxu0 0.0
        %4314 = vmatprep.subr.mxu0 0.0
        %4315 = vmatpush2.msra.mxu0 0.0
        %4316 = vmatprep.subr.mxu0 0.0
        %4317 = vmatpush2.msra.mxu0 0.0
        %4318 = vmatprep.mubr.f32.mxu0 0.0
        %4319 = vmatmul.mubr.f32.gmra.mxu0 %v4252
        %v4320 = vpop.f32.mrf.mxu0
        %v4321 = vadd.f32 0.0, %v4320
        %v4322 = vpop.f32.mrf.mxu0
        %4323 = vdwg.mxu0
        %v4325 = vsel %vm1442, %v4097, 0
        %4327 = vmatprep.subr.mxu0 0.0
        %4328 = vmatpush1.msra.mxu0 0.0
        %4329 = vmatprep.subr.mxu0 0.0
        %4330 = vmatpush1.msra.mxu0 0.0
        %4331 = vmatprep.subr.mxu0 0.0
        %4332 = vmatpush1.msra.mxu0 0.0
        %4333 = vmatprep.subr.mxu0 0.0
        %4334 = vmatpush1.msra.mxu0 0.0
        %4335 = vmatprep.subr.mxu0 0.0
        %4336 = vmatpush1.msra.mxu0 0.0
        %4337 = vmatprep.subr.mxu0 0.0
        %4338 = vmatpush1.msra.mxu0 0.0
        %4339 = vmatprep.subr.mxu0 0.0
        %4340 = vmatpush1.msra.mxu0 0.0
        %4341 = vmatprep.subr.mxu0 0.0
        %4342 = vmatpush1.msra.mxu0 0.0
        %4343 = vmatprep.subr.mxu0 0.0
        %4344 = vmatpush1.msra.mxu0 0.0
        %4345 = vmatprep.subr.mxu0 0.0
        %4346 = vmatpush1.msra.mxu0 0.0
        %4347 = vmatprep.subr.mxu0 0.0
        %4348 = vmatpush1.msra.mxu0 0.0
        %4349 = vmatprep.subr.mxu0 0.0
        %4350 = vmatpush1.msra.mxu0 0.0
        %4351 = vmatprep.subr.mxu0 0.0
        %4352 = vmatpush1.msra.mxu0 0.0
        %4353 = vmatprep.subr.mxu0 0.0
        %4354 = vmatpush1.msra.mxu0 0.0
        %4355 = vmatprep.subr.mxu0 0.0
        %4356 = vmatpush1.msra.mxu0 0.0
        %4357 = vmatprep.subr.mxu0 0.0
        %4358 = vmatpush1.msra.mxu0 %v4248
        %4359 = vmatprep.subr.mxu0 0.0
        %4360 = vmatpush2.msra.mxu0 0.0
        %4361 = vmatprep.subr.mxu0 0.0
        %4362 = vmatpush2.msra.mxu0 0.0
        %4363 = vmatprep.subr.mxu0 0.0
        %4364 = vmatpush2.msra.mxu0 0.0
        %4365 = vmatprep.subr.mxu0 0.0
        %4366 = vmatpush2.msra.mxu0 0.0
        %4367 = vmatprep.subr.mxu0 0.0
        %4368 = vmatpush2.msra.mxu0 0.0
        %4369 = vmatprep.subr.mxu0 0.0
        %4370 = vmatpush2.msra.mxu0 0.0
        %4371 = vmatprep.subr.mxu0 0.0
        %4372 = vmatpush2.msra.mxu0 0.0
        %4373 = vmatprep.subr.mxu0 0.0
        %4374 = vmatpush2.msra.mxu0 0.0
        %4375 = vmatprep.subr.mxu0 0.0
        %4376 = vmatpush2.msra.mxu0 0.0
        %4377 = vmatprep.subr.mxu0 0.0
        %4378 = vmatpush2.msra.mxu0 0.0
        %4379 = vmatprep.subr.mxu0 0.0
        %4380 = vmatpush2.msra.mxu0 0.0
        %4381 = vmatprep.subr.mxu0 0.0
        %4382 = vmatpush2.msra.mxu0 0.0
        %4383 = vmatprep.subr.mxu0 0.0
        %4384 = vmatpush2.msra.mxu0 0.0
        %4385 = vmatprep.subr.mxu0 0.0
        %4386 = vmatpush2.msra.mxu0 0.0
        %4387 = vmatprep.subr.mxu0 0.0
        %4388 = vmatpush2.msra.mxu0 0.0
        %4389 = vmatprep.subr.mxu0 0.0
        %4390 = vmatpush2.msra.mxu0 0.0
        %4391 = vmatprep.mubr.f32.mxu0 0.0
        %4392 = vmatmul.mubr.f32.gmra.mxu0 %v4325
        %v4393 = vpop.f32.mrf.mxu0
        %v4394 = vadd.f32 0.0, %v4393
        %v4395 = vpop.f32.mrf.mxu0
        %4396 = vdwg.mxu0
        %v4398 = vsel %vm1442, %v4170, 0
        %4400 = vmatprep.subr.mxu0 0.0
        %4401 = vmatpush1.msra.mxu0 0.0
        %4402 = vmatprep.subr.mxu0 0.0
        %4403 = vmatpush1.msra.mxu0 0.0
        %4404 = vmatprep.subr.mxu0 0.0
        %4405 = vmatpush1.msra.mxu0 0.0
        %4406 = vmatprep.subr.mxu0 0.0
        %4407 = vmatpush1.msra.mxu0 0.0
        %4408 = vmatprep.subr.mxu0 0.0
        %4409 = vmatpush1.msra.mxu0 0.0
        %4410 = vmatprep.subr.mxu0 0.0
        %4411 = vmatpush1.msra.mxu0 0.0
        %4412 = vmatprep.subr.mxu0 0.0
        %4413 = vmatpush1.msra.mxu0 0.0
        %4414 = vmatprep.subr.mxu0 0.0
        %4415 = vmatpush1.msra.mxu0 0.0
        %4416 = vmatprep.subr.mxu0 0.0
        %4417 = vmatpush1.msra.mxu0 0.0
        %4418 = vmatprep.subr.mxu0 0.0
        %4419 = vmatpush1.msra.mxu0 0.0
        %4420 = vmatprep.subr.mxu0 0.0
        %4421 = vmatpush1.msra.mxu0 0.0
        %4422 = vmatprep.subr.mxu0 0.0
        %4423 = vmatpush1.msra.mxu0 0.0
        %4424 = vmatprep.subr.mxu0 0.0
        %4425 = vmatpush1.msra.mxu0 0.0
        %4426 = vmatprep.subr.mxu0 0.0
        %4427 = vmatpush1.msra.mxu0 0.0
        %4428 = vmatprep.subr.mxu0 0.0
        %4429 = vmatpush1.msra.mxu0 0.0
        %4430 = vmatprep.subr.mxu0 0.0
        %4431 = vmatpush1.msra.mxu0 %v4249
        %4432 = vmatprep.subr.mxu0 0.0
        %4433 = vmatpush2.msra.mxu0 0.0
        %4434 = vmatprep.subr.mxu0 0.0
        %4435 = vmatpush2.msra.mxu0 0.0
        %4436 = vmatprep.subr.mxu0 0.0
        %4437 = vmatpush2.msra.mxu0 0.0
        %4438 = vmatprep.subr.mxu0 0.0
        %4439 = vmatpush2.msra.mxu0 0.0
        %4440 = vmatprep.subr.mxu0 0.0
        %4441 = vmatpush2.msra.mxu0 0.0
        %4442 = vmatprep.subr.mxu0 0.0
        %4443 = vmatpush2.msra.mxu0 0.0
        %4444 = vmatprep.subr.mxu0 0.0
        %4445 = vmatpush2.msra.mxu0 0.0
        %4446 = vmatprep.subr.mxu0 0.0
        %4447 = vmatpush2.msra.mxu0 0.0
        %4448 = vmatprep.subr.mxu0 0.0
        %4449 = vmatpush2.msra.mxu0 0.0
        %4450 = vmatprep.subr.mxu0 0.0
        %4451 = vmatpush2.msra.mxu0 0.0
        %4452 = vmatprep.subr.mxu0 0.0
        %4453 = vmatpush2.msra.mxu0 0.0
        %4454 = vmatprep.subr.mxu0 0.0
        %4455 = vmatpush2.msra.mxu0 0.0
        %4456 = vmatprep.subr.mxu0 0.0
        %4457 = vmatpush2.msra.mxu0 0.0
        %4458 = vmatprep.subr.mxu0 0.0
        %4459 = vmatpush2.msra.mxu0 0.0
        %4460 = vmatprep.subr.mxu0 0.0
        %4461 = vmatpush2.msra.mxu0 0.0
        %4462 = vmatprep.subr.mxu0 0.0
        %4463 = vmatpush2.msra.mxu0 0.0
        %4464 = vmatprep.mubr.f32.mxu0 0.0
        %4465 = vmatmul.mubr.f32.gmra.mxu0 %v4398
        %v4466 = vpop.f32.mrf.mxu0
        %v4467 = vadd.f32 0.0, %v4466
        %v4468 = vpop.f32.mrf.mxu0
        %4469 = vdwg.mxu0
        %v4471 = vsel %vm1442, %v4243, 0
        %4473 = vmatprep.subr.mxu0 0.0
        %4474 = vmatpush1.msra.mxu0 0.0
        %4475 = vmatprep.subr.mxu0 0.0
        %4476 = vmatpush1.msra.mxu0 0.0
        %4477 = vmatprep.subr.mxu0 0.0
        %4478 = vmatpush1.msra.mxu0 0.0
        %4479 = vmatprep.subr.mxu0 0.0
        %4480 = vmatpush1.msra.mxu0 0.0
        %4481 = vmatprep.subr.mxu0 0.0
        %4482 = vmatpush1.msra.mxu0 0.0
        %4483 = vmatprep.subr.mxu0 0.0
        %4484 = vmatpush1.msra.mxu0 0.0
        %4485 = vmatprep.subr.mxu0 0.0
        %4486 = vmatpush1.msra.mxu0 0.0
        %4487 = vmatprep.subr.mxu0 0.0
        %4488 = vmatpush1.msra.mxu0 0.0
        %4489 = vmatprep.subr.mxu0 0.0
        %4490 = vmatpush1.msra.mxu0 0.0
        %4491 = vmatprep.subr.mxu0 0.0
        %4492 = vmatpush1.msra.mxu0 0.0
        %4493 = vmatprep.subr.mxu0 0.0
        %4494 = vmatpush1.msra.mxu0 0.0
        %4495 = vmatprep.subr.mxu0 0.0
        %4496 = vmatpush1.msra.mxu0 0.0
        %4497 = vmatprep.subr.mxu0 0.0
        %4498 = vmatpush1.msra.mxu0 0.0
        %4499 = vmatprep.subr.mxu0 0.0
        %4500 = vmatpush1.msra.mxu0 0.0
        %4501 = vmatprep.subr.mxu0 0.0
        %4502 = vmatpush1.msra.mxu0 0.0
        %4503 = vmatprep.subr.mxu0 0.0
        %4504 = vmatpush1.msra.mxu0 %v4250
        %4505 = vmatprep.subr.mxu0 0.0
        %4506 = vmatpush2.msra.mxu0 0.0
        %4507 = vmatprep.subr.mxu0 0.0
        %4508 = vmatpush2.msra.mxu0 0.0
        %4509 = vmatprep.subr.mxu0 0.0
        %4510 = vmatpush2.msra.mxu0 0.0
        %4511 = vmatprep.subr.mxu0 0.0
        %4512 = vmatpush2.msra.mxu0 0.0
        %4513 = vmatprep.subr.mxu0 0.0
        %4514 = vmatpush2.msra.mxu0 0.0
        %4515 = vmatprep.subr.mxu0 0.0
        %4516 = vmatpush2.msra.mxu0 0.0
        %4517 = vmatprep.subr.mxu0 0.0
        %4518 = vmatpush2.msra.mxu0 0.0
        %4519 = vmatprep.subr.mxu0 0.0
        %4520 = vmatpush2.msra.mxu0 0.0
        %4521 = vmatprep.subr.mxu0 0.0
        %4522 = vmatpush2.msra.mxu0 0.0
        %4523 = vmatprep.subr.mxu0 0.0
        %4524 = vmatpush2.msra.mxu0 0.0
        %4525 = vmatprep.subr.mxu0 0.0
        %4526 = vmatpush2.msra.mxu0 0.0
        %4527 = vmatprep.subr.mxu0 0.0
        %4528 = vmatpush2.msra.mxu0 0.0
        %4529 = vmatprep.subr.mxu0 0.0
        %4530 = vmatpush2.msra.mxu0 0.0
        %4531 = vmatprep.subr.mxu0 0.0
        %4532 = vmatpush2.msra.mxu0 0.0
        %4533 = vmatprep.subr.mxu0 0.0
        %4534 = vmatpush2.msra.mxu0 0.0
        %4535 = vmatprep.subr.mxu0 0.0
        %4536 = vmatpush2.msra.mxu0 0.0
        %4537 = vmatprep.mubr.f32.mxu0 0.0
        %4538 = vmatmul.mubr.f32.gmra.mxu0 %v4471
        %v4539 = vpop.f32.mrf.mxu0
        %v4540 = vadd.f32 0.0, %v4539
        %v4541 = vpop.f32.mrf.mxu0
        %4542 = vdwg.mxu0
        %v4543 = vsel %vm598, %v4321, 0.0
        %v4544 = vsel %vm598, %v4394, 0.0
        %v4545 = vadd.f32 %v4543, %v4544
        %v4546 = vsel %vm598, %v4467, 0.0
        %v4547 = vadd.f32 %v4545, %v4546
        %v4548 = vsel %vm598, %v4540, 0.0
        %v4549 = vadd.f32 %v4547, %v4548
        %s4550 = scalar_lea.vmem %s5, 1
        %v4551 = vld [vmem:[%s4550] sm:$0x1]
        %v4553 = vlaneseq
        %v4554 = vshrl.u32 %v4553, 7
        %v4555 = vsub.s32 0, %v4554
        %v4556 = vrot.slane %v4551, %v4555
        %v4558 = vadd.f32 %v4549, %v4556
        %v4559 = vadd.f32 %v2628, %v4558
        %s4560 = scalar_lea.vmem %s10, 1
        %v4561 = vld [vmem:[%s4560] sm:$0x1]
        %s4562 = scalar_lea.vmem %s11, 1
        %v4563 = vld [vmem:[%s4562] sm:$0x1]
        %v4564 = vsel %vm598, %v4559, 0.0
        %4565 = vadd.xlane.f32.xlu0 %v4564
        %v4566 = vpop.xlane.xlu0 %4565
        %v4567 = vmul.f32 %v4566, %v2400
        %v4568 = vsub.f32 %v4559, %v4567
        %v4569 = vmul.f32 %v4568, %v4568
        %v4570 = vsel %vm598, %v4569, 0.0
        %4571 = vadd.xlane.f32.xlu0 %v4570
        %v4572 = vpop.xlane.xlu0 %4571
        %v4573 = vmul.f32 %v4572, %v2400
        %v4574 = vadd.f32 %v4573, 1e-05
        %v4575 = vrsqrt.pop %v4574
        %v4576 = vmul.f32 %v4568, %v4575
        %v4578 = vlaneseq
        %v4579 = vshrl.u32 %v4578, 7
        %v4580 = vsub.s32 0, %v4579
        %v4581 = vrot.slane %v4561, %v4580
        %v4583 = vmul.f32 %v4576, %v4581
        %v4585 = vlaneseq
        %v4586 = vshrl.u32 %v4585, 7
        %v4587 = vsub.s32 0, %v4586
        %v4588 = vrot.slane %v4563, %v4587
        %v4590 = vadd.f32 %v4583, %v4588
        %s4591 = scalar_lea.vmem %s6, 32
        %v4592 = vld [vmem:[%s4591] sm:$0xff]
        %v4593 = vld [vmem:[%s4591 + $0x8] sm:$0xff]
        %v4594 = vld [vmem:[%s4591 + $0x10] sm:$0xff]
        %v4595 = vld [vmem:[%s4591 + $0x18] sm:$0xff]
        %s4596 = scalar_lea.vmem %s7, 1
        %v4597 = vld [vmem:[%s4596] sm:$0x1]
        %v4599 = vlaneseq
        %v4600 = vshrl.u32 %v4599, 7
        %v4601 = vsub.s32 0, %v4600
        %v4602 = vrot.slane %v4597, %v4601
        %v4605 = vsel %vm598, %v4590, 0
        %4607 = vmatprep.subr.mxu0 0.0
        %4608 = vmatpush1.msra.mxu0 0.0
        %4609 = vmatprep.subr.mxu0 0.0
        %4610 = vmatpush1.msra.mxu0 0.0
        %4611 = vmatprep.subr.mxu0 0.0
        %4612 = vmatpush1.msra.mxu0 0.0
        %4613 = vmatprep.subr.mxu0 0.0
        %4614 = vmatpush1.msra.mxu0 0.0
        %4615 = vmatprep.subr.mxu0 0.0
        %4616 = vmatpush1.msra.mxu0 0.0
        %4617 = vmatprep.subr.mxu0 0.0
        %4618 = vmatpush1.msra.mxu0 0.0
        %4619 = vmatprep.subr.mxu0 0.0
        %4620 = vmatpush1.msra.mxu0 0.0
        %4621 = vmatprep.subr.mxu0 0.0
        %4622 = vmatpush1.msra.mxu0 0.0
        %4623 = vmatprep.subr.mxu0 0.0
        %4624 = vmatpush1.msra.mxu0 0.0
        %4625 = vmatprep.subr.mxu0 0.0
        %4626 = vmatpush1.msra.mxu0 0.0
        %4627 = vmatprep.subr.mxu0 0.0
        %4628 = vmatpush1.msra.mxu0 0.0
        %4629 = vmatprep.subr.mxu0 0.0
        %4630 = vmatpush1.msra.mxu0 0.0
        %4631 = vmatprep.subr.mxu0 0.0
        %4632 = vmatpush1.msra.mxu0 %v4595
        %4633 = vmatprep.subr.mxu0 0.0
        %4634 = vmatpush1.msra.mxu0 %v4594
        %4635 = vmatprep.subr.mxu0 0.0
        %4636 = vmatpush1.msra.mxu0 %v4593
        %4637 = vmatprep.subr.mxu0 0.0
        %4638 = vmatpush1.msra.mxu0 %v4592
        %4639 = vmatprep.subr.mxu0 0.0
        %4640 = vmatpush2.msra.mxu0 0.0
        %4641 = vmatprep.subr.mxu0 0.0
        %4642 = vmatpush2.msra.mxu0 0.0
        %4643 = vmatprep.subr.mxu0 0.0
        %4644 = vmatpush2.msra.mxu0 0.0
        %4645 = vmatprep.subr.mxu0 0.0
        %4646 = vmatpush2.msra.mxu0 0.0
        %4647 = vmatprep.subr.mxu0 0.0
        %4648 = vmatpush2.msra.mxu0 0.0
        %4649 = vmatprep.subr.mxu0 0.0
        %4650 = vmatpush2.msra.mxu0 0.0
        %4651 = vmatprep.subr.mxu0 0.0
        %4652 = vmatpush2.msra.mxu0 0.0
        %4653 = vmatprep.subr.mxu0 0.0
        %4654 = vmatpush2.msra.mxu0 0.0
        %4655 = vmatprep.subr.mxu0 0.0
        %4656 = vmatpush2.msra.mxu0 0.0
        %4657 = vmatprep.subr.mxu0 0.0
        %4658 = vmatpush2.msra.mxu0 0.0
        %4659 = vmatprep.subr.mxu0 0.0
        %4660 = vmatpush2.msra.mxu0 0.0
        %4661 = vmatprep.subr.mxu0 0.0
        %4662 = vmatpush2.msra.mxu0 0.0
        %4663 = vmatprep.subr.mxu0 0.0
        %4664 = vmatpush2.msra.mxu0 0.0
        %4665 = vmatprep.subr.mxu0 0.0
        %4666 = vmatpush2.msra.mxu0 0.0
        %4667 = vmatprep.subr.mxu0 0.0
        %4668 = vmatpush2.msra.mxu0 0.0
        %4669 = vmatprep.subr.mxu0 0.0
        %4670 = vmatpush2.msra.mxu0 0.0
        %4671 = vmatprep.mubr.f32.mxu0 0.0
        %4672 = vmatmul.mubr.f32.gmra.mxu0 %v4605
        %v4673 = vpop.f32.mrf.mxu0
        %v4674 = vadd.f32 %v4602, %v4673
        %v4675 = vpop.f32.mrf.mxu0
        %4676 = vdwg.mxu0
        %v4677 = vmax.f32 %v4674, 0.0
        %s4678 = scalar_lea.vmem %s8, 64
        %v4679 = vld [vmem:[%s4678] sm:$0xff]
        %v4680 = vld [vmem:[%s4678 + $0x8] sm:$0xff]
        %v4681 = vld [vmem:[%s4678 + $0x10] sm:$0xff]
        %v4682 = vld [vmem:[%s4678 + $0x18] sm:$0xff]
        %v4683 = vld [vmem:[%s4678 + $0x20] sm:$0xff]
        %v4684 = vld [vmem:[%s4678 + $0x28] sm:$0xff]
        %v4685 = vld [vmem:[%s4678 + $0x30] sm:$0xff]
        %v4686 = vld [vmem:[%s4678 + $0x38] sm:$0xff]
        %s4687 = scalar_lea.vmem %s9, 1
        %v4688 = vld [vmem:[%s4687] sm:$0x1]
        %v4690 = vlaneseq
        %v4691 = vshrl.u32 %v4690, 7
        %v4692 = vsub.s32 0, %v4691
        %v4693 = vrot.slane %v4688, %v4692
        %v4696 = vsel %vm2525, %v4677, 0
        %4698 = vmatprep.subr.mxu0 0.0
        %4699 = vmatpush1.msra.mxu0 0.0
        %4700 = vmatprep.subr.mxu0 0.0
        %4701 = vmatpush1.msra.mxu0 0.0
        %4702 = vmatprep.subr.mxu0 0.0
        %4703 = vmatpush1.msra.mxu0 0.0
        %4704 = vmatprep.subr.mxu0 0.0
        %4705 = vmatpush1.msra.mxu0 0.0
        %4706 = vmatprep.subr.mxu0 0.0
        %4707 = vmatpush1.msra.mxu0 0.0
        %4708 = vmatprep.subr.mxu0 0.0
        %4709 = vmatpush1.msra.mxu0 0.0
        %4710 = vmatprep.subr.mxu0 0.0
        %4711 = vmatpush1.msra.mxu0 0.0
        %4712 = vmatprep.subr.mxu0 0.0
        %4713 = vmatpush1.msra.mxu0 0.0
        %4714 = vmatprep.subr.mxu0 0.0
        %4715 = vmatpush1.msra.mxu0 %v4686
        %4716 = vmatprep.subr.mxu0 0.0
        %4717 = vmatpush1.msra.mxu0 %v4685
        %4718 = vmatprep.subr.mxu0 0.0
        %4719 = vmatpush1.msra.mxu0 %v4684
        %4720 = vmatprep.subr.mxu0 0.0
        %4721 = vmatpush1.msra.mxu0 %v4683
        %4722 = vmatprep.subr.mxu0 0.0
        %4723 = vmatpush1.msra.mxu0 %v4682
        %4724 = vmatprep.subr.mxu0 0.0
        %4725 = vmatpush1.msra.mxu0 %v4681
        %4726 = vmatprep.subr.mxu0 0.0
        %4727 = vmatpush1.msra.mxu0 %v4680
        %4728 = vmatprep.subr.mxu0 0.0
        %4729 = vmatpush1.msra.mxu0 %v4679
        %4730 = vmatprep.subr.mxu0 0.0
        %4731 = vmatpush2.msra.mxu0 0.0
        %4732 = vmatprep.subr.mxu0 0.0
        %4733 = vmatpush2.msra.mxu0 0.0
        %4734 = vmatprep.subr.mxu0 0.0
        %4735 = vmatpush2.msra.mxu0 0.0
        %4736 = vmatprep.subr.mxu0 0.0
        %4737 = vmatpush2.msra.mxu0 0.0
        %4738 = vmatprep.subr.mxu0 0.0
        %4739 = vmatpush2.msra.mxu0 0.0
        %4740 = vmatprep.subr.mxu0 0.0
        %4741 = vmatpush2.msra.mxu0 0.0
        %4742 = vmatprep.subr.mxu0 0.0
        %4743 = vmatpush2.msra.mxu0 0.0
        %4744 = vmatprep.subr.mxu0 0.0
        %4745 = vmatpush2.msra.mxu0 0.0
        %4746 = vmatprep.subr.mxu0 0.0
        %4747 = vmatpush2.msra.mxu0 0.0
        %4748 = vmatprep.subr.mxu0 0.0
        %4749 = vmatpush2.msra.mxu0 0.0
        %4750 = vmatprep.subr.mxu0 0.0
        %4751 = vmatpush2.msra.mxu0 0.0
        %4752 = vmatprep.subr.mxu0 0.0
        %4753 = vmatpush2.msra.mxu0 0.0
        %4754 = vmatprep.subr.mxu0 0.0
        %4755 = vmatpush2.msra.mxu0 0.0
        %4756 = vmatprep.subr.mxu0 0.0
        %4757 = vmatpush2.msra.mxu0 0.0
        %4758 = vmatprep.subr.mxu0 0.0
        %4759 = vmatpush2.msra.mxu0 0.0
        %4760 = vmatprep.subr.mxu0 0.0
        %4761 = vmatpush2.msra.mxu0 0.0
        %4762 = vmatprep.mubr.f32.mxu0 0.0
        %4763 = vmatmul.mubr.f32.gmra.mxu0 %v4696
        %v4764 = vpop.f32.mrf.mxu0
        %v4765 = vadd.f32 %v4693, %v4764
        %v4766 = vpop.f32.mrf.mxu0
        %4767 = vdwg.mxu0
        %v4768 = vadd.f32 %v4590, %v4765
        %s4769 = scalar_lea.vmem %s12, 1
        %v4770 = vld [vmem:[%s4769] sm:$0x1]
        %s4771 = scalar_lea.vmem %s13, 1
        %v4772 = vld [vmem:[%s4771] sm:$0x1]
        %v4773 = vsel %vm598, %v4768, 0.0
        %4774 = vadd.xlane.f32.xlu0 %v4773
        %v4775 = vpop.xlane.xlu0 %4774
        %v4776 = vmul.f32 %v4775, %v2400
        %v4777 = vsub.f32 %v4768, %v4776
        %v4778 = vmul.f32 %v4777, %v4777
        %v4779 = vsel %vm598, %v4778, 0.0
        %4780 = vadd.xlane.f32.xlu0 %v4779
        %v4781 = vpop.xlane.xlu0 %4780
        %v4782 = vmul.f32 %v4781, %v2400
        %v4783 = vadd.f32 %v4782, 1e-05
        %v4784 = vrsqrt.pop %v4783
        %v4785 = vmul.f32 %v4777, %v4784
        %v4787 = vlaneseq
        %v4788 = vshrl.u32 %v4787, 7
        %v4789 = vsub.s32 0, %v4788
        %v4790 = vrot.slane %v4770, %v4789
        %v4792 = vmul.f32 %v4785, %v4790
        %v4794 = vlaneseq
        %v4795 = vshrl.u32 %v4794, 7
        %v4796 = vsub.s32 0, %v4795
        %v4797 = vrot.slane %v4772, %v4796
        %v4799 = vadd.f32 %v4792, %v4797
        %4800 = vst.msk [vmem:[%s458] sm:$0xff] %vm598, %v4799
        %s4801 = sand.u32 %s335, 1
        %s4802 = scalar_lea.sflag [#allocation3], %s4801
        %s4803 = sand.u32 %s335, 1
        %s4804 = smul.addr %s4803, 8
        %s4805 = scalar_lea.vmem [#allocation2], %s4804
        // Predicated region
        $region77: #{tpu_custom_call.1} parent=75 // pred_check
          %p4806 = pneg %p345
        $region78: #{tpu_custom_call.1} parent=75 // pred_check_branch
          %4808 = sbr.rel (%p4806) target = $region80
        $region79: #{tpu_custom_call.1} parent=75 // pred_region
          %s4810 = ssub.s32 128, 128
          %4811 = vsyncadd %s4802, %s4810
          %s4812 = smul.addr %s28, 128
          %s4813 = scalar_lea.hbm %s14, %s4812
          %s4815 = sshll.u32 %s4805, 4
          %s4816 = int_to_ptr.vmem [resolvable:$true] %s4815
          %4818 = dma.vmem_to_hbm [thread:$0]  %s4816, 128, %s4813, %s4802
        $region80: #{tpu_custom_call.1} parent=75 // pred_fallthru
          _
      $region76: #{tpu_custom_call.1} parent=5 // pred_fallthru
        _
      %p4819 = scmp.le.s32.totalorder 2, %s23
      // Predicated region
      $region81: #{tpu_custom_call.1} parent=5 // pred_check
        %p4820 = pneg %p4819
      $region82: #{tpu_custom_call.1} parent=5 // pred_check_branch
        %4822 = sbr.rel (%p4820) target = $region84
      $region83: #{tpu_custom_call.1} parent=5 // pred_region
        %s4823 = ssub.s32 %s23, 2
        // Predicated region
        $region85: #{tpu_custom_call.1} parent=83 // pred_check
          %p4824 = pneg %p351
        $region86: #{tpu_custom_call.1} parent=83 // pred_check_branch
          %4826 = sbr.rel (%p4824) target = $region88
        $region87: #{tpu_custom_call.1} parent=83 // pred_region
          %s4827 = sand.u32 %s336, 1
          %s4828 = scalar_lea.sflag [#allocation3], %s4827
          %s4829 = sand.u32 %s336, 1
          %s4830 = smul.addr %s4829, 8
          %s4831 = scalar_lea.vmem [#allocation2], %s4830
          %4832 = dma.done %s4828, 128
        $region88: #{tpu_custom_call.1} parent=83 // pred_fallthru
          _
      $region84: #{tpu_custom_call.1} parent=5 // pred_fallthru
        _
    $region6: #{tpu_custom_call.1} parent=1 // loop_footer
      %s27 = sadd.s32 1, %s23
    $region7: #{tpu_custom_call.1} parent=1 // loop_footer_branch
      %22 = sbr.rel target = $region3
    $region8: #{tpu_custom_call.1} parent=1 // loop_exit
      _
    %4833 = vsyncpa [#allocation3], 1
    %s4834 = scalar_lea.sflag [#allocation3], 1
    %4835 = vsyncpa %s4834, 1

</llo_original>
